<compile_context>
chip_gen: v5e
topology: v5e:2x2
jax: 0.10.0
libtpu: 0.0.40
codegen_flags: <defaults>
</compile_context>

<pallas_src>
import jax
import jax.numpy as jnp
from jax import lax
from jax.experimental import pallas as pl
from jax.experimental.pallas import tpu as pltpu


# --------------------------- parameter set-up ------------------------------ #

def init_linear(key, fan_in, fan_out):
    """PyTorch nn.Linear default init (U(-1/sqrt(fan_in), 1/sqrt(fan_in)))."""
    k = 1.0 / float(fan_in) ** 0.5
    kw, kb = jax.random.split(key)
    w = jax.random.uniform(kw, (fan_in, fan_out), jnp.float32, -k, k)
    b = jax.random.uniform(kb, (1, fan_out), jnp.float32, -k, k)
    return w, b


def init_mlp(key, dims):
    keys = jax.random.split(key, len(dims) - 1)
    return [init_linear(keys[i], dims[i], dims[i + 1]) for i in range(len(dims) - 1)]


def init_classifier_params(key, feat_dim, hidden, out_dim):
    ks = jax.random.split(key, 5)
    edge_in = 2 * feat_dim + 2 * out_dim + 1   # [dst_feat, dst_hid, src_feat, dst_hid, dist]
    node_in = out_dim + feat_dim + out_dim     # [msg_sum, feat, hid]
    return {
        "node_init":       init_mlp(ks[0], [feat_dim, hidden, hidden, out_dim]),
        "edge_network":    init_mlp(ks[1], [edge_in, hidden, hidden, out_dim]),
        "node_network":    init_mlp(ks[2], [node_in, hidden, hidden, out_dim]),
        "edge_classifier": init_mlp(ks[3], [edge_in, hidden, hidden, out_dim]),
        "node_classifier": init_mlp(ks[4], [out_dim, hidden, out_dim]),
    }


# ------------------ host-side weight packing into one buffer ---------------- #

def _pack_weights(params, feat_dim, hidden, out_dim):
    """Re-layout every weight/bias into a single (R, hidden) f32 buffer.

    * First Linear of each edge MLP is split along its concat layout
      [dst_feat(F), dst_hid(O), src_feat(F), dst_hid(O), dist(1)]
      (the two dst_hid blocks are summed: x@Wb + x@Wd == x@(Wb+Wd)); the
      node MLP's first Linear is split along [msg_sum(O), feat(F), hid(O)].
    * Final (H, O) weights are stored transposed as (O, H) rows so the H->1
      output layers become a VPU multiply + lane reduce in-kernel.
    * Scalar (1, O) biases are broadcast across a full H-wide row; the kernel
      reads column 0.
    * Every entry is padded to an 8-row boundary so all in-kernel slices start
      at sublane-aligned offsets.
    Returns (packed_array, {name: (row_offset, n_rows)}).
    """
    F, H, O = feat_dim, hidden, out_dim
    entries = []

    def add(name, arr):
        arr = jnp.asarray(arr, jnp.float32)
        assert arr.ndim == 2 and arr.shape[1] == H, (name, arr.shape)
        entries.append((name, arr))

    def add_scalar_row(name, b):           # (1, O) bias -> (1, H) broadcast row
        add(name, jnp.broadcast_to(jnp.asarray(b, jnp.float32).reshape(1, 1), (1, H)))

    # node_init: F -> H -> H -> O
    (w1, b1), (w2, b2), (w3, b3) = params["node_init"]
    add("ni_w1", w1); add("ni_b1", b1); add("ni_w2", w2); add("ni_b2", b2)
    add("ni_w3t", w3.T); add_scalar_row("ni_b3", b3)

    # edge_network / edge_classifier (same layout)
    for prefix, key_ in (("en", "edge_network"), ("ec", "edge_classifier")):
        (w1, b1), (w2, b2), (w3, b3) = params[key_]
        add(prefix + "_w1_dstf", w1[0:F])
        add(prefix + "_w1_hid",  w1[F:F + O] + w1[2 * F + O:2 * F + 2 * O])
        add(prefix + "_w1_srcf", w1[F + O:2 * F + O])
        add(prefix + "_w1_dist", w1[2 * F + 2 * O:2 * F + 2 * O + 1])
        add(prefix + "_b1", b1); add(prefix + "_w2", w2); add(prefix + "_b2", b2)
        add(prefix + "_w3t", w3.T); add_scalar_row(prefix + "_b3", b3)

    # node_network
    (w1, b1), (w2, b2), (w3, b3) = params["node_network"]
    add("nn_w1_msg",  w1[0:O])
    add("nn_w1_feat", w1[O:O + F])
    add("nn_w1_hid",  w1[O + F:O + F + O])
    add("nn_b1", b1); add("nn_w2", w2); add("nn_b2", b2)
    add("nn_w3t", w3.T); add_scalar_row("nn_b3", b3)

    # node_classifier: O -> H -> O
    (w1, b1), (w2, b2) = params["node_classifier"]
    add("nc_w1", w1); add("nc_b1", b1)
    add("nc_w2t", w2.T); add_scalar_row("nc_b2", b2)

    offsets, padded, off = {}, [], 0
    for name, arr in entries:
        r = arr.shape[0]
        r_pad = -(-r // 8) * 8
        offsets[name] = (off, r)
        padded.append(jnp.pad(arr, ((0, r_pad - r), (0, 0))))
        off += r_pad
    return jnp.concatenate(padded, axis=0), offsets


# ------------------------------ fused forward ------------------------------- #

def fused_classifier_forward(params, node_feat, src, dst, dist, n_iters=10):
    node_feat = node_feat.astype(jnp.float32)
    N, F = node_feat.shape
    E = src.shape[0]
    H = params["node_init"][0][0].shape[1]
    O = params["node_init"][-1][0].shape[1]
    assert O == 1, "prediction accumulation requires output_size == 1"

    # Gather / scatter operands as one-hot matmul inputs (exact in f32).
    # TODO(synk): at real graph sizes switch to an E-tiled grid with
    # scalar-prefetched index gathers; the dense one-hots are O(E*N).
    src_oh = jax.nn.one_hot(src, N, dtype=jnp.float32)       # (E, N) row gather
    dst_oh = jax.nn.one_hot(dst, N, dtype=jnp.float32)       # (E, N) row gather
    dst_scatter = dst_oh.T                                    # (N, E) segment-sum
    dist2d = dist.astype(jnp.float32).reshape(E, 1)

    w_packed, offs = _pack_weights(params, F, H, O)

    def kernel(w_ref, feat_ref, dist_ref, srcoh_ref, dstoh_ref, dstscat_ref,
               hid_out, epred_out, npred_out):
        def W(name):
            off, rows = offs[name]                       # static offsets
            return w_ref[pl.ds(off, rows), :]

        def dot(a, b):
            return jnp.dot(a, b, preferred_element_type=jnp.float32)

        def relu(x):
            return jnp.maximum(x, 0.0)

        def out_layer(x, w_row, b_row):
            # (M,H) @ (H,1) + b as a VPU multiply + lane reduce (keeps N=1
            # final layers off the MXU).
            return jnp.sum(x * w_row, axis=-1, keepdims=True) + b_row[:, :1]

        feat = feat_ref[...]           # (N, F)
        dist_v = dist_ref[...]         # (E, 1)
        src_oh_v = srcoh_ref[...]      # (E, N)
        dst_oh_v = dstoh_ref[...]      # (E, N)
        dst_scat = dstscat_ref[...]    # (N, E)

        # --- all weight reads hoisted once, from the single packed buffer ---
        ni_w1, ni_b1, ni_w2, ni_b2 = W("ni_w1"), W("ni_b1"), W("ni_w2"), W("ni_b2")
        ni_w3t, ni_b3 = W("ni_w3t"), W("ni_b3")
        en_w1_hid, en_b1 = W("en_w1_hid"), W("en_b1")
        en_w2, en_b2, en_w3t, en_b3 = W("en_w2"), W("en_b2"), W("en_w3t"), W("en_b3")
        ec_w1_hid, ec_b1 = W("ec_w1_hid"), W("ec_b1")
        ec_w2, ec_b2, ec_w3t, ec_b3 = W("ec_w2"), W("ec_b2"), W("ec_w3t"), W("ec_b3")
        nn_w1_msg, nn_w1_hid, nn_b1 = W("nn_w1_msg"), W("nn_w1_hid"), W("nn_b1")
        nn_w2, nn_b2, nn_w3t, nn_b3 = W("nn_w2"), W("nn_b2"), W("nn_w3t"), W("nn_b3")
        nc_w1, nc_b1, nc_w2t, nc_b2 = W("nc_w1"), W("nc_b1"), W("nc_w2t"), W("nc_b2")

        # node_init MLP (runs once): g.ndata['node_hidden_rep']
        h = relu(dot(feat, ni_w1) + ni_b1)
        h = relu(dot(h, ni_w2) + ni_b2)
        hid0 = out_layer(h, ni_w3t, ni_b3)                           # (N, 1)

        # Iteration-invariant gathers + first-Linear partial sums (hoisted).
        dst_feat = dot(dst_oh_v, feat)                               # (E, F)
        src_feat = dot(src_oh_v, feat)                               # (E, F)
        en_const = (dot(dst_feat, W("en_w1_dstf")) + dot(src_feat, W("en_w1_srcf"))
                    + dist_v * W("en_w1_dist") + en_b1)              # (E, H)
        ec_const = (dot(dst_feat, W("ec_w1_dstf")) + dot(src_feat, W("ec_w1_srcf"))
                    + dist_v * W("ec_w1_dist") + ec_b1)              # (E, H)
        nn_const = dot(feat, W("nn_w1_feat")) + nn_b1                # (N, H)

        dst_hid0 = dot(dst_oh_v, hid0)                               # (E, 1)
        epred0 = jnp.zeros((E, 1), jnp.float32)
        npred0 = jnp.zeros((N, 1), jnp.float32)

        def body(_, carry):
            hid, dst_hid, epred, npred = carry
            # g.update_all(edge_network, node_network)
            e1 = relu(en_const + dst_hid * en_w1_hid)                # VPU rank-1
            e2 = relu(dot(e1, en_w2) + en_b2)                        # MXU (E,H)
            msg = out_layer(e2, en_w3t, en_b3)                       # (E, 1)
            msg_sum = dot(dst_scat, msg)                             # mailbox sum (N,1)
            n1 = relu(nn_const + msg_sum * nn_w1_msg + hid * nn_w1_hid)
            n2 = relu(dot(n1, nn_w2) + nn_b2)                        # MXU (N,H)
            hid_new = out_layer(n2, nn_w3t, nn_b3)                   # (N, 1)

            # g.apply_edges(edge_classifier); edata['prediction'] += ...
            dst_hid_new = dot(dst_oh_v, hid_new)                     # (E, 1) (carried)
            c1 = relu(ec_const + dst_hid_new * ec_w1_hid)
            c2 = relu(dot(c1, ec_w2) + ec_b2)                        # MXU (E,H)
            epred = epred + out_layer(c2, ec_w3t, ec_b3)

            # TODO(synk): original reads g.ndata['edge hidden representation'],
            # a key never written as node data (DGL would KeyError); we feed
            # node_hidden_rep, matching the reference below.
            k1 = relu(hid_new * nc_w1 + nc_b1)                       # VPU rank-1
            npred = npred + out_layer(k1, nc_w2t, nc_b2)
            return hid_new, dst_hid_new, epred, npred

        hid, _, epred, npred = lax.fori_loop(
            0, n_iters, body, (hid0, dst_hid0, epred0, npred0), unroll=True)

        hid_out[...] = hid
        epred_out[...] = epred
        npred_out[...] = npred

    vmem = pl.BlockSpec(memory_space=pltpu.MemorySpace.VMEM)
    hid, epred, npred = pl.pallas_call(
        kernel,
        out_shape=(
            jax.ShapeDtypeStruct((N, O), jnp.float32),
            jax.ShapeDtypeStruct((E, 1), jnp.float32),
            jax.ShapeDtypeStruct((N, 1), jnp.float32),
        ),
        in_specs=[vmem] * 6,
        out_specs=(vmem, vmem, vmem),
    )(w_packed, node_feat, dist2d, src_oh, dst_oh, dst_scatter)
    return hid, epred.reshape(-1), npred.reshape(-1)


# ------------------------- pure-JAX reference ------------------------------- #

def _mlp_ref(x, layers):
    n = len(layers)
    for i, (w, b) in enumerate(layers):
        x = jnp.dot(x, w, precision=jax.lax.Precision.HIGHEST) + b
        if i < n - 1:
            x = jnp.maximum(x, 0.0)
    return x


def classifier_forward_ref(params, node_feat, src, dst, dist, n_iters=10):
    N = node_feat.shape[0]
    E = src.shape[0]
    hid = _mlp_ref(node_feat, params["node_init"])
    edge_pred = jnp.zeros((E,), jnp.float32)
    node_pred = jnp.zeros((N,), jnp.float32)
    d1 = dist[:, None]
    for _ in range(n_iters):
        ein = jnp.concatenate([node_feat[dst], hid[dst], node_feat[src], hid[dst], d1], 1)
        msg = _mlp_ref(ein, params["edge_network"])
        msg_sum = jnp.zeros((N, msg.shape[1]), jnp.float32).at[dst].add(msg)
        hid = _mlp_ref(jnp.concatenate([msg_sum, node_feat, hid], 1), params["node_network"])
        ein2 = jnp.concatenate([node_feat[dst], hid[dst], node_feat[src], hid[dst], d1], 1)
        edge_pred = edge_pred + _mlp_ref(ein2, params["edge_classifier"]).reshape(-1)
        node_pred = node_pred + _mlp_ref(hid, params["node_classifier"]).reshape(-1)
    return hid, edge_pred, node_pred


# ---------------------------------- main ------------------------------------ #

if __name__ == "__main__":
    FEAT_DIM, HIDDEN, OUT_DIM = 4, 32, 1          # inputsize, hidden_layer_size, output_size
    N_NODES, N_EDGES = 8, 16

    key = jax.random.PRNGKey(0)
    k_par, k_feat, k_dist, k_src, k_dst = jax.random.split(key, 5)

    params = init_classifier_params(k_par, FEAT_DIM, HIDDEN, OUT_DIM)

    node_feat = jax.random.normal(k_feat, (N_NODES, FEAT_DIM), jnp.float32)
    dist = jax.random.uniform(k_dist, (N_EDGES,), jnp.float32)
    src = jax.random.randint(k_src, (N_EDGES,), 0, N_NODES).astype(jnp.int32)
    # guarantee every node has at least one incoming edge (matches DGL reduce-on-all semantics)
    dst = jnp.concatenate(
        [jnp.arange(N_NODES, dtype=jnp.int32),
         jax.random.randint(k_dst, (N_EDGES - N_NODES,), 0, N_NODES).astype(jnp.int32)])

    node_hid, edge_pred, node_pred = fused_classifier_forward(
        params, node_feat, src, dst, dist, n_iters=10)
    jax.block_until_ready((node_hid, edge_pred, node_pred))

    assert node_hid.shape == (N_NODES, OUT_DIM)
    assert edge_pred.shape == (N_EDGES,)
    assert node_pred.shape == (N_NODES,)

    # correctness: compare the fused kernel against a pure-JAX port of the module
    ref_hid, ref_epred, ref_npred = classifier_forward_ref(
        params, node_feat, src, dst, dist, n_iters=10)
    for got, want in ((node_hid, ref_hid),
                      (edge_pred.reshape(-1), ref_epred),
                      (node_pred.reshape(-1), ref_npred)):
        err = float(jnp.max(jnp.abs(got.reshape(-1) - want.reshape(-1))))
        scale = 1.0 + float(jnp.max(jnp.abs(want)))
        assert err <= 1e-2 * scale, f"kernel/reference mismatch: {err} (scale {scale})"

    print("KERNEL_OK")
</pallas_src>

<mosaic_0001>
module attributes {stable_mosaic.version = 11 : i64} {
  func.func @kernel(%arg0: memref<384x32xf32, #tpu.memory_space<vmem>>, %arg1: memref<8x4xf32, #tpu.memory_space<vmem>>, %arg2: memref<16x1xf32, #tpu.memory_space<vmem>>, %arg3: memref<16x8xf32, #tpu.memory_space<vmem>>, %arg4: memref<16x8xf32, #tpu.memory_space<vmem>>, %arg5: memref<8x16xf32, #tpu.memory_space<vmem>>, %arg6: memref<8x1xf32, #tpu.memory_space<vmem>>, %arg7: memref<16x1xf32, #tpu.memory_space<vmem>>, %arg8: memref<8x1xf32, #tpu.memory_space<vmem>>) attributes {dimension_semantics = [], scalar_prefetch = 0 : i64, scratch_operands = 0 : i64, tpu.core_type = #tpu.core_type<tc>} {
    %c0 = arith.constant 0 : index
    %c0_0 = arith.constant 0 : index
    %0 = vector.load %arg1[%c0, %c0_0] : memref<8x4xf32, #tpu.memory_space<vmem>>, vector<8x4xf32>
    %c0_1 = arith.constant 0 : index
    %c0_2 = arith.constant 0 : index
    %1 = vector.load %arg2[%c0_1, %c0_2] : memref<16x1xf32, #tpu.memory_space<vmem>>, vector<16x1xf32>
    %c0_3 = arith.constant 0 : index
    %c0_4 = arith.constant 0 : index
    %2 = vector.load %arg3[%c0_3, %c0_4] : memref<16x8xf32, #tpu.memory_space<vmem>>, vector<16x8xf32>
    %c0_5 = arith.constant 0 : index
    %c0_6 = arith.constant 0 : index
    %3 = vector.load %arg4[%c0_5, %c0_6] : memref<16x8xf32, #tpu.memory_space<vmem>>, vector<16x8xf32>
    %c0_7 = arith.constant 0 : index
    %c0_8 = arith.constant 0 : index
    %4 = vector.load %arg5[%c0_7, %c0_8] : memref<8x16xf32, #tpu.memory_space<vmem>>, vector<8x16xf32>
    %c0_9 = arith.constant 0 : index
    %c0_10 = arith.constant 0 : index
    %5 = vector.load %arg0[%c0_9, %c0_10] : memref<384x32xf32, #tpu.memory_space<vmem>>, vector<4x32xf32>
    %c8 = arith.constant 8 : index
    %c0_11 = arith.constant 0 : index
    %6 = vector.load %arg0[%c8, %c0_11] : memref<384x32xf32, #tpu.memory_space<vmem>>, vector<1x32xf32>
    %c16 = arith.constant 16 : index
    %c0_12 = arith.constant 0 : index
    %7 = vector.load %arg0[%c16, %c0_12] : memref<384x32xf32, #tpu.memory_space<vmem>>, vector<32x32xf32>
    %c48 = arith.constant 48 : index
    %c0_13 = arith.constant 0 : index
    %8 = vector.load %arg0[%c48, %c0_13] : memref<384x32xf32, #tpu.memory_space<vmem>>, vector<1x32xf32>
    %c56 = arith.constant 56 : index
    %c0_14 = arith.constant 0 : index
    %9 = vector.load %arg0[%c56, %c0_14] : memref<384x32xf32, #tpu.memory_space<vmem>>, vector<1x32xf32>
    %c64 = arith.constant 64 : index
    %c0_15 = arith.constant 0 : index
    %10 = vector.load %arg0[%c64, %c0_15] : memref<384x32xf32, #tpu.memory_space<vmem>>, vector<1x32xf32>
    %c80 = arith.constant 80 : index
    %c0_16 = arith.constant 0 : index
    %11 = vector.load %arg0[%c80, %c0_16] : memref<384x32xf32, #tpu.memory_space<vmem>>, vector<1x32xf32>
    %c104 = arith.constant 104 : index
    %c0_17 = arith.constant 0 : index
    %12 = vector.load %arg0[%c104, %c0_17] : memref<384x32xf32, #tpu.memory_space<vmem>>, vector<1x32xf32>
    %c112 = arith.constant 112 : index
    %c0_18 = arith.constant 0 : index
    %13 = vector.load %arg0[%c112, %c0_18] : memref<384x32xf32, #tpu.memory_space<vmem>>, vector<32x32xf32>
    %c144 = arith.constant 144 : index
    %c0_19 = arith.constant 0 : index
    %14 = vector.load %arg0[%c144, %c0_19] : memref<384x32xf32, #tpu.memory_space<vmem>>, vector<1x32xf32>
    %c152 = arith.constant 152 : index
    %c0_20 = arith.constant 0 : index
    %15 = vector.load %arg0[%c152, %c0_20] : memref<384x32xf32, #tpu.memory_space<vmem>>, vector<1x32xf32>
    %c160 = arith.constant 160 : index
    %c0_21 = arith.constant 0 : index
    %16 = vector.load %arg0[%c160, %c0_21] : memref<384x32xf32, #tpu.memory_space<vmem>>, vector<1x32xf32>
    %c176 = arith.constant 176 : index
    %c0_22 = arith.constant 0 : index
    %17 = vector.load %arg0[%c176, %c0_22] : memref<384x32xf32, #tpu.memory_space<vmem>>, vector<1x32xf32>
    %c200 = arith.constant 200 : index
    %c0_23 = arith.constant 0 : index
    %18 = vector.load %arg0[%c200, %c0_23] : memref<384x32xf32, #tpu.memory_space<vmem>>, vector<1x32xf32>
    %c208 = arith.constant 208 : index
    %c0_24 = arith.constant 0 : index
    %19 = vector.load %arg0[%c208, %c0_24] : memref<384x32xf32, #tpu.memory_space<vmem>>, vector<32x32xf32>
    %c240 = arith.constant 240 : index
    %c0_25 = arith.constant 0 : index
    %20 = vector.load %arg0[%c240, %c0_25] : memref<384x32xf32, #tpu.memory_space<vmem>>, vector<1x32xf32>
    %c248 = arith.constant 248 : index
    %c0_26 = arith.constant 0 : index
    %21 = vector.load %arg0[%c248, %c0_26] : memref<384x32xf32, #tpu.memory_space<vmem>>, vector<1x32xf32>
    %c256 = arith.constant 256 : index
    %c0_27 = arith.constant 0 : index
    %22 = vector.load %arg0[%c256, %c0_27] : memref<384x32xf32, #tpu.memory_space<vmem>>, vector<1x32xf32>
    %c264 = arith.constant 264 : index
    %c0_28 = arith.constant 0 : index
    %23 = vector.load %arg0[%c264, %c0_28] : memref<384x32xf32, #tpu.memory_space<vmem>>, vector<1x32xf32>
    %c280 = arith.constant 280 : index
    %c0_29 = arith.constant 0 : index
    %24 = vector.load %arg0[%c280, %c0_29] : memref<384x32xf32, #tpu.memory_space<vmem>>, vector<1x32xf32>
    %c288 = arith.constant 288 : index
    %c0_30 = arith.constant 0 : index
    %25 = vector.load %arg0[%c288, %c0_30] : memref<384x32xf32, #tpu.memory_space<vmem>>, vector<1x32xf32>
    %c296 = arith.constant 296 : index
    %c0_31 = arith.constant 0 : index
    %26 = vector.load %arg0[%c296, %c0_31] : memref<384x32xf32, #tpu.memory_space<vmem>>, vector<32x32xf32>
    %c328 = arith.constant 328 : index
    %c0_32 = arith.constant 0 : index
    %27 = vector.load %arg0[%c328, %c0_32] : memref<384x32xf32, #tpu.memory_space<vmem>>, vector<1x32xf32>
    %c336 = arith.constant 336 : index
    %c0_33 = arith.constant 0 : index
    %28 = vector.load %arg0[%c336, %c0_33] : memref<384x32xf32, #tpu.memory_space<vmem>>, vector<1x32xf32>
    %c344 = arith.constant 344 : index
    %c0_34 = arith.constant 0 : index
    %29 = vector.load %arg0[%c344, %c0_34] : memref<384x32xf32, #tpu.memory_space<vmem>>, vector<1x32xf32>
    %c352 = arith.constant 352 : index
    %c0_35 = arith.constant 0 : index
    %30 = vector.load %arg0[%c352, %c0_35] : memref<384x32xf32, #tpu.memory_space<vmem>>, vector<1x32xf32>
    %c360 = arith.constant 360 : index
    %c0_36 = arith.constant 0 : index
    %31 = vector.load %arg0[%c360, %c0_36] : memref<384x32xf32, #tpu.memory_space<vmem>>, vector<1x32xf32>
    %c368 = arith.constant 368 : index
    %c0_37 = arith.constant 0 : index
    %32 = vector.load %arg0[%c368, %c0_37] : memref<384x32xf32, #tpu.memory_space<vmem>>, vector<1x32xf32>
    %c376 = arith.constant 376 : index
    %c0_38 = arith.constant 0 : index
    %33 = vector.load %arg0[%c376, %c0_38] : memref<384x32xf32, #tpu.memory_space<vmem>>, vector<1x32xf32>
    %cst = arith.constant dense<0.000000e+00> : vector<8x32xf32>
    %34 = tpu.matmul %0, %5, %cst {dimension_numbers = #tpu.dot_dimension_numbers<[1], [0], [0], [1], [0, 0, 1, 1], [], []>} : vector<8x4xf32>, vector<4x32xf32>, vector<8x32xf32> -> vector<8x32xf32>
    %35 = vector.broadcast %6 : vector<1x32xf32> to vector<8x32xf32>
    %36 = arith.addf %34, %35 : vector<8x32xf32>
    %cst_39 = arith.constant 0.000000e+00 : f32
    %37 = vector.broadcast %cst_39 : f32 to vector<8x32xf32>
    %38 = arith.maximumf %36, %37 : vector<8x32xf32>
    %cst_40 = arith.constant dense<0.000000e+00> : vector<8x32xf32>
    %39 = tpu.matmul %38, %7, %cst_40 {dimension_numbers = #tpu.dot_dimension_numbers<[1], [0], [0], [1], [0, 0, 1, 1], [], []>} : vector<8x32xf32>, vector<32x32xf32>, vector<8x32xf32> -> vector<8x32xf32>
    %40 = vector.broadcast %8 : vector<1x32xf32> to vector<8x32xf32>
    %41 = arith.addf %39, %40 : vector<8x32xf32>
    %cst_41 = arith.constant 0.000000e+00 : f32
    %42 = vector.broadcast %cst_41 : f32 to vector<8x32xf32>
    %43 = arith.maximumf %41, %42 : vector<8x32xf32>
    %44 = vector.broadcast %9 : vector<1x32xf32> to vector<8x32xf32>
    %45 = arith.mulf %43, %44 : vector<8x32xf32>
    %cst_42 = arith.constant dense<0.000000e+00> : vector<8xf32>
    %46 = vector.multi_reduction <add>, %45, %cst_42 [1] : vector<8x32xf32> to vector<8xf32>
    %47 = vector.shape_cast %46 : vector<8xf32> to vector<8x1xf32>
    %48 = vector.extract_strided_slice %10 {offsets = [0, 0], sizes = [1, 1], strides = [1, 1]} : vector<1x32xf32> to vector<1x1xf32>
    %49 = vector.broadcast %48 : vector<1x1xf32> to vector<8x1xf32>
    %50 = arith.addf %47, %49 : vector<8x1xf32>
    %cst_43 = arith.constant dense<0.000000e+00> : vector<16x4xf32>
    %51 = tpu.matmul %3, %0, %cst_43 {dimension_numbers = #tpu.dot_dimension_numbers<[1], [0], [0], [1], [0, 0, 1, 1], [], []>} : vector<16x8xf32>, vector<8x4xf32>, vector<16x4xf32> -> vector<16x4xf32>
    %cst_44 = arith.constant dense<0.000000e+00> : vector<16x4xf32>
    %52 = tpu.matmul %2, %0, %cst_44 {dimension_numbers = #tpu.dot_dimension_numbers<[1], [0], [0], [1], [0, 0, 1, 1], [], []>} : vector<16x8xf32>, vector<8x4xf32>, vector<16x4xf32> -> vector<16x4xf32>
    %c72 = arith.constant 72 : index
    %c0_45 = arith.constant 0 : index
    %53 = vector.load %arg0[%c72, %c0_45] : memref<384x32xf32, #tpu.memory_space<vmem>>, vector<4x32xf32>
    %cst_46 = arith.constant dense<0.000000e+00> : vector<16x32xf32>
    %54 = tpu.matmul %51, %53, %cst_46 {dimension_numbers = #tpu.dot_dimension_numbers<[1], [0], [0], [1], [0, 0, 1, 1], [], []>} : vector<16x4xf32>, vector<4x32xf32>, vector<16x32xf32> -> vector<16x32xf32>
    %c88 = arith.constant 88 : index
    %c0_47 = arith.constant 0 : index
    %55 = vector.load %arg0[%c88, %c0_47] : memref<384x32xf32, #tpu.memory_space<vmem>>, vector<4x32xf32>
    %cst_48 = arith.constant dense<0.000000e+00> : vector<16x32xf32>
    %56 = tpu.matmul %52, %55, %cst_48 {dimension_numbers = #tpu.dot_dimension_numbers<[1], [0], [0], [1], [0, 0, 1, 1], [], []>} : vector<16x4xf32>, vector<4x32xf32>, vector<16x32xf32> -> vector<16x32xf32>
    %57 = arith.addf %54, %56 : vector<16x32xf32>
    %c96 = arith.constant 96 : index
    %c0_49 = arith.constant 0 : index
    %58 = vector.load %arg0[%c96, %c0_49] : memref<384x32xf32, #tpu.memory_space<vmem>>, vector<1x32xf32>
    %59 = vector.broadcast %1 : vector<16x1xf32> to vector<16x32xf32>
    %60 = vector.broadcast %58 : vector<1x32xf32> to vector<16x32xf32>
    %61 = arith.mulf %59, %60 : vector<16x32xf32>
    %62 = arith.addf %57, %61 : vector<16x32xf32>
    %63 = vector.broadcast %12 : vector<1x32xf32> to vector<16x32xf32>
    %64 = arith.addf %62, %63 : vector<16x32xf32>
    %c168 = arith.constant 168 : index
    %c0_50 = arith.constant 0 : index
    %65 = vector.load %arg0[%c168, %c0_50] : memref<384x32xf32, #tpu.memory_space<vmem>>, vector<4x32xf32>
    %cst_51 = arith.constant dense<0.000000e+00> : vector<16x32xf32>
    %66 = tpu.matmul %51, %65, %cst_51 {dimension_numbers = #tpu.dot_dimension_numbers<[1], [0], [0], [1], [0, 0, 1, 1], [], []>} : vector<16x4xf32>, vector<4x32xf32>, vector<16x32xf32> -> vector<16x32xf32>
    %c184 = arith.constant 184 : index
    %c0_52 = arith.constant 0 : index
    %67 = vector.load %arg0[%c184, %c0_52] : memref<384x32xf32, #tpu.memory_space<vmem>>, vector<4x32xf32>
    %cst_53 = arith.constant dense<0.000000e+00> : vector<16x32xf32>
    %68 = tpu.matmul %52, %67, %cst_53 {dimension_numbers = #tpu.dot_dimension_numbers<[1], [0], [0], [1], [0, 0, 1, 1], [], []>} : vector<16x4xf32>, vector<4x32xf32>, vector<16x32xf32> -> vector<16x32xf32>
    %69 = arith.addf %66, %68 : vector<16x32xf32>
    %c192 = arith.constant 192 : index
    %c0_54 = arith.constant 0 : index
    %70 = vector.load %arg0[%c192, %c0_54] : memref<384x32xf32, #tpu.memory_space<vmem>>, vector<1x32xf32>
    %71 = vector.broadcast %1 : vector<16x1xf32> to vector<16x32xf32>
    %72 = vector.broadcast %70 : vector<1x32xf32> to vector<16x32xf32>
    %73 = arith.mulf %71, %72 : vector<16x32xf32>
    %74 = arith.addf %69, %73 : vector<16x32xf32>
    %75 = vector.broadcast %18 : vector<1x32xf32> to vector<16x32xf32>
    %76 = arith.addf %74, %75 : vector<16x32xf32>
    %c272 = arith.constant 272 : index
    %c0_55 = arith.constant 0 : index
    %77 = vector.load %arg0[%c272, %c0_55] : memref<384x32xf32, #tpu.memory_space<vmem>>, vector<4x32xf32>
    %cst_56 = arith.constant dense<0.000000e+00> : vector<8x32xf32>
    %78 = tpu.matmul %0, %77, %cst_56 {dimension_numbers = #tpu.dot_dimension_numbers<[1], [0], [0], [1], [0, 0, 1, 1], [], []>} : vector<8x4xf32>, vector<4x32xf32>, vector<8x32xf32> -> vector<8x32xf32>
    %79 = vector.broadcast %25 : vector<1x32xf32> to vector<8x32xf32>
    %80 = arith.addf %78, %79 : vector<8x32xf32>
    %cst_57 = arith.constant dense<0.000000e+00> : vector<16x1xf32>
    %81 = tpu.matmul %3, %50, %cst_57 {dimension_numbers = #tpu.dot_dimension_numbers<[1], [0], [0], [1], [0, 0, 1, 1], [], []>} : vector<16x8xf32>, vector<8x1xf32>, vector<16x1xf32> -> vector<16x1xf32>
    %cst_58 = arith.constant 0.000000e+00 : f32
    %82 = vector.broadcast %cst_58 : f32 to vector<16x1xf32>
    %cst_59 = arith.constant 0.000000e+00 : f32
    %83 = vector.broadcast %cst_59 : f32 to vector<8x1xf32>
    %c0_i32 = arith.constant 0 : i32
    %84 = vector.broadcast %81 : vector<16x1xf32> to vector<16x32xf32>
    %85 = vector.broadcast %11 : vector<1x32xf32> to vector<16x32xf32>
    %86 = arith.mulf %84, %85 : vector<16x32xf32>
    %87 = arith.addf %64, %86 : vector<16x32xf32>
    %cst_60 = arith.constant 0.000000e+00 : f32
    %88 = vector.broadcast %cst_60 : f32 to vector<16x32xf32>
    %89 = arith.maximumf %87, %88 : vector<16x32xf32>
    %cst_61 = arith.constant dense<0.000000e+00> : vector<16x32xf32>
    %90 = tpu.matmul %89, %13, %cst_61 {dimension_numbers = #tpu.dot_dimension_numbers<[1], [0], [0], [1], [0, 0, 1, 1], [], []>} : vector<16x32xf32>, vector<32x32xf32>, vector<16x32xf32> -> vector<16x32xf32>
    %91 = vector.broadcast %14 : vector<1x32xf32> to vector<16x32xf32>
    %92 = arith.addf %90, %91 : vector<16x32xf32>
    %cst_62 = arith.constant 0.000000e+00 : f32
    %93 = vector.broadcast %cst_62 : f32 to vector<16x32xf32>
    %94 = arith.maximumf %92, %93 : vector<16x32xf32>
    %95 = vector.broadcast %15 : vector<1x32xf32> to vector<16x32xf32>
    %96 = arith.mulf %94, %95 : vector<16x32xf32>
    %cst_63 = arith.constant dense<0.000000e+00> : vector<16xf32>
    %97 = vector.multi_reduction <add>, %96, %cst_63 [1] : vector<16x32xf32> to vector<16xf32>
    %98 = vector.shape_cast %97 : vector<16xf32> to vector<16x1xf32>
    %99 = vector.extract_strided_slice %16 {offsets = [0, 0], sizes = [1, 1], strides = [1, 1]} : vector<1x32xf32> to vector<1x1xf32>
    %100 = vector.broadcast %99 : vector<1x1xf32> to vector<16x1xf32>
    %101 = arith.addf %98, %100 : vector<16x1xf32>
    %cst_64 = arith.constant dense<0.000000e+00> : vector<8x1xf32>
    %102 = tpu.matmul %4, %101, %cst_64 {dimension_numbers = #tpu.dot_dimension_numbers<[1], [0], [0], [1], [0, 0, 1, 1], [], []>} : vector<8x16xf32>, vector<16x1xf32>, vector<8x1xf32> -> vector<8x1xf32>
    %103 = vector.broadcast %102 : vector<8x1xf32> to vector<8x32xf32>
    %104 = vector.broadcast %23 : vector<1x32xf32> to vector<8x32xf32>
    %105 = arith.mulf %103, %104 : vector<8x32xf32>
    %106 = arith.addf %80, %105 : vector<8x32xf32>
    %107 = vector.broadcast %50 : vector<8x1xf32> to vector<8x32xf32>
    %108 = vector.broadcast %24 : vector<1x32xf32> to vector<8x32xf32>
    %109 = arith.mulf %107, %108 : vector<8x32xf32>
    %110 = arith.addf %106, %109 : vector<8x32xf32>
    %cst_65 = arith.constant 0.000000e+00 : f32
    %111 = vector.broadcast %cst_65 : f32 to vector<8x32xf32>
    %112 = arith.maximumf %110, %111 : vector<8x32xf32>
    %cst_66 = arith.constant dense<0.000000e+00> : vector<8x32xf32>
    %113 = tpu.matmul %112, %26, %cst_66 {dimension_numbers = #tpu.dot_dimension_numbers<[1], [0], [0], [1], [0, 0, 1, 1], [], []>} : vector<8x32xf32>, vector<32x32xf32>, vector<8x32xf32> -> vector<8x32xf32>
    %114 = vector.broadcast %27 : vector<1x32xf32> to vector<8x32xf32>
    %115 = arith.addf %113, %114 : vector<8x32xf32>
    %cst_67 = arith.constant 0.000000e+00 : f32
    %116 = vector.broadcast %cst_67 : f32 to vector<8x32xf32>
    %117 = arith.maximumf %115, %116 : vector<8x32xf32>
    %118 = vector.broadcast %28 : vector<1x32xf32> to vector<8x32xf32>
    %119 = arith.mulf %117, %118 : vector<8x32xf32>
    %cst_68 = arith.constant dense<0.000000e+00> : vector<8xf32>
    %120 = vector.multi_reduction <add>, %119, %cst_68 [1] : vector<8x32xf32> to vector<8xf32>
    %121 = vector.shape_cast %120 : vector<8xf32> to vector<8x1xf32>
    %122 = vector.extract_strided_slice %29 {offsets = [0, 0], sizes = [1, 1], strides = [1, 1]} : vector<1x32xf32> to vector<1x1xf32>
    %123 = vector.broadcast %122 : vector<1x1xf32> to vector<8x1xf32>
    %124 = arith.addf %121, %123 : vector<8x1xf32>
    %cst_69 = arith.constant dense<0.000000e+00> : vector<16x1xf32>
    %125 = tpu.matmul %3, %124, %cst_69 {dimension_numbers = #tpu.dot_dimension_numbers<[1], [0], [0], [1], [0, 0, 1, 1], [], []>} : vector<16x8xf32>, vector<8x1xf32>, vector<16x1xf32> -> vector<16x1xf32>
    %126 = vector.broadcast %125 : vector<16x1xf32> to vector<16x32xf32>
    %127 = vector.broadcast %17 : vector<1x32xf32> to vector<16x32xf32>
    %128 = arith.mulf %126, %127 : vector<16x32xf32>
    %129 = arith.addf %76, %128 : vector<16x32xf32>
    %cst_70 = arith.constant 0.000000e+00 : f32
    %130 = vector.broadcast %cst_70 : f32 to vector<16x32xf32>
    %131 = arith.maximumf %129, %130 : vector<16x32xf32>
    %cst_71 = arith.constant dense<0.000000e+00> : vector<16x32xf32>
    %132 = tpu.matmul %131, %19, %cst_71 {dimension_numbers = #tpu.dot_dimension_numbers<[1], [0], [0], [1], [0, 0, 1, 1], [], []>} : vector<16x32xf32>, vector<32x32xf32>, vector<16x32xf32> -> vector<16x32xf32>
    %133 = vector.broadcast %20 : vector<1x32xf32> to vector<16x32xf32>
    %134 = arith.addf %132, %133 : vector<16x32xf32>
    %cst_72 = arith.constant 0.000000e+00 : f32
    %135 = vector.broadcast %cst_72 : f32 to vector<16x32xf32>
    %136 = arith.maximumf %134, %135 : vector<16x32xf32>
    %137 = vector.broadcast %21 : vector<1x32xf32> to vector<16x32xf32>
    %138 = arith.mulf %136, %137 : vector<16x32xf32>
    %cst_73 = arith.constant dense<0.000000e+00> : vector<16xf32>
    %139 = vector.multi_reduction <add>, %138, %cst_73 [1] : vector<16x32xf32> to vector<16xf32>
    %140 = vector.shape_cast %139 : vector<16xf32> to vector<16x1xf32>
    %141 = vector.extract_strided_slice %22 {offsets = [0, 0], sizes = [1, 1], strides = [1, 1]} : vector<1x32xf32> to vector<1x1xf32>
    %142 = vector.broadcast %141 : vector<1x1xf32> to vector<16x1xf32>
    %143 = arith.addf %140, %142 : vector<16x1xf32>
    %144 = arith.addf %82, %143 : vector<16x1xf32>
    %145 = vector.broadcast %124 : vector<8x1xf32> to vector<8x32xf32>
    %146 = vector.broadcast %30 : vector<1x32xf32> to vector<8x32xf32>
    %147 = arith.mulf %145, %146 : vector<8x32xf32>
    %148 = vector.broadcast %31 : vector<1x32xf32> to vector<8x32xf32>
    %149 = arith.addf %147, %148 : vector<8x32xf32>
    %cst_74 = arith.constant 0.000000e+00 : f32
    %150 = vector.broadcast %cst_74 : f32 to vector<8x32xf32>
    %151 = arith.maximumf %149, %150 : vector<8x32xf32>
    %152 = vector.broadcast %32 : vector<1x32xf32> to vector<8x32xf32>
    %153 = arith.mulf %151, %152 : vector<8x32xf32>
    %cst_75 = arith.constant dense<0.000000e+00> : vector<8xf32>
    %154 = vector.multi_reduction <add>, %153, %cst_75 [1] : vector<8x32xf32> to vector<8xf32>
    %155 = vector.shape_cast %154 : vector<8xf32> to vector<8x1xf32>
    %156 = vector.extract_strided_slice %33 {offsets = [0, 0], sizes = [1, 1], strides = [1, 1]} : vector<1x32xf32> to vector<1x1xf32>
    %157 = vector.broadcast %156 : vector<1x1xf32> to vector<8x1xf32>
    %158 = arith.addf %155, %157 : vector<8x1xf32>
    %159 = arith.addf %83, %158 : vector<8x1xf32>
    %c1_i32 = arith.constant 1 : i32
    %160 = vector.broadcast %125 : vector<16x1xf32> to vector<16x32xf32>
    %161 = vector.broadcast %11 : vector<1x32xf32> to vector<16x32xf32>
    %162 = arith.mulf %160, %161 : vector<16x32xf32>
    %163 = arith.addf %64, %162 : vector<16x32xf32>
    %cst_76 = arith.constant 0.000000e+00 : f32
    %164 = vector.broadcast %cst_76 : f32 to vector<16x32xf32>
    %165 = arith.maximumf %163, %164 : vector<16x32xf32>
    %cst_77 = arith.constant dense<0.000000e+00> : vector<16x32xf32>
    %166 = tpu.matmul %165, %13, %cst_77 {dimension_numbers = #tpu.dot_dimension_numbers<[1], [0], [0], [1], [0, 0, 1, 1], [], []>} : vector<16x32xf32>, vector<32x32xf32>, vector<16x32xf32> -> vector<16x32xf32>
    %167 = vector.broadcast %14 : vector<1x32xf32> to vector<16x32xf32>
    %168 = arith.addf %166, %167 : vector<16x32xf32>
    %cst_78 = arith.constant 0.000000e+00 : f32
    %169 = vector.broadcast %cst_78 : f32 to vector<16x32xf32>
    %170 = arith.maximumf %168, %169 : vector<16x32xf32>
    %171 = vector.broadcast %15 : vector<1x32xf32> to vector<16x32xf32>
    %172 = arith.mulf %170, %171 : vector<16x32xf32>
    %cst_79 = arith.constant dense<0.000000e+00> : vector<16xf32>
    %173 = vector.multi_reduction <add>, %172, %cst_79 [1] : vector<16x32xf32> to vector<16xf32>
    %174 = vector.shape_cast %173 : vector<16xf32> to vector<16x1xf32>
    %175 = vector.extract_strided_slice %16 {offsets = [0, 0], sizes = [1, 1], strides = [1, 1]} : vector<1x32xf32> to vector<1x1xf32>
    %176 = vector.broadcast %175 : vector<1x1xf32> to vector<16x1xf32>
    %177 = arith.addf %174, %176 : vector<16x1xf32>
    %cst_80 = arith.constant dense<0.000000e+00> : vector<8x1xf32>
    %178 = tpu.matmul %4, %177, %cst_80 {dimension_numbers = #tpu.dot_dimension_numbers<[1], [0], [0], [1], [0, 0, 1, 1], [], []>} : vector<8x16xf32>, vector<16x1xf32>, vector<8x1xf32> -> vector<8x1xf32>
    %179 = vector.broadcast %178 : vector<8x1xf32> to vector<8x32xf32>
    %180 = vector.broadcast %23 : vector<1x32xf32> to vector<8x32xf32>
    %181 = arith.mulf %179, %180 : vector<8x32xf32>
    %182 = arith.addf %80, %181 : vector<8x32xf32>
    %183 = vector.broadcast %124 : vector<8x1xf32> to vector<8x32xf32>
    %184 = vector.broadcast %24 : vector<1x32xf32> to vector<8x32xf32>
    %185 = arith.mulf %183, %184 : vector<8x32xf32>
    %186 = arith.addf %182, %185 : vector<8x32xf32>
    %cst_81 = arith.constant 0.000000e+00 : f32
    %187 = vector.broadcast %cst_81 : f32 to vector<8x32xf32>
    %188 = arith.maximumf %186, %187 : vector<8x32xf32>
    %cst_82 = arith.constant dense<0.000000e+00> : vector<8x32xf32>
    %189 = tpu.matmul %188, %26, %cst_82 {dimension_numbers = #tpu.dot_dimension_numbers<[1], [0], [0], [1], [0, 0, 1, 1], [], []>} : vector<8x32xf32>, vector<32x32xf32>, vector<8x32xf32> -> vector<8x32xf32>
    %190 = vector.broadcast %27 : vector<1x32xf32> to vector<8x32xf32>
    %191 = arith.addf %189, %190 : vector<8x32xf32>
    %cst_83 = arith.constant 0.000000e+00 : f32
    %192 = vector.broadcast %cst_83 : f32 to vector<8x32xf32>
    %193 = arith.maximumf %191, %192 : vector<8x32xf32>
    %194 = vector.broadcast %28 : vector<1x32xf32> to vector<8x32xf32>
    %195 = arith.mulf %193, %194 : vector<8x32xf32>
    %cst_84 = arith.constant dense<0.000000e+00> : vector<8xf32>
    %196 = vector.multi_reduction <add>, %195, %cst_84 [1] : vector<8x32xf32> to vector<8xf32>
    %197 = vector.shape_cast %196 : vector<8xf32> to vector<8x1xf32>
    %198 = vector.extract_strided_slice %29 {offsets = [0, 0], sizes = [1, 1], strides = [1, 1]} : vector<1x32xf32> to vector<1x1xf32>
    %199 = vector.broadcast %198 : vector<1x1xf32> to vector<8x1xf32>
    %200 = arith.addf %197, %199 : vector<8x1xf32>
    %cst_85 = arith.constant dense<0.000000e+00> : vector<16x1xf32>
    %201 = tpu.matmul %3, %200, %cst_85 {dimension_numbers = #tpu.dot_dimension_numbers<[1], [0], [0], [1], [0, 0, 1, 1], [], []>} : vector<16x8xf32>, vector<8x1xf32>, vector<16x1xf32> -> vector<16x1xf32>
    %202 = vector.broadcast %201 : vector<16x1xf32> to vector<16x32xf32>
    %203 = vector.broadcast %17 : vector<1x32xf32> to vector<16x32xf32>
    %204 = arith.mulf %202, %203 : vector<16x32xf32>
    %205 = arith.addf %76, %204 : vector<16x32xf32>
    %cst_86 = arith.constant 0.000000e+00 : f32
    %206 = vector.broadcast %cst_86 : f32 to vector<16x32xf32>
    %207 = arith.maximumf %205, %206 : vector<16x32xf32>
    %cst_87 = arith.constant dense<0.000000e+00> : vector<16x32xf32>
    %208 = tpu.matmul %207, %19, %cst_87 {dimension_numbers = #tpu.dot_dimension_numbers<[1], [0], [0], [1], [0, 0, 1, 1], [], []>} : vector<16x32xf32>, vector<32x32xf32>, vector<16x32xf32> -> vector<16x32xf32>
    %209 = vector.broadcast %20 : vector<1x32xf32> to vector<16x32xf32>
    %210 = arith.addf %208, %209 : vector<16x32xf32>
    %cst_88 = arith.constant 0.000000e+00 : f32
    %211 = vector.broadcast %cst_88 : f32 to vector<16x32xf32>
    %212 = arith.maximumf %210, %211 : vector<16x32xf32>
    %213 = vector.broadcast %21 : vector<1x32xf32> to vector<16x32xf32>
    %214 = arith.mulf %212, %213 : vector<16x32xf32>
    %cst_89 = arith.constant dense<0.000000e+00> : vector<16xf32>
    %215 = vector.multi_reduction <add>, %214, %cst_89 [1] : vector<16x32xf32> to vector<16xf32>
    %216 = vector.shape_cast %215 : vector<16xf32> to vector<16x1xf32>
    %217 = vector.extract_strided_slice %22 {offsets = [0, 0], sizes = [1, 1], strides = [1, 1]} : vector<1x32xf32> to vector<1x1xf32>
    %218 = vector.broadcast %217 : vector<1x1xf32> to vector<16x1xf32>
    %219 = arith.addf %216, %218 : vector<16x1xf32>
    %220 = arith.addf %144, %219 : vector<16x1xf32>
    %221 = vector.broadcast %200 : vector<8x1xf32> to vector<8x32xf32>
    %222 = vector.broadcast %30 : vector<1x32xf32> to vector<8x32xf32>
    %223 = arith.mulf %221, %222 : vector<8x32xf32>
    %224 = vector.broadcast %31 : vector<1x32xf32> to vector<8x32xf32>
    %225 = arith.addf %223, %224 : vector<8x32xf32>
    %cst_90 = arith.constant 0.000000e+00 : f32
    %226 = vector.broadcast %cst_90 : f32 to vector<8x32xf32>
    %227 = arith.maximumf %225, %226 : vector<8x32xf32>
    %228 = vector.broadcast %32 : vector<1x32xf32> to vector<8x32xf32>
    %229 = arith.mulf %227, %228 : vector<8x32xf32>
    %cst_91 = arith.constant dense<0.000000e+00> : vector<8xf32>
    %230 = vector.multi_reduction <add>, %229, %cst_91 [1] : vector<8x32xf32> to vector<8xf32>
    %231 = vector.shape_cast %230 : vector<8xf32> to vector<8x1xf32>
    %232 = vector.extract_strided_slice %33 {offsets = [0, 0], sizes = [1, 1], strides = [1, 1]} : vector<1x32xf32> to vector<1x1xf32>
    %233 = vector.broadcast %232 : vector<1x1xf32> to vector<8x1xf32>
    %234 = arith.addf %231, %233 : vector<8x1xf32>
    %235 = arith.addf %159, %234 : vector<8x1xf32>
    %c2_i32 = arith.constant 2 : i32
    %236 = vector.broadcast %201 : vector<16x1xf32> to vector<16x32xf32>
    %237 = vector.broadcast %11 : vector<1x32xf32> to vector<16x32xf32>
    %238 = arith.mulf %236, %237 : vector<16x32xf32>
    %239 = arith.addf %64, %238 : vector<16x32xf32>
    %cst_92 = arith.constant 0.000000e+00 : f32
    %240 = vector.broadcast %cst_92 : f32 to vector<16x32xf32>
    %241 = arith.maximumf %239, %240 : vector<16x32xf32>
    %cst_93 = arith.constant dense<0.000000e+00> : vector<16x32xf32>
    %242 = tpu.matmul %241, %13, %cst_93 {dimension_numbers = #tpu.dot_dimension_numbers<[1], [0], [0], [1], [0, 0, 1, 1], [], []>} : vector<16x32xf32>, vector<32x32xf32>, vector<16x32xf32> -> vector<16x32xf32>
    %243 = vector.broadcast %14 : vector<1x32xf32> to vector<16x32xf32>
    %244 = arith.addf %242, %243 : vector<16x32xf32>
    %cst_94 = arith.constant 0.000000e+00 : f32
    %245 = vector.broadcast %cst_94 : f32 to vector<16x32xf32>
    %246 = arith.maximumf %244, %245 : vector<16x32xf32>
    %247 = vector.broadcast %15 : vector<1x32xf32> to vector<16x32xf32>
    %248 = arith.mulf %246, %247 : vector<16x32xf32>
    %cst_95 = arith.constant dense<0.000000e+00> : vector<16xf32>
    %249 = vector.multi_reduction <add>, %248, %cst_95 [1] : vector<16x32xf32> to vector<16xf32>
    %250 = vector.shape_cast %249 : vector<16xf32> to vector<16x1xf32>
    %251 = vector.extract_strided_slice %16 {offsets = [0, 0], sizes = [1, 1], strides = [1, 1]} : vector<1x32xf32> to vector<1x1xf32>
    %252 = vector.broadcast %251 : vector<1x1xf32> to vector<16x1xf32>
    %253 = arith.addf %250, %252 : vector<16x1xf32>
    %cst_96 = arith.constant dense<0.000000e+00> : vector<8x1xf32>
    %254 = tpu.matmul %4, %253, %cst_96 {dimension_numbers = #tpu.dot_dimension_numbers<[1], [0], [0], [1], [0, 0, 1, 1], [], []>} : vector<8x16xf32>, vector<16x1xf32>, vector<8x1xf32> -> vector<8x1xf32>
    %255 = vector.broadcast %254 : vector<8x1xf32> to vector<8x32xf32>
    %256 = vector.broadcast %23 : vector<1x32xf32> to vector<8x32xf32>
    %257 = arith.mulf %255, %256 : vector<8x32xf32>
    %258 = arith.addf %80, %257 : vector<8x32xf32>
    %259 = vector.broadcast %200 : vector<8x1xf32> to vector<8x32xf32>
    %260 = vector.broadcast %24 : vector<1x32xf32> to vector<8x32xf32>
    %261 = arith.mulf %259, %260 : vector<8x32xf32>
    %262 = arith.addf %258, %261 : vector<8x32xf32>
    %cst_97 = arith.constant 0.000000e+00 : f32
    %263 = vector.broadcast %cst_97 : f32 to vector<8x32xf32>
    %264 = arith.maximumf %262, %263 : vector<8x32xf32>
    %cst_98 = arith.constant dense<0.000000e+00> : vector<8x32xf32>
    %265 = tpu.matmul %264, %26, %cst_98 {dimension_numbers = #tpu.dot_dimension_numbers<[1], [0], [0], [1], [0, 0, 1, 1], [], []>} : vector<8x32xf32>, vector<32x32xf32>, vector<8x32xf32> -> vector<8x32xf32>
    %266 = vector.broadcast %27 : vector<1x32xf32> to vector<8x32xf32>
    %267 = arith.addf %265, %266 : vector<8x32xf32>
    %cst_99 = arith.constant 0.000000e+00 : f32
    %268 = vector.broadcast %cst_99 : f32 to vector<8x32xf32>
    %269 = arith.maximumf %267, %268 : vector<8x32xf32>
    %270 = vector.broadcast %28 : vector<1x32xf32> to vector<8x32xf32>
    %271 = arith.mulf %269, %270 : vector<8x32xf32>
    %cst_100 = arith.constant dense<0.000000e+00> : vector<8xf32>
    %272 = vector.multi_reduction <add>, %271, %cst_100 [1] : vector<8x32xf32> to vector<8xf32>
    %273 = vector.shape_cast %272 : vector<8xf32> to vector<8x1xf32>
    %274 = vector.extract_strided_slice %29 {offsets = [0, 0], sizes = [1, 1], strides = [1, 1]} : vector<1x32xf32> to vector<1x1xf32>
    %275 = vector.broadcast %274 : vector<1x1xf32> to vector<8x1xf32>
    %276 = arith.addf %273, %275 : vector<8x1xf32>
    %cst_101 = arith.constant dense<0.000000e+00> : vector<16x1xf32>
    %277 = tpu.matmul %3, %276, %cst_101 {dimension_numbers = #tpu.dot_dimension_numbers<[1], [0], [0], [1], [0, 0, 1, 1], [], []>} : vector<16x8xf32>, vector<8x1xf32>, vector<16x1xf32> -> vector<16x1xf32>
    %278 = vector.broadcast %277 : vector<16x1xf32> to vector<16x32xf32>
    %279 = vector.broadcast %17 : vector<1x32xf32> to vector<16x32xf32>
    %280 = arith.mulf %278, %279 : vector<16x32xf32>
    %281 = arith.addf %76, %280 : vector<16x32xf32>
    %cst_102 = arith.constant 0.000000e+00 : f32
    %282 = vector.broadcast %cst_102 : f32 to vector<16x32xf32>
    %283 = arith.maximumf %281, %282 : vector<16x32xf32>
    %cst_103 = arith.constant dense<0.000000e+00> : vector<16x32xf32>
    %284 = tpu.matmul %283, %19, %cst_103 {dimension_numbers = #tpu.dot_dimension_numbers<[1], [0], [0], [1], [0, 0, 1, 1], [], []>} : vector<16x32xf32>, vector<32x32xf32>, vector<16x32xf32> -> vector<16x32xf32>
    %285 = vector.broadcast %20 : vector<1x32xf32> to vector<16x32xf32>
    %286 = arith.addf %284, %285 : vector<16x32xf32>
    %cst_104 = arith.constant 0.000000e+00 : f32
    %287 = vector.broadcast %cst_104 : f32 to vector<16x32xf32>
    %288 = arith.maximumf %286, %287 : vector<16x32xf32>
    %289 = vector.broadcast %21 : vector<1x32xf32> to vector<16x32xf32>
    %290 = arith.mulf %288, %289 : vector<16x32xf32>
    %cst_105 = arith.constant dense<0.000000e+00> : vector<16xf32>
    %291 = vector.multi_reduction <add>, %290, %cst_105 [1] : vector<16x32xf32> to vector<16xf32>
    %292 = vector.shape_cast %291 : vector<16xf32> to vector<16x1xf32>
    %293 = vector.extract_strided_slice %22 {offsets = [0, 0], sizes = [1, 1], strides = [1, 1]} : vector<1x32xf32> to vector<1x1xf32>
    %294 = vector.broadcast %293 : vector<1x1xf32> to vector<16x1xf32>
    %295 = arith.addf %292, %294 : vector<16x1xf32>
    %296 = arith.addf %220, %295 : vector<16x1xf32>
    %297 = vector.broadcast %276 : vector<8x1xf32> to vector<8x32xf32>
    %298 = vector.broadcast %30 : vector<1x32xf32> to vector<8x32xf32>
    %299 = arith.mulf %297, %298 : vector<8x32xf32>
    %300 = vector.broadcast %31 : vector<1x32xf32> to vector<8x32xf32>
    %301 = arith.addf %299, %300 : vector<8x32xf32>
    %cst_106 = arith.constant 0.000000e+00 : f32
    %302 = vector.broadcast %cst_106 : f32 to vector<8x32xf32>
    %303 = arith.maximumf %301, %302 : vector<8x32xf32>
    %304 = vector.broadcast %32 : vector<1x32xf32> to vector<8x32xf32>
    %305 = arith.mulf %303, %304 : vector<8x32xf32>
    %cst_107 = arith.constant dense<0.000000e+00> : vector<8xf32>
    %306 = vector.multi_reduction <add>, %305, %cst_107 [1] : vector<8x32xf32> to vector<8xf32>
    %307 = vector.shape_cast %306 : vector<8xf32> to vector<8x1xf32>
    %308 = vector.extract_strided_slice %33 {offsets = [0, 0], sizes = [1, 1], strides = [1, 1]} : vector<1x32xf32> to vector<1x1xf32>
    %309 = vector.broadcast %308 : vector<1x1xf32> to vector<8x1xf32>
    %310 = arith.addf %307, %309 : vector<8x1xf32>
    %311 = arith.addf %235, %310 : vector<8x1xf32>
    %c3_i32 = arith.constant 3 : i32
    %312 = vector.broadcast %277 : vector<16x1xf32> to vector<16x32xf32>
    %313 = vector.broadcast %11 : vector<1x32xf32> to vector<16x32xf32>
    %314 = arith.mulf %312, %313 : vector<16x32xf32>
    %315 = arith.addf %64, %314 : vector<16x32xf32>
    %cst_108 = arith.constant 0.000000e+00 : f32
    %316 = vector.broadcast %cst_108 : f32 to vector<16x32xf32>
    %317 = arith.maximumf %315, %316 : vector<16x32xf32>
    %cst_109 = arith.constant dense<0.000000e+00> : vector<16x32xf32>
    %318 = tpu.matmul %317, %13, %cst_109 {dimension_numbers = #tpu.dot_dimension_numbers<[1], [0], [0], [1], [0, 0, 1, 1], [], []>} : vector<16x32xf32>, vector<32x32xf32>, vector<16x32xf32> -> vector<16x32xf32>
    %319 = vector.broadcast %14 : vector<1x32xf32> to vector<16x32xf32>
    %320 = arith.addf %318, %319 : vector<16x32xf32>
    %cst_110 = arith.constant 0.000000e+00 : f32
    %321 = vector.broadcast %cst_110 : f32 to vector<16x32xf32>
    %322 = arith.maximumf %320, %321 : vector<16x32xf32>
    %323 = vector.broadcast %15 : vector<1x32xf32> to vector<16x32xf32>
    %324 = arith.mulf %322, %323 : vector<16x32xf32>
    %cst_111 = arith.constant dense<0.000000e+00> : vector<16xf32>
    %325 = vector.multi_reduction <add>, %324, %cst_111 [1] : vector<16x32xf32> to vector<16xf32>
    %326 = vector.shape_cast %325 : vector<16xf32> to vector<16x1xf32>
    %327 = vector.extract_strided_slice %16 {offsets = [0, 0], sizes = [1, 1], strides = [1, 1]} : vector<1x32xf32> to vector<1x1xf32>
    %328 = vector.broadcast %327 : vector<1x1xf32> to vector<16x1xf32>
    %329 = arith.addf %326, %328 : vector<16x1xf32>
    %cst_112 = arith.constant dense<0.000000e+00> : vector<8x1xf32>
    %330 = tpu.matmul %4, %329, %cst_112 {dimension_numbers = #tpu.dot_dimension_numbers<[1], [0], [0], [1], [0, 0, 1, 1], [], []>} : vector<8x16xf32>, vector<16x1xf32>, vector<8x1xf32> -> vector<8x1xf32>
    %331 = vector.broadcast %330 : vector<8x1xf32> to vector<8x32xf32>
    %332 = vector.broadcast %23 : vector<1x32xf32> to vector<8x32xf32>
    %333 = arith.mulf %331, %332 : vector<8x32xf32>
    %334 = arith.addf %80, %333 : vector<8x32xf32>
    %335 = vector.broadcast %276 : vector<8x1xf32> to vector<8x32xf32>
    %336 = vector.broadcast %24 : vector<1x32xf32> to vector<8x32xf32>
    %337 = arith.mulf %335, %336 : vector<8x32xf32>
    %338 = arith.addf %334, %337 : vector<8x32xf32>
    %cst_113 = arith.constant 0.000000e+00 : f32
    %339 = vector.broadcast %cst_113 : f32 to vector<8x32xf32>
    %340 = arith.maximumf %338, %339 : vector<8x32xf32>
    %cst_114 = arith.constant dense<0.000000e+00> : vector<8x32xf32>
    %341 = tpu.matmul %340, %26, %cst_114 {dimension_numbers = #tpu.dot_dimension_numbers<[1], [0], [0], [1], [0, 0, 1, 1], [], []>} : vector<8x32xf32>, vector<32x32xf32>, vector<8x32xf32> -> vector<8x32xf32>
    %342 = vector.broadcast %27 : vector<1x32xf32> to vector<8x32xf32>
    %343 = arith.addf %341, %342 : vector<8x32xf32>
    %cst_115 = arith.constant 0.000000e+00 : f32
    %344 = vector.broadcast %cst_115 : f32 to vector<8x32xf32>
    %345 = arith.maximumf %343, %344 : vector<8x32xf32>
    %346 = vector.broadcast %28 : vector<1x32xf32> to vector<8x32xf32>
    %347 = arith.mulf %345, %346 : vector<8x32xf32>
    %cst_116 = arith.constant dense<0.000000e+00> : vector<8xf32>
    %348 = vector.multi_reduction <add>, %347, %cst_116 [1] : vector<8x32xf32> to vector<8xf32>
    %349 = vector.shape_cast %348 : vector<8xf32> to vector<8x1xf32>
    %350 = vector.extract_strided_slice %29 {offsets = [0, 0], sizes = [1, 1], strides = [1, 1]} : vector<1x32xf32> to vector<1x1xf32>
    %351 = vector.broadcast %350 : vector<1x1xf32> to vector<8x1xf32>
    %352 = arith.addf %349, %351 : vector<8x1xf32>
    %cst_117 = arith.constant dense<0.000000e+00> : vector<16x1xf32>
    %353 = tpu.matmul %3, %352, %cst_117 {dimension_numbers = #tpu.dot_dimension_numbers<[1], [0], [0], [1], [0, 0, 1, 1], [], []>} : vector<16x8xf32>, vector<8x1xf32>, vector<16x1xf32> -> vector<16x1xf32>
    %354 = vector.broadcast %353 : vector<16x1xf32> to vector<16x32xf32>
    %355 = vector.broadcast %17 : vector<1x32xf32> to vector<16x32xf32>
    %356 = arith.mulf %354, %355 : vector<16x32xf32>
    %357 = arith.addf %76, %356 : vector<16x32xf32>
    %cst_118 = arith.constant 0.000000e+00 : f32
    %358 = vector.broadcast %cst_118 : f32 to vector<16x32xf32>
    %359 = arith.maximumf %357, %358 : vector<16x32xf32>
    %cst_119 = arith.constant dense<0.000000e+00> : vector<16x32xf32>
    %360 = tpu.matmul %359, %19, %cst_119 {dimension_numbers = #tpu.dot_dimension_numbers<[1], [0], [0], [1], [0, 0, 1, 1], [], []>} : vector<16x32xf32>, vector<32x32xf32>, vector<16x32xf32> -> vector<16x32xf32>
    %361 = vector.broadcast %20 : vector<1x32xf32> to vector<16x32xf32>
    %362 = arith.addf %360, %361 : vector<16x32xf32>
    %cst_120 = arith.constant 0.000000e+00 : f32
    %363 = vector.broadcast %cst_120 : f32 to vector<16x32xf32>
    %364 = arith.maximumf %362, %363 : vector<16x32xf32>
    %365 = vector.broadcast %21 : vector<1x32xf32> to vector<16x32xf32>
    %366 = arith.mulf %364, %365 : vector<16x32xf32>
    %cst_121 = arith.constant dense<0.000000e+00> : vector<16xf32>
    %367 = vector.multi_reduction <add>, %366, %cst_121 [1] : vector<16x32xf32> to vector<16xf32>
    %368 = vector.shape_cast %367 : vector<16xf32> to vector<16x1xf32>
    %369 = vector.extract_strided_slice %22 {offsets = [0, 0], sizes = [1, 1], strides = [1, 1]} : vector<1x32xf32> to vector<1x1xf32>
    %370 = vector.broadcast %369 : vector<1x1xf32> to vector<16x1xf32>
    %371 = arith.addf %368, %370 : vector<16x1xf32>
    %372 = arith.addf %296, %371 : vector<16x1xf32>
    %373 = vector.broadcast %352 : vector<8x1xf32> to vector<8x32xf32>
    %374 = vector.broadcast %30 : vector<1x32xf32> to vector<8x32xf32>
    %375 = arith.mulf %373, %374 : vector<8x32xf32>
    %376 = vector.broadcast %31 : vector<1x32xf32> to vector<8x32xf32>
    %377 = arith.addf %375, %376 : vector<8x32xf32>
    %cst_122 = arith.constant 0.000000e+00 : f32
    %378 = vector.broadcast %cst_122 : f32 to vector<8x32xf32>
    %379 = arith.maximumf %377, %378 : vector<8x32xf32>
    %380 = vector.broadcast %32 : vector<1x32xf32> to vector<8x32xf32>
    %381 = arith.mulf %379, %380 : vector<8x32xf32>
    %cst_123 = arith.constant dense<0.000000e+00> : vector<8xf32>
    %382 = vector.multi_reduction <add>, %381, %cst_123 [1] : vector<8x32xf32> to vector<8xf32>
    %383 = vector.shape_cast %382 : vector<8xf32> to vector<8x1xf32>
    %384 = vector.extract_strided_slice %33 {offsets = [0, 0], sizes = [1, 1], strides = [1, 1]} : vector<1x32xf32> to vector<1x1xf32>
    %385 = vector.broadcast %384 : vector<1x1xf32> to vector<8x1xf32>
    %386 = arith.addf %383, %385 : vector<8x1xf32>
    %387 = arith.addf %311, %386 : vector<8x1xf32>
    %c4_i32 = arith.constant 4 : i32
    %388 = vector.broadcast %353 : vector<16x1xf32> to vector<16x32xf32>
    %389 = vector.broadcast %11 : vector<1x32xf32> to vector<16x32xf32>
    %390 = arith.mulf %388, %389 : vector<16x32xf32>
    %391 = arith.addf %64, %390 : vector<16x32xf32>
    %cst_124 = arith.constant 0.000000e+00 : f32
    %392 = vector.broadcast %cst_124 : f32 to vector<16x32xf32>
    %393 = arith.maximumf %391, %392 : vector<16x32xf32>
    %cst_125 = arith.constant dense<0.000000e+00> : vector<16x32xf32>
    %394 = tpu.matmul %393, %13, %cst_125 {dimension_numbers = #tpu.dot_dimension_numbers<[1], [0], [0], [1], [0, 0, 1, 1], [], []>} : vector<16x32xf32>, vector<32x32xf32>, vector<16x32xf32> -> vector<16x32xf32>
    %395 = vector.broadcast %14 : vector<1x32xf32> to vector<16x32xf32>
    %396 = arith.addf %394, %395 : vector<16x32xf32>
    %cst_126 = arith.constant 0.000000e+00 : f32
    %397 = vector.broadcast %cst_126 : f32 to vector<16x32xf32>
    %398 = arith.maximumf %396, %397 : vector<16x32xf32>
    %399 = vector.broadcast %15 : vector<1x32xf32> to vector<16x32xf32>
    %400 = arith.mulf %398, %399 : vector<16x32xf32>
    %cst_127 = arith.constant dense<0.000000e+00> : vector<16xf32>
    %401 = vector.multi_reduction <add>, %400, %cst_127 [1] : vector<16x32xf32> to vector<16xf32>
    %402 = vector.shape_cast %401 : vector<16xf32> to vector<16x1xf32>
    %403 = vector.extract_strided_slice %16 {offsets = [0, 0], sizes = [1, 1], strides = [1, 1]} : vector<1x32xf32> to vector<1x1xf32>
    %404 = vector.broadcast %403 : vector<1x1xf32> to vector<16x1xf32>
    %405 = arith.addf %402, %404 : vector<16x1xf32>
    %cst_128 = arith.constant dense<0.000000e+00> : vector<8x1xf32>
    %406 = tpu.matmul %4, %405, %cst_128 {dimension_numbers = #tpu.dot_dimension_numbers<[1], [0], [0], [1], [0, 0, 1, 1], [], []>} : vector<8x16xf32>, vector<16x1xf32>, vector<8x1xf32> -> vector<8x1xf32>
    %407 = vector.broadcast %406 : vector<8x1xf32> to vector<8x32xf32>
    %408 = vector.broadcast %23 : vector<1x32xf32> to vector<8x32xf32>
    %409 = arith.mulf %407, %408 : vector<8x32xf32>
    %410 = arith.addf %80, %409 : vector<8x32xf32>
    %411 = vector.broadcast %352 : vector<8x1xf32> to vector<8x32xf32>
    %412 = vector.broadcast %24 : vector<1x32xf32> to vector<8x32xf32>
    %413 = arith.mulf %411, %412 : vector<8x32xf32>
    %414 = arith.addf %410, %413 : vector<8x32xf32>
    %cst_129 = arith.constant 0.000000e+00 : f32
    %415 = vector.broadcast %cst_129 : f32 to vector<8x32xf32>
    %416 = arith.maximumf %414, %415 : vector<8x32xf32>
    %cst_130 = arith.constant dense<0.000000e+00> : vector<8x32xf32>
    %417 = tpu.matmul %416, %26, %cst_130 {dimension_numbers = #tpu.dot_dimension_numbers<[1], [0], [0], [1], [0, 0, 1, 1], [], []>} : vector<8x32xf32>, vector<32x32xf32>, vector<8x32xf32> -> vector<8x32xf32>
    %418 = vector.broadcast %27 : vector<1x32xf32> to vector<8x32xf32>
    %419 = arith.addf %417, %418 : vector<8x32xf32>
    %cst_131 = arith.constant 0.000000e+00 : f32
    %420 = vector.broadcast %cst_131 : f32 to vector<8x32xf32>
    %421 = arith.maximumf %419, %420 : vector<8x32xf32>
    %422 = vector.broadcast %28 : vector<1x32xf32> to vector<8x32xf32>
    %423 = arith.mulf %421, %422 : vector<8x32xf32>
    %cst_132 = arith.constant dense<0.000000e+00> : vector<8xf32>
    %424 = vector.multi_reduction <add>, %423, %cst_132 [1] : vector<8x32xf32> to vector<8xf32>
    %425 = vector.shape_cast %424 : vector<8xf32> to vector<8x1xf32>
    %426 = vector.extract_strided_slice %29 {offsets = [0, 0], sizes = [1, 1], strides = [1, 1]} : vector<1x32xf32> to vector<1x1xf32>
    %427 = vector.broadcast %426 : vector<1x1xf32> to vector<8x1xf32>
    %428 = arith.addf %425, %427 : vector<8x1xf32>
    %cst_133 = arith.constant dense<0.000000e+00> : vector<16x1xf32>
    %429 = tpu.matmul %3, %428, %cst_133 {dimension_numbers = #tpu.dot_dimension_numbers<[1], [0], [0], [1], [0, 0, 1, 1], [], []>} : vector<16x8xf32>, vector<8x1xf32>, vector<16x1xf32> -> vector<16x1xf32>
    %430 = vector.broadcast %429 : vector<16x1xf32> to vector<16x32xf32>
    %431 = vector.broadcast %17 : vector<1x32xf32> to vector<16x32xf32>
    %432 = arith.mulf %430, %431 : vector<16x32xf32>
    %433 = arith.addf %76, %432 : vector<16x32xf32>
    %cst_134 = arith.constant 0.000000e+00 : f32
    %434 = vector.broadcast %cst_134 : f32 to vector<16x32xf32>
    %435 = arith.maximumf %433, %434 : vector<16x32xf32>
    %cst_135 = arith.constant dense<0.000000e+00> : vector<16x32xf32>
    %436 = tpu.matmul %435, %19, %cst_135 {dimension_numbers = #tpu.dot_dimension_numbers<[1], [0], [0], [1], [0, 0, 1, 1], [], []>} : vector<16x32xf32>, vector<32x32xf32>, vector<16x32xf32> -> vector<16x32xf32>
    %437 = vector.broadcast %20 : vector<1x32xf32> to vector<16x32xf32>
    %438 = arith.addf %436, %437 : vector<16x32xf32>
    %cst_136 = arith.constant 0.000000e+00 : f32
    %439 = vector.broadcast %cst_136 : f32 to vector<16x32xf32>
    %440 = arith.maximumf %438, %439 : vector<16x32xf32>
    %441 = vector.broadcast %21 : vector<1x32xf32> to vector<16x32xf32>
    %442 = arith.mulf %440, %441 : vector<16x32xf32>
    %cst_137 = arith.constant dense<0.000000e+00> : vector<16xf32>
    %443 = vector.multi_reduction <add>, %442, %cst_137 [1] : vector<16x32xf32> to vector<16xf32>
    %444 = vector.shape_cast %443 : vector<16xf32> to vector<16x1xf32>
    %445 = vector.extract_strided_slice %22 {offsets = [0, 0], sizes = [1, 1], strides = [1, 1]} : vector<1x32xf32> to vector<1x1xf32>
    %446 = vector.broadcast %445 : vector<1x1xf32> to vector<16x1xf32>
    %447 = arith.addf %444, %446 : vector<16x1xf32>
    %448 = arith.addf %372, %447 : vector<16x1xf32>
    %449 = vector.broadcast %428 : vector<8x1xf32> to vector<8x32xf32>
    %450 = vector.broadcast %30 : vector<1x32xf32> to vector<8x32xf32>
    %451 = arith.mulf %449, %450 : vector<8x32xf32>
    %452 = vector.broadcast %31 : vector<1x32xf32> to vector<8x32xf32>
    %453 = arith.addf %451, %452 : vector<8x32xf32>
    %cst_138 = arith.constant 0.000000e+00 : f32
    %454 = vector.broadcast %cst_138 : f32 to vector<8x32xf32>
    %455 = arith.maximumf %453, %454 : vector<8x32xf32>
    %456 = vector.broadcast %32 : vector<1x32xf32> to vector<8x32xf32>
    %457 = arith.mulf %455, %456 : vector<8x32xf32>
    %cst_139 = arith.constant dense<0.000000e+00> : vector<8xf32>
    %458 = vector.multi_reduction <add>, %457, %cst_139 [1] : vector<8x32xf32> to vector<8xf32>
    %459 = vector.shape_cast %458 : vector<8xf32> to vector<8x1xf32>
    %460 = vector.extract_strided_slice %33 {offsets = [0, 0], sizes = [1, 1], strides = [1, 1]} : vector<1x32xf32> to vector<1x1xf32>
    %461 = vector.broadcast %460 : vector<1x1xf32> to vector<8x1xf32>
    %462 = arith.addf %459, %461 : vector<8x1xf32>
    %463 = arith.addf %387, %462 : vector<8x1xf32>
    %c5_i32 = arith.constant 5 : i32
    %464 = vector.broadcast %429 : vector<16x1xf32> to vector<16x32xf32>
    %465 = vector.broadcast %11 : vector<1x32xf32> to vector<16x32xf32>
    %466 = arith.mulf %464, %465 : vector<16x32xf32>
    %467 = arith.addf %64, %466 : vector<16x32xf32>
    %cst_140 = arith.constant 0.000000e+00 : f32
    %468 = vector.broadcast %cst_140 : f32 to vector<16x32xf32>
    %469 = arith.maximumf %467, %468 : vector<16x32xf32>
    %cst_141 = arith.constant dense<0.000000e+00> : vector<16x32xf32>
    %470 = tpu.matmul %469, %13, %cst_141 {dimension_numbers = #tpu.dot_dimension_numbers<[1], [0], [0], [1], [0, 0, 1, 1], [], []>} : vector<16x32xf32>, vector<32x32xf32>, vector<16x32xf32> -> vector<16x32xf32>
    %471 = vector.broadcast %14 : vector<1x32xf32> to vector<16x32xf32>
    %472 = arith.addf %470, %471 : vector<16x32xf32>
    %cst_142 = arith.constant 0.000000e+00 : f32
    %473 = vector.broadcast %cst_142 : f32 to vector<16x32xf32>
    %474 = arith.maximumf %472, %473 : vector<16x32xf32>
    %475 = vector.broadcast %15 : vector<1x32xf32> to vector<16x32xf32>
    %476 = arith.mulf %474, %475 : vector<16x32xf32>
    %cst_143 = arith.constant dense<0.000000e+00> : vector<16xf32>
    %477 = vector.multi_reduction <add>, %476, %cst_143 [1] : vector<16x32xf32> to vector<16xf32>
    %478 = vector.shape_cast %477 : vector<16xf32> to vector<16x1xf32>
    %479 = vector.extract_strided_slice %16 {offsets = [0, 0], sizes = [1, 1], strides = [1, 1]} : vector<1x32xf32> to vector<1x1xf32>
    %480 = vector.broadcast %479 : vector<1x1xf32> to vector<16x1xf32>
    %481 = arith.addf %478, %480 : vector<16x1xf32>
    %cst_144 = arith.constant dense<0.000000e+00> : vector<8x1xf32>
    %482 = tpu.matmul %4, %481, %cst_144 {dimension_numbers = #tpu.dot_dimension_numbers<[1], [0], [0], [1], [0, 0, 1, 1], [], []>} : vector<8x16xf32>, vector<16x1xf32>, vector<8x1xf32> -> vector<8x1xf32>
    %483 = vector.broadcast %482 : vector<8x1xf32> to vector<8x32xf32>
    %484 = vector.broadcast %23 : vector<1x32xf32> to vector<8x32xf32>
    %485 = arith.mulf %483, %484 : vector<8x32xf32>
    %486 = arith.addf %80, %485 : vector<8x32xf32>
    %487 = vector.broadcast %428 : vector<8x1xf32> to vector<8x32xf32>
    %488 = vector.broadcast %24 : vector<1x32xf32> to vector<8x32xf32>
    %489 = arith.mulf %487, %488 : vector<8x32xf32>
    %490 = arith.addf %486, %489 : vector<8x32xf32>
    %cst_145 = arith.constant 0.000000e+00 : f32
    %491 = vector.broadcast %cst_145 : f32 to vector<8x32xf32>
    %492 = arith.maximumf %490, %491 : vector<8x32xf32>
    %cst_146 = arith.constant dense<0.000000e+00> : vector<8x32xf32>
    %493 = tpu.matmul %492, %26, %cst_146 {dimension_numbers = #tpu.dot_dimension_numbers<[1], [0], [0], [1], [0, 0, 1, 1], [], []>} : vector<8x32xf32>, vector<32x32xf32>, vector<8x32xf32> -> vector<8x32xf32>
    %494 = vector.broadcast %27 : vector<1x32xf32> to vector<8x32xf32>
    %495 = arith.addf %493, %494 : vector<8x32xf32>
    %cst_147 = arith.constant 0.000000e+00 : f32
    %496 = vector.broadcast %cst_147 : f32 to vector<8x32xf32>
    %497 = arith.maximumf %495, %496 : vector<8x32xf32>
    %498 = vector.broadcast %28 : vector<1x32xf32> to vector<8x32xf32>
    %499 = arith.mulf %497, %498 : vector<8x32xf32>
    %cst_148 = arith.constant dense<0.000000e+00> : vector<8xf32>
    %500 = vector.multi_reduction <add>, %499, %cst_148 [1] : vector<8x32xf32> to vector<8xf32>
    %501 = vector.shape_cast %500 : vector<8xf32> to vector<8x1xf32>
    %502 = vector.extract_strided_slice %29 {offsets = [0, 0], sizes = [1, 1], strides = [1, 1]} : vector<1x32xf32> to vector<1x1xf32>
    %503 = vector.broadcast %502 : vector<1x1xf32> to vector<8x1xf32>
    %504 = arith.addf %501, %503 : vector<8x1xf32>
    %cst_149 = arith.constant dense<0.000000e+00> : vector<16x1xf32>
    %505 = tpu.matmul %3, %504, %cst_149 {dimension_numbers = #tpu.dot_dimension_numbers<[1], [0], [0], [1], [0, 0, 1, 1], [], []>} : vector<16x8xf32>, vector<8x1xf32>, vector<16x1xf32> -> vector<16x1xf32>
    %506 = vector.broadcast %505 : vector<16x1xf32> to vector<16x32xf32>
    %507 = vector.broadcast %17 : vector<1x32xf32> to vector<16x32xf32>
    %508 = arith.mulf %506, %507 : vector<16x32xf32>
    %509 = arith.addf %76, %508 : vector<16x32xf32>
    %cst_150 = arith.constant 0.000000e+00 : f32
    %510 = vector.broadcast %cst_150 : f32 to vector<16x32xf32>
    %511 = arith.maximumf %509, %510 : vector<16x32xf32>
    %cst_151 = arith.constant dense<0.000000e+00> : vector<16x32xf32>
    %512 = tpu.matmul %511, %19, %cst_151 {dimension_numbers = #tpu.dot_dimension_numbers<[1], [0], [0], [1], [0, 0, 1, 1], [], []>} : vector<16x32xf32>, vector<32x32xf32>, vector<16x32xf32> -> vector<16x32xf32>
    %513 = vector.broadcast %20 : vector<1x32xf32> to vector<16x32xf32>
    %514 = arith.addf %512, %513 : vector<16x32xf32>
    %cst_152 = arith.constant 0.000000e+00 : f32
    %515 = vector.broadcast %cst_152 : f32 to vector<16x32xf32>
    %516 = arith.maximumf %514, %515 : vector<16x32xf32>
    %517 = vector.broadcast %21 : vector<1x32xf32> to vector<16x32xf32>
    %518 = arith.mulf %516, %517 : vector<16x32xf32>
    %cst_153 = arith.constant dense<0.000000e+00> : vector<16xf32>
    %519 = vector.multi_reduction <add>, %518, %cst_153 [1] : vector<16x32xf32> to vector<16xf32>
    %520 = vector.shape_cast %519 : vector<16xf32> to vector<16x1xf32>
    %521 = vector.extract_strided_slice %22 {offsets = [0, 0], sizes = [1, 1], strides = [1, 1]} : vector<1x32xf32> to vector<1x1xf32>
    %522 = vector.broadcast %521 : vector<1x1xf32> to vector<16x1xf32>
    %523 = arith.addf %520, %522 : vector<16x1xf32>
    %524 = arith.addf %448, %523 : vector<16x1xf32>
    %525 = vector.broadcast %504 : vector<8x1xf32> to vector<8x32xf32>
    %526 = vector.broadcast %30 : vector<1x32xf32> to vector<8x32xf32>
    %527 = arith.mulf %525, %526 : vector<8x32xf32>
    %528 = vector.broadcast %31 : vector<1x32xf32> to vector<8x32xf32>
    %529 = arith.addf %527, %528 : vector<8x32xf32>
    %cst_154 = arith.constant 0.000000e+00 : f32
    %530 = vector.broadcast %cst_154 : f32 to vector<8x32xf32>
    %531 = arith.maximumf %529, %530 : vector<8x32xf32>
    %532 = vector.broadcast %32 : vector<1x32xf32> to vector<8x32xf32>
    %533 = arith.mulf %531, %532 : vector<8x32xf32>
    %cst_155 = arith.constant dense<0.000000e+00> : vector<8xf32>
    %534 = vector.multi_reduction <add>, %533, %cst_155 [1] : vector<8x32xf32> to vector<8xf32>
    %535 = vector.shape_cast %534 : vector<8xf32> to vector<8x1xf32>
    %536 = vector.extract_strided_slice %33 {offsets = [0, 0], sizes = [1, 1], strides = [1, 1]} : vector<1x32xf32> to vector<1x1xf32>
    %537 = vector.broadcast %536 : vector<1x1xf32> to vector<8x1xf32>
    %538 = arith.addf %535, %537 : vector<8x1xf32>
    %539 = arith.addf %463, %538 : vector<8x1xf32>
    %c6_i32 = arith.constant 6 : i32
    %540 = vector.broadcast %505 : vector<16x1xf32> to vector<16x32xf32>
    %541 = vector.broadcast %11 : vector<1x32xf32> to vector<16x32xf32>
    %542 = arith.mulf %540, %541 : vector<16x32xf32>
    %543 = arith.addf %64, %542 : vector<16x32xf32>
    %cst_156 = arith.constant 0.000000e+00 : f32
    %544 = vector.broadcast %cst_156 : f32 to vector<16x32xf32>
    %545 = arith.maximumf %543, %544 : vector<16x32xf32>
    %cst_157 = arith.constant dense<0.000000e+00> : vector<16x32xf32>
    %546 = tpu.matmul %545, %13, %cst_157 {dimension_numbers = #tpu.dot_dimension_numbers<[1], [0], [0], [1], [0, 0, 1, 1], [], []>} : vector<16x32xf32>, vector<32x32xf32>, vector<16x32xf32> -> vector<16x32xf32>
    %547 = vector.broadcast %14 : vector<1x32xf32> to vector<16x32xf32>
    %548 = arith.addf %546, %547 : vector<16x32xf32>
    %cst_158 = arith.constant 0.000000e+00 : f32
    %549 = vector.broadcast %cst_158 : f32 to vector<16x32xf32>
    %550 = arith.maximumf %548, %549 : vector<16x32xf32>
    %551 = vector.broadcast %15 : vector<1x32xf32> to vector<16x32xf32>
    %552 = arith.mulf %550, %551 : vector<16x32xf32>
    %cst_159 = arith.constant dense<0.000000e+00> : vector<16xf32>
    %553 = vector.multi_reduction <add>, %552, %cst_159 [1] : vector<16x32xf32> to vector<16xf32>
    %554 = vector.shape_cast %553 : vector<16xf32> to vector<16x1xf32>
    %555 = vector.extract_strided_slice %16 {offsets = [0, 0], sizes = [1, 1], strides = [1, 1]} : vector<1x32xf32> to vector<1x1xf32>
    %556 = vector.broadcast %555 : vector<1x1xf32> to vector<16x1xf32>
    %557 = arith.addf %554, %556 : vector<16x1xf32>
    %cst_160 = arith.constant dense<0.000000e+00> : vector<8x1xf32>
    %558 = tpu.matmul %4, %557, %cst_160 {dimension_numbers = #tpu.dot_dimension_numbers<[1], [0], [0], [1], [0, 0, 1, 1], [], []>} : vector<8x16xf32>, vector<16x1xf32>, vector<8x1xf32> -> vector<8x1xf32>
    %559 = vector.broadcast %558 : vector<8x1xf32> to vector<8x32xf32>
    %560 = vector.broadcast %23 : vector<1x32xf32> to vector<8x32xf32>
    %561 = arith.mulf %559, %560 : vector<8x32xf32>
    %562 = arith.addf %80, %561 : vector<8x32xf32>
    %563 = vector.broadcast %504 : vector<8x1xf32> to vector<8x32xf32>
    %564 = vector.broadcast %24 : vector<1x32xf32> to vector<8x32xf32>
    %565 = arith.mulf %563, %564 : vector<8x32xf32>
    %566 = arith.addf %562, %565 : vector<8x32xf32>
    %cst_161 = arith.constant 0.000000e+00 : f32
    %567 = vector.broadcast %cst_161 : f32 to vector<8x32xf32>
    %568 = arith.maximumf %566, %567 : vector<8x32xf32>
    %cst_162 = arith.constant dense<0.000000e+00> : vector<8x32xf32>
    %569 = tpu.matmul %568, %26, %cst_162 {dimension_numbers = #tpu.dot_dimension_numbers<[1], [0], [0], [1], [0, 0, 1, 1], [], []>} : vector<8x32xf32>, vector<32x32xf32>, vector<8x32xf32> -> vector<8x32xf32>
    %570 = vector.broadcast %27 : vector<1x32xf32> to vector<8x32xf32>
    %571 = arith.addf %569, %570 : vector<8x32xf32>
    %cst_163 = arith.constant 0.000000e+00 : f32
    %572 = vector.broadcast %cst_163 : f32 to vector<8x32xf32>
    %573 = arith.maximumf %571, %572 : vector<8x32xf32>
    %574 = vector.broadcast %28 : vector<1x32xf32> to vector<8x32xf32>
    %575 = arith.mulf %573, %574 : vector<8x32xf32>
    %cst_164 = arith.constant dense<0.000000e+00> : vector<8xf32>
    %576 = vector.multi_reduction <add>, %575, %cst_164 [1] : vector<8x32xf32> to vector<8xf32>
    %577 = vector.shape_cast %576 : vector<8xf32> to vector<8x1xf32>
    %578 = vector.extract_strided_slice %29 {offsets = [0, 0], sizes = [1, 1], strides = [1, 1]} : vector<1x32xf32> to vector<1x1xf32>
    %579 = vector.broadcast %578 : vector<1x1xf32> to vector<8x1xf32>
    %580 = arith.addf %577, %579 : vector<8x1xf32>
    %cst_165 = arith.constant dense<0.000000e+00> : vector<16x1xf32>
    %581 = tpu.matmul %3, %580, %cst_165 {dimension_numbers = #tpu.dot_dimension_numbers<[1], [0], [0], [1], [0, 0, 1, 1], [], []>} : vector<16x8xf32>, vector<8x1xf32>, vector<16x1xf32> -> vector<16x1xf32>
    %582 = vector.broadcast %581 : vector<16x1xf32> to vector<16x32xf32>
    %583 = vector.broadcast %17 : vector<1x32xf32> to vector<16x32xf32>
    %584 = arith.mulf %582, %583 : vector<16x32xf32>
    %585 = arith.addf %76, %584 : vector<16x32xf32>
    %cst_166 = arith.constant 0.000000e+00 : f32
    %586 = vector.broadcast %cst_166 : f32 to vector<16x32xf32>
    %587 = arith.maximumf %585, %586 : vector<16x32xf32>
    %cst_167 = arith.constant dense<0.000000e+00> : vector<16x32xf32>
    %588 = tpu.matmul %587, %19, %cst_167 {dimension_numbers = #tpu.dot_dimension_numbers<[1], [0], [0], [1], [0, 0, 1, 1], [], []>} : vector<16x32xf32>, vector<32x32xf32>, vector<16x32xf32> -> vector<16x32xf32>
    %589 = vector.broadcast %20 : vector<1x32xf32> to vector<16x32xf32>
    %590 = arith.addf %588, %589 : vector<16x32xf32>
    %cst_168 = arith.constant 0.000000e+00 : f32
    %591 = vector.broadcast %cst_168 : f32 to vector<16x32xf32>
    %592 = arith.maximumf %590, %591 : vector<16x32xf32>
    %593 = vector.broadcast %21 : vector<1x32xf32> to vector<16x32xf32>
    %594 = arith.mulf %592, %593 : vector<16x32xf32>
    %cst_169 = arith.constant dense<0.000000e+00> : vector<16xf32>
    %595 = vector.multi_reduction <add>, %594, %cst_169 [1] : vector<16x32xf32> to vector<16xf32>
    %596 = vector.shape_cast %595 : vector<16xf32> to vector<16x1xf32>
    %597 = vector.extract_strided_slice %22 {offsets = [0, 0], sizes = [1, 1], strides = [1, 1]} : vector<1x32xf32> to vector<1x1xf32>
    %598 = vector.broadcast %597 : vector<1x1xf32> to vector<16x1xf32>
    %599 = arith.addf %596, %598 : vector<16x1xf32>
    %600 = arith.addf %524, %599 : vector<16x1xf32>
    %601 = vector.broadcast %580 : vector<8x1xf32> to vector<8x32xf32>
    %602 = vector.broadcast %30 : vector<1x32xf32> to vector<8x32xf32>
    %603 = arith.mulf %601, %602 : vector<8x32xf32>
    %604 = vector.broadcast %31 : vector<1x32xf32> to vector<8x32xf32>
    %605 = arith.addf %603, %604 : vector<8x32xf32>
    %cst_170 = arith.constant 0.000000e+00 : f32
    %606 = vector.broadcast %cst_170 : f32 to vector<8x32xf32>
    %607 = arith.maximumf %605, %606 : vector<8x32xf32>
    %608 = vector.broadcast %32 : vector<1x32xf32> to vector<8x32xf32>
    %609 = arith.mulf %607, %608 : vector<8x32xf32>
    %cst_171 = arith.constant dense<0.000000e+00> : vector<8xf32>
    %610 = vector.multi_reduction <add>, %609, %cst_171 [1] : vector<8x32xf32> to vector<8xf32>
    %611 = vector.shape_cast %610 : vector<8xf32> to vector<8x1xf32>
    %612 = vector.extract_strided_slice %33 {offsets = [0, 0], sizes = [1, 1], strides = [1, 1]} : vector<1x32xf32> to vector<1x1xf32>
    %613 = vector.broadcast %612 : vector<1x1xf32> to vector<8x1xf32>
    %614 = arith.addf %611, %613 : vector<8x1xf32>
    %615 = arith.addf %539, %614 : vector<8x1xf32>
    %c7_i32 = arith.constant 7 : i32
    %616 = vector.broadcast %581 : vector<16x1xf32> to vector<16x32xf32>
    %617 = vector.broadcast %11 : vector<1x32xf32> to vector<16x32xf32>
    %618 = arith.mulf %616, %617 : vector<16x32xf32>
    %619 = arith.addf %64, %618 : vector<16x32xf32>
    %cst_172 = arith.constant 0.000000e+00 : f32
    %620 = vector.broadcast %cst_172 : f32 to vector<16x32xf32>
    %621 = arith.maximumf %619, %620 : vector<16x32xf32>
    %cst_173 = arith.constant dense<0.000000e+00> : vector<16x32xf32>
    %622 = tpu.matmul %621, %13, %cst_173 {dimension_numbers = #tpu.dot_dimension_numbers<[1], [0], [0], [1], [0, 0, 1, 1], [], []>} : vector<16x32xf32>, vector<32x32xf32>, vector<16x32xf32> -> vector<16x32xf32>
    %623 = vector.broadcast %14 : vector<1x32xf32> to vector<16x32xf32>
    %624 = arith.addf %622, %623 : vector<16x32xf32>
    %cst_174 = arith.constant 0.000000e+00 : f32
    %625 = vector.broadcast %cst_174 : f32 to vector<16x32xf32>
    %626 = arith.maximumf %624, %625 : vector<16x32xf32>
    %627 = vector.broadcast %15 : vector<1x32xf32> to vector<16x32xf32>
    %628 = arith.mulf %626, %627 : vector<16x32xf32>
    %cst_175 = arith.constant dense<0.000000e+00> : vector<16xf32>
    %629 = vector.multi_reduction <add>, %628, %cst_175 [1] : vector<16x32xf32> to vector<16xf32>
    %630 = vector.shape_cast %629 : vector<16xf32> to vector<16x1xf32>
    %631 = vector.extract_strided_slice %16 {offsets = [0, 0], sizes = [1, 1], strides = [1, 1]} : vector<1x32xf32> to vector<1x1xf32>
    %632 = vector.broadcast %631 : vector<1x1xf32> to vector<16x1xf32>
    %633 = arith.addf %630, %632 : vector<16x1xf32>
    %cst_176 = arith.constant dense<0.000000e+00> : vector<8x1xf32>
    %634 = tpu.matmul %4, %633, %cst_176 {dimension_numbers = #tpu.dot_dimension_numbers<[1], [0], [0], [1], [0, 0, 1, 1], [], []>} : vector<8x16xf32>, vector<16x1xf32>, vector<8x1xf32> -> vector<8x1xf32>
    %635 = vector.broadcast %634 : vector<8x1xf32> to vector<8x32xf32>
    %636 = vector.broadcast %23 : vector<1x32xf32> to vector<8x32xf32>
    %637 = arith.mulf %635, %636 : vector<8x32xf32>
    %638 = arith.addf %80, %637 : vector<8x32xf32>
    %639 = vector.broadcast %580 : vector<8x1xf32> to vector<8x32xf32>
    %640 = vector.broadcast %24 : vector<1x32xf32> to vector<8x32xf32>
    %641 = arith.mulf %639, %640 : vector<8x32xf32>
    %642 = arith.addf %638, %641 : vector<8x32xf32>
    %cst_177 = arith.constant 0.000000e+00 : f32
    %643 = vector.broadcast %cst_177 : f32 to vector<8x32xf32>
    %644 = arith.maximumf %642, %643 : vector<8x32xf32>
    %cst_178 = arith.constant dense<0.000000e+00> : vector<8x32xf32>
    %645 = tpu.matmul %644, %26, %cst_178 {dimension_numbers = #tpu.dot_dimension_numbers<[1], [0], [0], [1], [0, 0, 1, 1], [], []>} : vector<8x32xf32>, vector<32x32xf32>, vector<8x32xf32> -> vector<8x32xf32>
    %646 = vector.broadcast %27 : vector<1x32xf32> to vector<8x32xf32>
    %647 = arith.addf %645, %646 : vector<8x32xf32>
    %cst_179 = arith.constant 0.000000e+00 : f32
    %648 = vector.broadcast %cst_179 : f32 to vector<8x32xf32>
    %649 = arith.maximumf %647, %648 : vector<8x32xf32>
    %650 = vector.broadcast %28 : vector<1x32xf32> to vector<8x32xf32>
    %651 = arith.mulf %649, %650 : vector<8x32xf32>
    %cst_180 = arith.constant dense<0.000000e+00> : vector<8xf32>
    %652 = vector.multi_reduction <add>, %651, %cst_180 [1] : vector<8x32xf32> to vector<8xf32>
    %653 = vector.shape_cast %652 : vector<8xf32> to vector<8x1xf32>
    %654 = vector.extract_strided_slice %29 {offsets = [0, 0], sizes = [1, 1], strides = [1, 1]} : vector<1x32xf32> to vector<1x1xf32>
    %655 = vector.broadcast %654 : vector<1x1xf32> to vector<8x1xf32>
    %656 = arith.addf %653, %655 : vector<8x1xf32>
    %cst_181 = arith.constant dense<0.000000e+00> : vector<16x1xf32>
    %657 = tpu.matmul %3, %656, %cst_181 {dimension_numbers = #tpu.dot_dimension_numbers<[1], [0], [0], [1], [0, 0, 1, 1], [], []>} : vector<16x8xf32>, vector<8x1xf32>, vector<16x1xf32> -> vector<16x1xf32>
    %658 = vector.broadcast %657 : vector<16x1xf32> to vector<16x32xf32>
    %659 = vector.broadcast %17 : vector<1x32xf32> to vector<16x32xf32>
    %660 = arith.mulf %658, %659 : vector<16x32xf32>
    %661 = arith.addf %76, %660 : vector<16x32xf32>
    %cst_182 = arith.constant 0.000000e+00 : f32
    %662 = vector.broadcast %cst_182 : f32 to vector<16x32xf32>
    %663 = arith.maximumf %661, %662 : vector<16x32xf32>
    %cst_183 = arith.constant dense<0.000000e+00> : vector<16x32xf32>
    %664 = tpu.matmul %663, %19, %cst_183 {dimension_numbers = #tpu.dot_dimension_numbers<[1], [0], [0], [1], [0, 0, 1, 1], [], []>} : vector<16x32xf32>, vector<32x32xf32>, vector<16x32xf32> -> vector<16x32xf32>
    %665 = vector.broadcast %20 : vector<1x32xf32> to vector<16x32xf32>
    %666 = arith.addf %664, %665 : vector<16x32xf32>
    %cst_184 = arith.constant 0.000000e+00 : f32
    %667 = vector.broadcast %cst_184 : f32 to vector<16x32xf32>
    %668 = arith.maximumf %666, %667 : vector<16x32xf32>
    %669 = vector.broadcast %21 : vector<1x32xf32> to vector<16x32xf32>
    %670 = arith.mulf %668, %669 : vector<16x32xf32>
    %cst_185 = arith.constant dense<0.000000e+00> : vector<16xf32>
    %671 = vector.multi_reduction <add>, %670, %cst_185 [1] : vector<16x32xf32> to vector<16xf32>
    %672 = vector.shape_cast %671 : vector<16xf32> to vector<16x1xf32>
    %673 = vector.extract_strided_slice %22 {offsets = [0, 0], sizes = [1, 1], strides = [1, 1]} : vector<1x32xf32> to vector<1x1xf32>
    %674 = vector.broadcast %673 : vector<1x1xf32> to vector<16x1xf32>
    %675 = arith.addf %672, %674 : vector<16x1xf32>
    %676 = arith.addf %600, %675 : vector<16x1xf32>
    %677 = vector.broadcast %656 : vector<8x1xf32> to vector<8x32xf32>
    %678 = vector.broadcast %30 : vector<1x32xf32> to vector<8x32xf32>
    %679 = arith.mulf %677, %678 : vector<8x32xf32>
    %680 = vector.broadcast %31 : vector<1x32xf32> to vector<8x32xf32>
    %681 = arith.addf %679, %680 : vector<8x32xf32>
    %cst_186 = arith.constant 0.000000e+00 : f32
    %682 = vector.broadcast %cst_186 : f32 to vector<8x32xf32>
    %683 = arith.maximumf %681, %682 : vector<8x32xf32>
    %684 = vector.broadcast %32 : vector<1x32xf32> to vector<8x32xf32>
    %685 = arith.mulf %683, %684 : vector<8x32xf32>
    %cst_187 = arith.constant dense<0.000000e+00> : vector<8xf32>
    %686 = vector.multi_reduction <add>, %685, %cst_187 [1] : vector<8x32xf32> to vector<8xf32>
    %687 = vector.shape_cast %686 : vector<8xf32> to vector<8x1xf32>
    %688 = vector.extract_strided_slice %33 {offsets = [0, 0], sizes = [1, 1], strides = [1, 1]} : vector<1x32xf32> to vector<1x1xf32>
    %689 = vector.broadcast %688 : vector<1x1xf32> to vector<8x1xf32>
    %690 = arith.addf %687, %689 : vector<8x1xf32>
    %691 = arith.addf %615, %690 : vector<8x1xf32>
    %c8_i32 = arith.constant 8 : i32
    %692 = vector.broadcast %657 : vector<16x1xf32> to vector<16x32xf32>
    %693 = vector.broadcast %11 : vector<1x32xf32> to vector<16x32xf32>
    %694 = arith.mulf %692, %693 : vector<16x32xf32>
    %695 = arith.addf %64, %694 : vector<16x32xf32>
    %cst_188 = arith.constant 0.000000e+00 : f32
    %696 = vector.broadcast %cst_188 : f32 to vector<16x32xf32>
    %697 = arith.maximumf %695, %696 : vector<16x32xf32>
    %cst_189 = arith.constant dense<0.000000e+00> : vector<16x32xf32>
    %698 = tpu.matmul %697, %13, %cst_189 {dimension_numbers = #tpu.dot_dimension_numbers<[1], [0], [0], [1], [0, 0, 1, 1], [], []>} : vector<16x32xf32>, vector<32x32xf32>, vector<16x32xf32> -> vector<16x32xf32>
    %699 = vector.broadcast %14 : vector<1x32xf32> to vector<16x32xf32>
    %700 = arith.addf %698, %699 : vector<16x32xf32>
    %cst_190 = arith.constant 0.000000e+00 : f32
    %701 = vector.broadcast %cst_190 : f32 to vector<16x32xf32>
    %702 = arith.maximumf %700, %701 : vector<16x32xf32>
    %703 = vector.broadcast %15 : vector<1x32xf32> to vector<16x32xf32>
    %704 = arith.mulf %702, %703 : vector<16x32xf32>
    %cst_191 = arith.constant dense<0.000000e+00> : vector<16xf32>
    %705 = vector.multi_reduction <add>, %704, %cst_191 [1] : vector<16x32xf32> to vector<16xf32>
    %706 = vector.shape_cast %705 : vector<16xf32> to vector<16x1xf32>
    %707 = vector.extract_strided_slice %16 {offsets = [0, 0], sizes = [1, 1], strides = [1, 1]} : vector<1x32xf32> to vector<1x1xf32>
    %708 = vector.broadcast %707 : vector<1x1xf32> to vector<16x1xf32>
    %709 = arith.addf %706, %708 : vector<16x1xf32>
    %cst_192 = arith.constant dense<0.000000e+00> : vector<8x1xf32>
    %710 = tpu.matmul %4, %709, %cst_192 {dimension_numbers = #tpu.dot_dimension_numbers<[1], [0], [0], [1], [0, 0, 1, 1], [], []>} : vector<8x16xf32>, vector<16x1xf32>, vector<8x1xf32> -> vector<8x1xf32>
    %711 = vector.broadcast %710 : vector<8x1xf32> to vector<8x32xf32>
    %712 = vector.broadcast %23 : vector<1x32xf32> to vector<8x32xf32>
    %713 = arith.mulf %711, %712 : vector<8x32xf32>
    %714 = arith.addf %80, %713 : vector<8x32xf32>
    %715 = vector.broadcast %656 : vector<8x1xf32> to vector<8x32xf32>
    %716 = vector.broadcast %24 : vector<1x32xf32> to vector<8x32xf32>
    %717 = arith.mulf %715, %716 : vector<8x32xf32>
    %718 = arith.addf %714, %717 : vector<8x32xf32>
    %cst_193 = arith.constant 0.000000e+00 : f32
    %719 = vector.broadcast %cst_193 : f32 to vector<8x32xf32>
    %720 = arith.maximumf %718, %719 : vector<8x32xf32>
    %cst_194 = arith.constant dense<0.000000e+00> : vector<8x32xf32>
    %721 = tpu.matmul %720, %26, %cst_194 {dimension_numbers = #tpu.dot_dimension_numbers<[1], [0], [0], [1], [0, 0, 1, 1], [], []>} : vector<8x32xf32>, vector<32x32xf32>, vector<8x32xf32> -> vector<8x32xf32>
    %722 = vector.broadcast %27 : vector<1x32xf32> to vector<8x32xf32>
    %723 = arith.addf %721, %722 : vector<8x32xf32>
    %cst_195 = arith.constant 0.000000e+00 : f32
    %724 = vector.broadcast %cst_195 : f32 to vector<8x32xf32>
    %725 = arith.maximumf %723, %724 : vector<8x32xf32>
    %726 = vector.broadcast %28 : vector<1x32xf32> to vector<8x32xf32>
    %727 = arith.mulf %725, %726 : vector<8x32xf32>
    %cst_196 = arith.constant dense<0.000000e+00> : vector<8xf32>
    %728 = vector.multi_reduction <add>, %727, %cst_196 [1] : vector<8x32xf32> to vector<8xf32>
    %729 = vector.shape_cast %728 : vector<8xf32> to vector<8x1xf32>
    %730 = vector.extract_strided_slice %29 {offsets = [0, 0], sizes = [1, 1], strides = [1, 1]} : vector<1x32xf32> to vector<1x1xf32>
    %731 = vector.broadcast %730 : vector<1x1xf32> to vector<8x1xf32>
    %732 = arith.addf %729, %731 : vector<8x1xf32>
    %cst_197 = arith.constant dense<0.000000e+00> : vector<16x1xf32>
    %733 = tpu.matmul %3, %732, %cst_197 {dimension_numbers = #tpu.dot_dimension_numbers<[1], [0], [0], [1], [0, 0, 1, 1], [], []>} : vector<16x8xf32>, vector<8x1xf32>, vector<16x1xf32> -> vector<16x1xf32>
    %734 = vector.broadcast %733 : vector<16x1xf32> to vector<16x32xf32>
    %735 = vector.broadcast %17 : vector<1x32xf32> to vector<16x32xf32>
    %736 = arith.mulf %734, %735 : vector<16x32xf32>
    %737 = arith.addf %76, %736 : vector<16x32xf32>
    %cst_198 = arith.constant 0.000000e+00 : f32
    %738 = vector.broadcast %cst_198 : f32 to vector<16x32xf32>
    %739 = arith.maximumf %737, %738 : vector<16x32xf32>
    %cst_199 = arith.constant dense<0.000000e+00> : vector<16x32xf32>
    %740 = tpu.matmul %739, %19, %cst_199 {dimension_numbers = #tpu.dot_dimension_numbers<[1], [0], [0], [1], [0, 0, 1, 1], [], []>} : vector<16x32xf32>, vector<32x32xf32>, vector<16x32xf32> -> vector<16x32xf32>
    %741 = vector.broadcast %20 : vector<1x32xf32> to vector<16x32xf32>
    %742 = arith.addf %740, %741 : vector<16x32xf32>
    %cst_200 = arith.constant 0.000000e+00 : f32
    %743 = vector.broadcast %cst_200 : f32 to vector<16x32xf32>
    %744 = arith.maximumf %742, %743 : vector<16x32xf32>
    %745 = vector.broadcast %21 : vector<1x32xf32> to vector<16x32xf32>
    %746 = arith.mulf %744, %745 : vector<16x32xf32>
    %cst_201 = arith.constant dense<0.000000e+00> : vector<16xf32>
    %747 = vector.multi_reduction <add>, %746, %cst_201 [1] : vector<16x32xf32> to vector<16xf32>
    %748 = vector.shape_cast %747 : vector<16xf32> to vector<16x1xf32>
    %749 = vector.extract_strided_slice %22 {offsets = [0, 0], sizes = [1, 1], strides = [1, 1]} : vector<1x32xf32> to vector<1x1xf32>
    %750 = vector.broadcast %749 : vector<1x1xf32> to vector<16x1xf32>
    %751 = arith.addf %748, %750 : vector<16x1xf32>
    %752 = arith.addf %676, %751 : vector<16x1xf32>
    %753 = vector.broadcast %732 : vector<8x1xf32> to vector<8x32xf32>
    %754 = vector.broadcast %30 : vector<1x32xf32> to vector<8x32xf32>
    %755 = arith.mulf %753, %754 : vector<8x32xf32>
    %756 = vector.broadcast %31 : vector<1x32xf32> to vector<8x32xf32>
    %757 = arith.addf %755, %756 : vector<8x32xf32>
    %cst_202 = arith.constant 0.000000e+00 : f32
    %758 = vector.broadcast %cst_202 : f32 to vector<8x32xf32>
    %759 = arith.maximumf %757, %758 : vector<8x32xf32>
    %760 = vector.broadcast %32 : vector<1x32xf32> to vector<8x32xf32>
    %761 = arith.mulf %759, %760 : vector<8x32xf32>
    %cst_203 = arith.constant dense<0.000000e+00> : vector<8xf32>
    %762 = vector.multi_reduction <add>, %761, %cst_203 [1] : vector<8x32xf32> to vector<8xf32>
    %763 = vector.shape_cast %762 : vector<8xf32> to vector<8x1xf32>
    %764 = vector.extract_strided_slice %33 {offsets = [0, 0], sizes = [1, 1], strides = [1, 1]} : vector<1x32xf32> to vector<1x1xf32>
    %765 = vector.broadcast %764 : vector<1x1xf32> to vector<8x1xf32>
    %766 = arith.addf %763, %765 : vector<8x1xf32>
    %767 = arith.addf %691, %766 : vector<8x1xf32>
    %c9_i32 = arith.constant 9 : i32
    %768 = vector.broadcast %733 : vector<16x1xf32> to vector<16x32xf32>
    %769 = vector.broadcast %11 : vector<1x32xf32> to vector<16x32xf32>
    %770 = arith.mulf %768, %769 : vector<16x32xf32>
    %771 = arith.addf %64, %770 : vector<16x32xf32>
    %cst_204 = arith.constant 0.000000e+00 : f32
    %772 = vector.broadcast %cst_204 : f32 to vector<16x32xf32>
    %773 = arith.maximumf %771, %772 : vector<16x32xf32>
    %cst_205 = arith.constant dense<0.000000e+00> : vector<16x32xf32>
    %774 = tpu.matmul %773, %13, %cst_205 {dimension_numbers = #tpu.dot_dimension_numbers<[1], [0], [0], [1], [0, 0, 1, 1], [], []>} : vector<16x32xf32>, vector<32x32xf32>, vector<16x32xf32> -> vector<16x32xf32>
    %775 = vector.broadcast %14 : vector<1x32xf32> to vector<16x32xf32>
    %776 = arith.addf %774, %775 : vector<16x32xf32>
    %cst_206 = arith.constant 0.000000e+00 : f32
    %777 = vector.broadcast %cst_206 : f32 to vector<16x32xf32>
    %778 = arith.maximumf %776, %777 : vector<16x32xf32>
    %779 = vector.broadcast %15 : vector<1x32xf32> to vector<16x32xf32>
    %780 = arith.mulf %778, %779 : vector<16x32xf32>
    %cst_207 = arith.constant dense<0.000000e+00> : vector<16xf32>
    %781 = vector.multi_reduction <add>, %780, %cst_207 [1] : vector<16x32xf32> to vector<16xf32>
    %782 = vector.shape_cast %781 : vector<16xf32> to vector<16x1xf32>
    %783 = vector.extract_strided_slice %16 {offsets = [0, 0], sizes = [1, 1], strides = [1, 1]} : vector<1x32xf32> to vector<1x1xf32>
    %784 = vector.broadcast %783 : vector<1x1xf32> to vector<16x1xf32>
    %785 = arith.addf %782, %784 : vector<16x1xf32>
    %cst_208 = arith.constant dense<0.000000e+00> : vector<8x1xf32>
    %786 = tpu.matmul %4, %785, %cst_208 {dimension_numbers = #tpu.dot_dimension_numbers<[1], [0], [0], [1], [0, 0, 1, 1], [], []>} : vector<8x16xf32>, vector<16x1xf32>, vector<8x1xf32> -> vector<8x1xf32>
    %787 = vector.broadcast %786 : vector<8x1xf32> to vector<8x32xf32>
    %788 = vector.broadcast %23 : vector<1x32xf32> to vector<8x32xf32>
    %789 = arith.mulf %787, %788 : vector<8x32xf32>
    %790 = arith.addf %80, %789 : vector<8x32xf32>
    %791 = vector.broadcast %732 : vector<8x1xf32> to vector<8x32xf32>
    %792 = vector.broadcast %24 : vector<1x32xf32> to vector<8x32xf32>
    %793 = arith.mulf %791, %792 : vector<8x32xf32>
    %794 = arith.addf %790, %793 : vector<8x32xf32>
    %cst_209 = arith.constant 0.000000e+00 : f32
    %795 = vector.broadcast %cst_209 : f32 to vector<8x32xf32>
    %796 = arith.maximumf %794, %795 : vector<8x32xf32>
    %cst_210 = arith.constant dense<0.000000e+00> : vector<8x32xf32>
    %797 = tpu.matmul %796, %26, %cst_210 {dimension_numbers = #tpu.dot_dimension_numbers<[1], [0], [0], [1], [0, 0, 1, 1], [], []>} : vector<8x32xf32>, vector<32x32xf32>, vector<8x32xf32> -> vector<8x32xf32>
    %798 = vector.broadcast %27 : vector<1x32xf32> to vector<8x32xf32>
    %799 = arith.addf %797, %798 : vector<8x32xf32>
    %cst_211 = arith.constant 0.000000e+00 : f32
    %800 = vector.broadcast %cst_211 : f32 to vector<8x32xf32>
    %801 = arith.maximumf %799, %800 : vector<8x32xf32>
    %802 = vector.broadcast %28 : vector<1x32xf32> to vector<8x32xf32>
    %803 = arith.mulf %801, %802 : vector<8x32xf32>
    %cst_212 = arith.constant dense<0.000000e+00> : vector<8xf32>
    %804 = vector.multi_reduction <add>, %803, %cst_212 [1] : vector<8x32xf32> to vector<8xf32>
    %805 = vector.shape_cast %804 : vector<8xf32> to vector<8x1xf32>
    %806 = vector.extract_strided_slice %29 {offsets = [0, 0], sizes = [1, 1], strides = [1, 1]} : vector<1x32xf32> to vector<1x1xf32>
    %807 = vector.broadcast %806 : vector<1x1xf32> to vector<8x1xf32>
    %808 = arith.addf %805, %807 : vector<8x1xf32>
    %cst_213 = arith.constant dense<0.000000e+00> : vector<16x1xf32>
    %809 = tpu.matmul %3, %808, %cst_213 {dimension_numbers = #tpu.dot_dimension_numbers<[1], [0], [0], [1], [0, 0, 1, 1], [], []>} : vector<16x8xf32>, vector<8x1xf32>, vector<16x1xf32> -> vector<16x1xf32>
    %810 = vector.broadcast %809 : vector<16x1xf32> to vector<16x32xf32>
    %811 = vector.broadcast %17 : vector<1x32xf32> to vector<16x32xf32>
    %812 = arith.mulf %810, %811 : vector<16x32xf32>
    %813 = arith.addf %76, %812 : vector<16x32xf32>
    %cst_214 = arith.constant 0.000000e+00 : f32
    %814 = vector.broadcast %cst_214 : f32 to vector<16x32xf32>
    %815 = arith.maximumf %813, %814 : vector<16x32xf32>
    %cst_215 = arith.constant dense<0.000000e+00> : vector<16x32xf32>
    %816 = tpu.matmul %815, %19, %cst_215 {dimension_numbers = #tpu.dot_dimension_numbers<[1], [0], [0], [1], [0, 0, 1, 1], [], []>} : vector<16x32xf32>, vector<32x32xf32>, vector<16x32xf32> -> vector<16x32xf32>
    %817 = vector.broadcast %20 : vector<1x32xf32> to vector<16x32xf32>
    %818 = arith.addf %816, %817 : vector<16x32xf32>
    %cst_216 = arith.constant 0.000000e+00 : f32
    %819 = vector.broadcast %cst_216 : f32 to vector<16x32xf32>
    %820 = arith.maximumf %818, %819 : vector<16x32xf32>
    %821 = vector.broadcast %21 : vector<1x32xf32> to vector<16x32xf32>
    %822 = arith.mulf %820, %821 : vector<16x32xf32>
    %cst_217 = arith.constant dense<0.000000e+00> : vector<16xf32>
    %823 = vector.multi_reduction <add>, %822, %cst_217 [1] : vector<16x32xf32> to vector<16xf32>
    %824 = vector.shape_cast %823 : vector<16xf32> to vector<16x1xf32>
    %825 = vector.extract_strided_slice %22 {offsets = [0, 0], sizes = [1, 1], strides = [1, 1]} : vector<1x32xf32> to vector<1x1xf32>
    %826 = vector.broadcast %825 : vector<1x1xf32> to vector<16x1xf32>
    %827 = arith.addf %824, %826 : vector<16x1xf32>
    %828 = arith.addf %752, %827 : vector<16x1xf32>
    %829 = vector.broadcast %808 : vector<8x1xf32> to vector<8x32xf32>
    %830 = vector.broadcast %30 : vector<1x32xf32> to vector<8x32xf32>
    %831 = arith.mulf %829, %830 : vector<8x32xf32>
    %832 = vector.broadcast %31 : vector<1x32xf32> to vector<8x32xf32>
    %833 = arith.addf %831, %832 : vector<8x32xf32>
    %cst_218 = arith.constant 0.000000e+00 : f32
    %834 = vector.broadcast %cst_218 : f32 to vector<8x32xf32>
    %835 = arith.maximumf %833, %834 : vector<8x32xf32>
    %836 = vector.broadcast %32 : vector<1x32xf32> to vector<8x32xf32>
    %837 = arith.mulf %835, %836 : vector<8x32xf32>
    %cst_219 = arith.constant dense<0.000000e+00> : vector<8xf32>
    %838 = vector.multi_reduction <add>, %837, %cst_219 [1] : vector<8x32xf32> to vector<8xf32>
    %839 = vector.shape_cast %838 : vector<8xf32> to vector<8x1xf32>
    %840 = vector.extract_strided_slice %33 {offsets = [0, 0], sizes = [1, 1], strides = [1, 1]} : vector<1x32xf32> to vector<1x1xf32>
    %841 = vector.broadcast %840 : vector<1x1xf32> to vector<8x1xf32>
    %842 = arith.addf %839, %841 : vector<8x1xf32>
    %843 = arith.addf %767, %842 : vector<8x1xf32>
    %c0_220 = arith.constant 0 : index
    %c0_221 = arith.constant 0 : index
    %844 = vector.load %arg6[%c0_220, %c0_221] : memref<8x1xf32, #tpu.memory_space<vmem>>, vector<8x1xf32>
    tpu.vector_store %arg6[%c0_220, %c0_221], %808 {strides = array<i32>} : memref<8x1xf32, #tpu.memory_space<vmem>>, vector<8x1xf32>,
    %c0_222 = arith.constant 0 : index
    %c0_223 = arith.constant 0 : index
    %845 = vector.load %arg7[%c0_222, %c0_223] : memref<16x1xf32, #tpu.memory_space<vmem>>, vector<16x1xf32>
    tpu.vector_store %arg7[%c0_222, %c0_223], %828 {strides = array<i32>} : memref<16x1xf32, #tpu.memory_space<vmem>>, vector<16x1xf32>,
    %c0_224 = arith.constant 0 : index
    %c0_225 = arith.constant 0 : index
    %846 = vector.load %arg8[%c0_224, %c0_225] : memref<8x1xf32, #tpu.memory_space<vmem>>, vector<8x1xf32>
    tpu.vector_store %arg8[%c0_224, %c0_225], %843 {strides = array<i32>} : memref<8x1xf32, #tpu.memory_space<vmem>>, vector<8x1xf32>,
    return
  }
}

</mosaic_0001>

<llo_original>
// kernel: tpu_custom_call.1
$region0: #{tpu_custom_call.1}
  #allocation0 [shape = 'u32[]', space=smem, size = 0x4, offset = 0x4, fixed_abs, tag = 'smem constant byte address 0x4 - core index']
  #allocation1 [shape = 'u32[72,128]{1,0:T(1,128)}', space=vmem, size = 0x9000, scoped, tag = 'internal scratch']
  %s0 = inlined_call_operand.vmem [shape: f32[384,32], index: 0, kind: input, shape index: {}]
  %s1 = inlined_call_operand.vmem [shape: f32[8,4], index: 1, kind: input, shape index: {}]
  %s2 = inlined_call_operand.vmem [shape: f32[16,1], index: 2, kind: input, shape index: {}]
  %s3 = inlined_call_operand.vmem [shape: f32[16,8], index: 3, kind: input, shape index: {}]
  %s4 = inlined_call_operand.vmem [shape: f32[16,8], index: 4, kind: input, shape index: {}]
  %s5 = inlined_call_operand.vmem [shape: f32[8,16], index: 5, kind: input, shape index: {}]
  %s6 = inlined_call_operand.vmem [shape: f32[8,1], index: 6, kind: output, shape index: {0}]
  %s7 = inlined_call_operand.vmem [shape: f32[16,1], index: 7, kind: output, shape index: {1}]
  %s8 = inlined_call_operand.vmem [shape: f32[8,1], index: 8, kind: output, shape index: {2}]
  %9 = xla_tuple %s6, %s7, %s8
  %s10 = sld [smem:[#allocation0]]
  $region50: #{tpu_custom_call.1} parent=0
    _
  %s12 = ssub.s32 1, %s10
  %s13 = scalar_select 0, %s12, %s10
  // Predicated region
  $region2: #{tpu_custom_call.1} parent=0 // pred_check
    _
  $region3: #{tpu_custom_call.1} parent=0 // pred_check_branch
    %15 = sbr.rel (0) target = $region5
  $region4: #{tpu_custom_call.1} parent=0 // pred_region
    _
  $region5: #{tpu_custom_call.1} parent=0 // pred_fallthru
    _
  // Predicated region
  $region6: #{tpu_custom_call.1} parent=0 // pred_check
    _
  $region7: #{tpu_custom_call.1} parent=0 // pred_check_branch
    %17 = sbr.rel (0) target = $region9
  $region8: #{tpu_custom_call.1} parent=0 // pred_region
    _
  $region9: #{tpu_custom_call.1} parent=0 // pred_fallthru
    _
  // Predicated region
  $region10: #{tpu_custom_call.1} parent=0 // pred_check
    _
  $region11: #{tpu_custom_call.1} parent=0 // pred_check_branch
    %19 = sbr.rel (0) target = $region13
  $region12: #{tpu_custom_call.1} parent=0 // pred_region
    _
  $region13: #{tpu_custom_call.1} parent=0 // pred_fallthru
    _
  // Predicated region
  $region14: #{tpu_custom_call.1} parent=0 // pred_check
    _
  $region15: #{tpu_custom_call.1} parent=0 // pred_check_branch
    %21 = sbr.rel (0) target = $region17
  $region16: #{tpu_custom_call.1} parent=0 // pred_region
    _
  $region17: #{tpu_custom_call.1} parent=0 // pred_fallthru
    _
  // Predicated region
  $region18: #{tpu_custom_call.1} parent=0 // pred_check
    _
  $region19: #{tpu_custom_call.1} parent=0 // pred_check_branch
    %23 = sbr.rel (0) target = $region21
  $region20: #{tpu_custom_call.1} parent=0 // pred_region
    _
  $region21: #{tpu_custom_call.1} parent=0 // pred_fallthru
    _
  // Predicated region
  $region22: #{tpu_custom_call.1} parent=0 // pred_check
    _
  $region23: #{tpu_custom_call.1} parent=0 // pred_check_branch
    %25 = sbr.rel (0) target = $region25
  $region24: #{tpu_custom_call.1} parent=0 // pred_region
    _
  $region25: #{tpu_custom_call.1} parent=0 // pred_fallthru
    _
  %v26 = vld [vmem:[%s1] sm:$0xff]
  %v27 = vld [vmem:[%s2] sm:$0xff]
  %v28 = vld [vmem:[%s2 + $0x8] sm:$0xff]
  %v29 = vld [vmem:[%s3] sm:$0xff]
  %v30 = vld [vmem:[%s3 + $0x8] sm:$0xff]
  %v31 = vld [vmem:[%s4] sm:$0xff]
  %v32 = vld [vmem:[%s4 + $0x8] sm:$0xff]
  %v33 = vld [vmem:[%s5] sm:$0xff]
  %v34 = vld [vmem:[%s0] sm:$0xf]
  %v35 = vld [vmem:[%s0 + $0x8] sm:$0x1]
  %v36 = vld [vmem:[%s0 + $0x10] sm:$0xff]
  %v37 = vld [vmem:[%s0 + $0x18] sm:$0xff]
  %v38 = vld [vmem:[%s0 + $0x20] sm:$0xff]
  %v39 = vld [vmem:[%s0 + $0x28] sm:$0xff]
  %v40 = vld [vmem:[%s0 + $0x30] sm:$0x1]
  %v41 = vld [vmem:[%s0 + $0x38] sm:$0x1]
  %v42 = vld [vmem:[%s0 + $0x40] sm:$0x1]
  %v43 = vld [vmem:[%s0 + $0x50] sm:$0x1]
  %v44 = vld [vmem:[%s0 + $0x68] sm:$0x1]
  %v45 = vld [vmem:[%s0 + $0x70] sm:$0xff]
  %v46 = vld [vmem:[%s0 + $0x78] sm:$0xff]
  %v47 = vld [vmem:[%s0 + $0x80] sm:$0xff]
  %v48 = vld [vmem:[%s0 + $0x88] sm:$0xff]
  %v49 = vld [vmem:[%s0 + $0x90] sm:$0x1]
  %v50 = vld [vmem:[%s0 + $0x98] sm:$0x1]
  %v51 = vld [vmem:[%s0 + $0xa0] sm:$0x1]
  %v52 = vld [vmem:[%s0 + $0xb0] sm:$0x1]
  %v53 = vld [vmem:[%s0 + $0xc8] sm:$0x1]
  %v54 = vld [vmem:[%s0 + $0xd0] sm:$0xff]
  %v55 = vld [vmem:[%s0 + $0xd8] sm:$0xff]
  %v56 = vld [vmem:[%s0 + $0xe0] sm:$0xff]
  %v57 = vld [vmem:[%s0 + $0xe8] sm:$0xff]
  %v58 = vld [vmem:[%s0 + $0xf0] sm:$0x1]
  %v59 = vld [vmem:[%s0 + $0xf8] sm:$0x1]
  %v60 = vld [vmem:[%s0 + $0x100] sm:$0x1]
  %v61 = vld [vmem:[%s0 + $0x108] sm:$0x1]
  %v62 = vld [vmem:[%s0 + $0x118] sm:$0x1]
  %v63 = vld [vmem:[%s0 + $0x120] sm:$0x1]
  %v64 = vld [vmem:[%s0 + $0x128] sm:$0xff]
  %v65 = vld [vmem:[%s0 + $0x130] sm:$0xff]
  %v66 = vld [vmem:[%s0 + $0x138] sm:$0xff]
  %v67 = vld [vmem:[%s0 + $0x140] sm:$0xff]
  %v68 = vld [vmem:[%s0 + $0x148] sm:$0x1]
  %v69 = vld [vmem:[%s0 + $0x150] sm:$0x1]
  %v70 = vld [vmem:[%s0 + $0x158] sm:$0x1]
  %v71 = vld [vmem:[%s0 + $0x160] sm:$0x1]
  %v72 = vld [vmem:[%s0 + $0x168] sm:$0x1]
  %v73 = vld [vmem:[%s0 + $0x170] sm:$0x1]
  %v74 = vld [vmem:[%s0 + $0x178] sm:$0x1]
  %v75 = vperm.slane %v35, 0
  %vm76 = vcmask 31744
  %v78 = vsel %vm76, %v26, 0
  %vm80 = vcmask 1043456
  %v82 = vsel %vm80, %v34, 0
  %84 = vmatpush.msra.mxu0 0.0
  %85 = vmatpush.msra.mxu0 0.0
  %86 = vmatpush.msra.mxu0 0.0
  %87 = vmatpush.msra.mxu0 0.0
  %88 = vmatpush.msra.mxu0 0.0
  %89 = vmatpush.msra.mxu0 0.0
  %90 = vmatpush.msra.mxu0 0.0
  %91 = vmatpush.msra.mxu0 0.0
  %92 = vmatpush.msra.mxu0 0.0
  %93 = vmatpush.msra.mxu0 0.0
  %94 = vmatpush.msra.mxu0 0.0
  %95 = vmatpush.msra.mxu0 0.0
  %96 = vmatpush.msra.mxu0 0.0
  %97 = vmatpush.msra.mxu0 0.0
  %98 = vmatpush.msra.mxu0 0.0
  %99 = vmatpush.msra.mxu0 %v82
  %100 = vmatmul.f32.gmra.mxu0 %v78
  %v101 = vpop.f32.mrf.mxu0
  %v102 = vadd.f32 %v75, %v101
  %103 = vdwg.mxu0
  %v104 = vmax.f32 %v102, 0.0
  %v105 = vperm.slane %v40, 0
  %vm106 = vcmask 261120
  %v108 = vsel %vm106, %v104, 0
  %110 = vmatpush.msra.mxu0 0.0
  %111 = vmatpush.msra.mxu0 0.0
  %112 = vmatpush.msra.mxu0 0.0
  %113 = vmatpush.msra.mxu0 0.0
  %114 = vmatpush.msra.mxu0 0.0
  %115 = vmatpush.msra.mxu0 0.0
  %116 = vmatpush.msra.mxu0 0.0
  %117 = vmatpush.msra.mxu0 0.0
  %118 = vmatpush.msra.mxu0 0.0
  %119 = vmatpush.msra.mxu0 0.0
  %120 = vmatpush.msra.mxu0 0.0
  %121 = vmatpush.msra.mxu0 0.0
  %122 = vmatpush.msra.mxu0 %v39
  %123 = vmatpush.msra.mxu0 %v38
  %124 = vmatpush.msra.mxu0 %v37
  %125 = vmatpush.msra.mxu0 %v36
  %126 = vmatmul.f32.gmra.mxu0 %v108
  %v127 = vpop.f32.mrf.mxu0
  %v128 = vadd.f32 %v105, %v127
  %129 = vdwg.mxu0
  %v130 = vmax.f32 %v128, 0.0
  %v131 = vperm.slane %v41, 0
  %v132 = vmul.f32 %v130, %v131
  %v133 = vsel %vm106, %v132, 0.0
  %134 = vadd.xlane.f32.xlu0 %v133
  %v135 = vpop.xlane.xlu0 %134
  %v136 = vperm.slane %v42, 0
  %v137 = vadd.f32 %v135, %v136
  %vm138 = vcmask 64512
  %v140 = vsel %vm138, %v31, 0
  %v143 = vsel %vm138, %v32, 0
  %145 = vmatpush.msra.mxu0 0.0
  %146 = vmatpush.msra.mxu0 0.0
  %147 = vmatpush.msra.mxu0 0.0
  %148 = vmatpush.msra.mxu0 0.0
  %149 = vmatpush.msra.mxu0 0.0
  %150 = vmatpush.msra.mxu0 0.0
  %151 = vmatpush.msra.mxu0 0.0
  %152 = vmatpush.msra.mxu0 0.0
  %153 = vmatpush.msra.mxu0 0.0
  %154 = vmatpush.msra.mxu0 0.0
  %155 = vmatpush.msra.mxu0 0.0
  %156 = vmatpush.msra.mxu0 0.0
  %157 = vmatpush.msra.mxu0 0.0
  %158 = vmatpush.msra.mxu0 0.0
  %159 = vmatpush.msra.mxu0 0.0
  %160 = vmatpush.msra.mxu0 %v26
  %161 = vmatmul.f32.gmra.mxu0 %v140
  %v162 = vpop.f32.mrf.mxu0
  %v163 = vadd.f32 0.0, %v162
  %164 = vmatmul.f32.gmra.mxu0 %v143
  %v165 = vpop.f32.mrf.mxu0
  %v166 = vadd.f32 0.0, %v165
  %167 = vdwg.mxu0
  %v169 = vsel %vm138, %v29, 0
  %v172 = vsel %vm138, %v30, 0
  %174 = vmatpush.msra.mxu0 0.0
  %175 = vmatpush.msra.mxu0 0.0
  %176 = vmatpush.msra.mxu0 0.0
  %177 = vmatpush.msra.mxu0 0.0
  %178 = vmatpush.msra.mxu0 0.0
  %179 = vmatpush.msra.mxu0 0.0
  %180 = vmatpush.msra.mxu0 0.0
  %181 = vmatpush.msra.mxu0 0.0
  %182 = vmatpush.msra.mxu0 0.0
  %183 = vmatpush.msra.mxu0 0.0
  %184 = vmatpush.msra.mxu0 0.0
  %185 = vmatpush.msra.mxu0 0.0
  %186 = vmatpush.msra.mxu0 0.0
  %187 = vmatpush.msra.mxu0 0.0
  %188 = vmatpush.msra.mxu0 0.0
  %189 = vmatpush.msra.mxu0 %v26
  %190 = vmatmul.f32.gmra.mxu0 %v169
  %v191 = vpop.f32.mrf.mxu0
  %v192 = vadd.f32 0.0, %v191
  %193 = vmatmul.f32.gmra.mxu0 %v172
  %v194 = vpop.f32.mrf.mxu0
  %v195 = vadd.f32 0.0, %v194
  %196 = vdwg.mxu0
  %v197 = vld [vmem:[%s0 + $0x48] sm:$0xf]
  %v198 = vld [vmem:[%s0 + $0x58] sm:$0xf]
  %v200 = vsel %vm76, %v192, 0
  %v203 = vsel %vm76, %v195, 0
  %v206 = vsel %vm80, %v198, 0
  %208 = vmatpush.msra.mxu0 0.0
  %209 = vmatpush.msra.mxu0 0.0
  %210 = vmatpush.msra.mxu0 0.0
  %211 = vmatpush.msra.mxu0 0.0
  %212 = vmatpush.msra.mxu0 0.0
  %213 = vmatpush.msra.mxu0 0.0
  %214 = vmatpush.msra.mxu0 0.0
  %215 = vmatpush.msra.mxu0 0.0
  %216 = vmatpush.msra.mxu0 0.0
  %217 = vmatpush.msra.mxu0 0.0
  %218 = vmatpush.msra.mxu0 0.0
  %219 = vmatpush.msra.mxu0 0.0
  %220 = vmatpush.msra.mxu0 0.0
  %221 = vmatpush.msra.mxu0 0.0
  %222 = vmatpush.msra.mxu0 0.0
  %223 = vmatpush.msra.mxu0 %v206
  %224 = vmatmul.f32.gmra.mxu0 %v200
  %v225 = vpop.f32.mrf.mxu0
  %v226 = vadd.f32 0.0, %v225
  %227 = vmatmul.f32.gmra.mxu0 %v203
  %v228 = vpop.f32.mrf.mxu0
  %v229 = vadd.f32 0.0, %v228
  %230 = vdwg.mxu0
  %v232 = vsel %vm76, %v163, 0
  %v235 = vsel %vm76, %v166, 0
  %v238 = vsel %vm80, %v197, 0
  %240 = vmatpush.msra.mxu0 0.0
  %241 = vmatpush.msra.mxu0 0.0
  %242 = vmatpush.msra.mxu0 0.0
  %243 = vmatpush.msra.mxu0 0.0
  %244 = vmatpush.msra.mxu0 0.0
  %245 = vmatpush.msra.mxu0 0.0
  %246 = vmatpush.msra.mxu0 0.0
  %247 = vmatpush.msra.mxu0 0.0
  %248 = vmatpush.msra.mxu0 0.0
  %249 = vmatpush.msra.mxu0 0.0
  %250 = vmatpush.msra.mxu0 0.0
  %251 = vmatpush.msra.mxu0 0.0
  %252 = vmatpush.msra.mxu0 0.0
  %253 = vmatpush.msra.mxu0 0.0
  %254 = vmatpush.msra.mxu0 0.0
  %255 = vmatpush.msra.mxu0 %v238
  %256 = vmatmul.f32.gmra.mxu0 %v232
  %v257 = vpop.f32.mrf.mxu0
  %v258 = vadd.f32 %v226, %v257
  %259 = vmatmul.f32.gmra.mxu0 %v235
  %v260 = vpop.f32.mrf.mxu0
  %v261 = vadd.f32 %v229, %v260
  %262 = vdwg.mxu0
  %v263 = vld [vmem:[%s0 + $0x60] sm:$0x1]
  %265 = vset.pattern.permute.xlu0 0
  %266 = vperm.xlu0 %265, %v27
  %v267 = vpop.permute.xlu0 %266
  %270 = vset.pattern.permute.xlu0 0
  %271 = vperm.xlu0 %270, %v28
  %v272 = vpop.permute.xlu0 %271
  %v274 = vperm.slane %v263, 0
  %v275 = vmul.f32 %v267, %v274
  %v276 = vmul.f32 %v272, %v274
  %v277 = vadd.f32 %v258, %v275
  %v278 = vadd.f32 %v261, %v276
  %v279 = vperm.slane %v44, 0
  %v280 = vadd.f32 %v277, %v279
  %v281 = vadd.f32 %v278, %v279
  %v282 = vld [vmem:[%s0 + $0xa8] sm:$0xf]
  %v283 = vld [vmem:[%s0 + $0xb8] sm:$0xf]
  %v285 = vsel %vm80, %v283, 0
  %287 = vmatpush.msra.mxu0 0.0
  %288 = vmatpush.msra.mxu0 0.0
  %289 = vmatpush.msra.mxu0 0.0
  %290 = vmatpush.msra.mxu0 0.0
  %291 = vmatpush.msra.mxu0 0.0
  %292 = vmatpush.msra.mxu0 0.0
  %293 = vmatpush.msra.mxu0 0.0
  %294 = vmatpush.msra.mxu0 0.0
  %295 = vmatpush.msra.mxu0 0.0
  %296 = vmatpush.msra.mxu0 0.0
  %297 = vmatpush.msra.mxu0 0.0
  %298 = vmatpush.msra.mxu0 0.0
  %299 = vmatpush.msra.mxu0 0.0
  %300 = vmatpush.msra.mxu0 0.0
  %301 = vmatpush.msra.mxu0 0.0
  %302 = vmatpush.msra.mxu0 %v285
  %303 = vmatmul.f32.gmra.mxu0 %v200
  %v304 = vpop.f32.mrf.mxu0
  %v305 = vadd.f32 0.0, %v304
  %306 = vmatmul.f32.gmra.mxu0 %v203
  %v307 = vpop.f32.mrf.mxu0
  %v308 = vadd.f32 0.0, %v307
  %309 = vdwg.mxu0
  %v311 = vsel %vm80, %v282, 0
  %313 = vmatpush.msra.mxu0 0.0
  %314 = vmatpush.msra.mxu0 0.0
  %315 = vmatpush.msra.mxu0 0.0
  %316 = vmatpush.msra.mxu0 0.0
  %317 = vmatpush.msra.mxu0 0.0
  %318 = vmatpush.msra.mxu0 0.0
  %319 = vmatpush.msra.mxu0 0.0
  %320 = vmatpush.msra.mxu0 0.0
  %321 = vmatpush.msra.mxu0 0.0
  %322 = vmatpush.msra.mxu0 0.0
  %323 = vmatpush.msra.mxu0 0.0
  %324 = vmatpush.msra.mxu0 0.0
  %325 = vmatpush.msra.mxu0 0.0
  %326 = vmatpush.msra.mxu0 0.0
  %327 = vmatpush.msra.mxu0 0.0
  %328 = vmatpush.msra.mxu0 %v311
  %329 = vmatmul.f32.gmra.mxu0 %v232
  %v330 = vpop.f32.mrf.mxu0
  %v331 = vadd.f32 %v305, %v330
  %332 = vmatmul.f32.gmra.mxu0 %v235
  %v333 = vpop.f32.mrf.mxu0
  %v334 = vadd.f32 %v308, %v333
  %335 = vdwg.mxu0
  %v336 = vld [vmem:[%s0 + $0xc0] sm:$0x1]
  %v337 = vperm.slane %v336, 0
  %v338 = vmul.f32 %v267, %v337
  %v339 = vmul.f32 %v272, %v337
  %v340 = vadd.f32 %v331, %v338
  %v341 = vadd.f32 %v334, %v339
  %v342 = vperm.slane %v53, 0
  %v343 = vadd.f32 %v340, %v342
  %v344 = vadd.f32 %v341, %v342
  %v345 = vld [vmem:[%s0 + $0x110] sm:$0xf]
  %v346 = vperm.slane %v63, 0
  %v348 = vsel %vm80, %v345, 0
  %350 = vmatpush.msra.mxu0 0.0
  %351 = vmatpush.msra.mxu0 0.0
  %352 = vmatpush.msra.mxu0 0.0
  %353 = vmatpush.msra.mxu0 0.0
  %354 = vmatpush.msra.mxu0 0.0
  %355 = vmatpush.msra.mxu0 0.0
  %356 = vmatpush.msra.mxu0 0.0
  %357 = vmatpush.msra.mxu0 0.0
  %358 = vmatpush.msra.mxu0 0.0
  %359 = vmatpush.msra.mxu0 0.0
  %360 = vmatpush.msra.mxu0 0.0
  %361 = vmatpush.msra.mxu0 0.0
  %362 = vmatpush.msra.mxu0 0.0
  %363 = vmatpush.msra.mxu0 0.0
  %364 = vmatpush.msra.mxu0 0.0
  %365 = vmatpush.msra.mxu0 %v348
  %366 = vmatmul.f32.gmra.mxu0 %v78
  %v367 = vpop.f32.mrf.mxu0
  %v368 = vadd.f32 %v346, %v367
  %369 = vdwg.mxu0
  %370 = vmatpush.msra.mxu0 0.0
  %371 = vmatpush.msra.mxu0 0.0
  %372 = vmatpush.msra.mxu0 0.0
  %373 = vmatpush.msra.mxu0 0.0
  %374 = vmatpush.msra.mxu0 0.0
  %375 = vmatpush.msra.mxu0 0.0
  %376 = vmatpush.msra.mxu0 0.0
  %377 = vmatpush.msra.mxu0 0.0
  %378 = vmatpush.msra.mxu0 0.0
  %379 = vmatpush.msra.mxu0 0.0
  %380 = vmatpush.msra.mxu0 0.0
  %381 = vmatpush.msra.mxu0 0.0
  %382 = vmatpush.msra.mxu0 0.0
  %383 = vmatpush.msra.mxu0 0.0
  %384 = vmatpush.msra.mxu0 0.0
  %385 = vmatpush.msra.mxu0 %v137
  %386 = vmatmul.f32.gmra.mxu0 %v140
  %v387 = vpop.f32.mrf.mxu0
  %v388 = vadd.f32 0.0, %v387
  %389 = vmatmul.f32.gmra.mxu0 %v143
  %v390 = vpop.f32.mrf.mxu0
  %v391 = vadd.f32 0.0, %v390
  %392 = vdwg.mxu0
  %394 = vset.pattern.permute.xlu0 0
  %395 = vperm.xlu0 %394, %v388
  %v396 = vpop.permute.xlu0 %395
  %399 = vset.pattern.permute.xlu0 0
  %400 = vperm.xlu0 %399, %v391
  %v401 = vpop.permute.xlu0 %400
  %v403 = vperm.slane %v43, 0
  %v404 = vmul.f32 %v396, %v403
  %v405 = vmul.f32 %v401, %v403
  %v406 = vadd.f32 %v280, %v404
  %v407 = vadd.f32 %v281, %v405
  %v408 = vmax.f32 %v406, 0.0
  %v409 = vmax.f32 %v407, 0.0
  %v410 = vperm.slane %v49, 0
  %v412 = vsel %vm106, %v408, 0
  %v415 = vsel %vm106, %v409, 0
  %417 = vmatpush.msra.mxu0 0.0
  %418 = vmatpush.msra.mxu0 0.0
  %419 = vmatpush.msra.mxu0 0.0
  %420 = vmatpush.msra.mxu0 0.0
  %421 = vmatpush.msra.mxu0 0.0
  %422 = vmatpush.msra.mxu0 0.0
  %423 = vmatpush.msra.mxu0 0.0
  %424 = vmatpush.msra.mxu0 0.0
  %425 = vmatpush.msra.mxu0 0.0
  %426 = vmatpush.msra.mxu0 0.0
  %427 = vmatpush.msra.mxu0 0.0
  %428 = vmatpush.msra.mxu0 0.0
  %429 = vmatpush.msra.mxu0 %v48
  %430 = vmatpush.msra.mxu0 %v47
  %431 = vmatpush.msra.mxu0 %v46
  %432 = vmatpush.msra.mxu0 %v45
  %433 = vmatmul.f32.gmra.mxu0 %v412
  %v434 = vpop.f32.mrf.mxu0
  %v435 = vadd.f32 %v410, %v434
  %436 = vmatmul.f32.gmra.mxu0 %v415
  %v437 = vpop.f32.mrf.mxu0
  %v438 = vadd.f32 %v410, %v437
  %439 = vdwg.mxu0
  %v440 = vmax.f32 %v435, 0.0
  %v441 = vmax.f32 %v438, 0.0
  %v442 = vperm.slane %v50, 0
  %v443 = vmul.f32 %v440, %v442
  %v444 = vmul.f32 %v441, %v442
  %v445 = vsel %vm106, %v443, 0.0
  %446 = vadd.xlane.f32.xlu0 %v445
  %v447 = vpop.xlane.xlu0 %446
  %v448 = vsel %vm106, %v444, 0.0
  %449 = vadd.xlane.f32.xlu0 %v448
  %v450 = vpop.xlane.xlu0 %449
  %v451 = vperm.slane %v51, 0
  %v452 = vadd.f32 %v447, %v451
  %v453 = vadd.f32 %v450, %v451
  %vm454 = vcmask 130048
  %v456 = vsel %vm454, %v33, 0
  %458 = vmatpush.msra.mxu0 0.0
  %459 = vmatpush.msra.mxu0 0.0
  %460 = vmatpush.msra.mxu0 0.0
  %461 = vmatpush.msra.mxu0 0.0
  %462 = vmatpush.msra.mxu0 0.0
  %463 = vmatpush.msra.mxu0 0.0
  %464 = vmatpush.msra.mxu0 0.0
  %465 = vmatpush.msra.mxu0 0.0
  %466 = vmatpush.msra.mxu0 0.0
  %467 = vmatpush.msra.mxu0 0.0
  %468 = vmatpush.msra.mxu0 0.0
  %469 = vmatpush.msra.mxu0 0.0
  %470 = vmatpush.msra.mxu0 0.0
  %471 = vmatpush.msra.mxu0 0.0
  %472 = vmatpush.msra.mxu0 %v453
  %473 = vmatpush.msra.mxu0 %v452
  %474 = vmatmul.f32.gmra.mxu0 %v456
  %v475 = vpop.f32.mrf.mxu0
  %v476 = vadd.f32 0.0, %v475
  %477 = vdwg.mxu0
  %479 = vset.pattern.permute.xlu0 0
  %480 = vperm.xlu0 %479, %v476
  %v481 = vpop.permute.xlu0 %480
  %v483 = vperm.slane %v61, 0
  %v484 = vmul.f32 %v481, %v483
  %v485 = vadd.f32 %v368, %v484
  %487 = vset.pattern.permute.xlu0 0
  %488 = vperm.xlu0 %487, %v137
  %v489 = vpop.permute.xlu0 %488
  %v491 = vperm.slane %v62, 0
  %v492 = vmul.f32 %v489, %v491
  %v493 = vadd.f32 %v485, %v492
  %v494 = vmax.f32 %v493, 0.0
  %v495 = vperm.slane %v68, 0
  %v497 = vsel %vm106, %v494, 0
  %499 = vmatpush.msra.mxu0 0.0
  %500 = vmatpush.msra.mxu0 0.0
  %501 = vmatpush.msra.mxu0 0.0
  %502 = vmatpush.msra.mxu0 0.0
  %503 = vmatpush.msra.mxu0 0.0
  %504 = vmatpush.msra.mxu0 0.0
  %505 = vmatpush.msra.mxu0 0.0
  %506 = vmatpush.msra.mxu0 0.0
  %507 = vmatpush.msra.mxu0 0.0
  %508 = vmatpush.msra.mxu0 0.0
  %509 = vmatpush.msra.mxu0 0.0
  %510 = vmatpush.msra.mxu0 0.0
  %511 = vmatpush.msra.mxu0 %v67
  %512 = vmatpush.msra.mxu0 %v66
  %513 = vmatpush.msra.mxu0 %v65
  %514 = vmatpush.msra.mxu0 %v64
  %515 = vmatmul.f32.gmra.mxu0 %v497
  %v516 = vpop.f32.mrf.mxu0
  %v517 = vadd.f32 %v495, %v516
  %518 = vdwg.mxu0
  %v519 = vmax.f32 %v517, 0.0
  %v520 = vperm.slane %v69, 0
  %v521 = vmul.f32 %v519, %v520
  %v522 = vsel %vm106, %v521, 0.0
  %523 = vadd.xlane.f32.xlu0 %v522
  %v524 = vpop.xlane.xlu0 %523
  %v525 = vperm.slane %v70, 0
  %v526 = vadd.f32 %v524, %v525
  %527 = vmatpush.msra.mxu0 0.0
  %528 = vmatpush.msra.mxu0 0.0
  %529 = vmatpush.msra.mxu0 0.0
  %530 = vmatpush.msra.mxu0 0.0
  %531 = vmatpush.msra.mxu0 0.0
  %532 = vmatpush.msra.mxu0 0.0
  %533 = vmatpush.msra.mxu0 0.0
  %534 = vmatpush.msra.mxu0 0.0
  %535 = vmatpush.msra.mxu0 0.0
  %536 = vmatpush.msra.mxu0 0.0
  %537 = vmatpush.msra.mxu0 0.0
  %538 = vmatpush.msra.mxu0 0.0
  %539 = vmatpush.msra.mxu0 0.0
  %540 = vmatpush.msra.mxu0 0.0
  %541 = vmatpush.msra.mxu0 0.0
  %542 = vmatpush.msra.mxu0 %v526
  %543 = vmatmul.f32.gmra.mxu0 %v140
  %v544 = vpop.f32.mrf.mxu0
  %v545 = vadd.f32 0.0, %v544
  %546 = vmatmul.f32.gmra.mxu0 %v143
  %v547 = vpop.f32.mrf.mxu0
  %v548 = vadd.f32 0.0, %v547
  %549 = vdwg.mxu0
  %551 = vset.pattern.permute.xlu0 0
  %552 = vperm.xlu0 %551, %v545
  %v553 = vpop.permute.xlu0 %552
  %556 = vset.pattern.permute.xlu0 0
  %557 = vperm.xlu0 %556, %v548
  %v558 = vpop.permute.xlu0 %557
  %v560 = vperm.slane %v52, 0
  %v561 = vmul.f32 %v553, %v560
  %v562 = vmul.f32 %v558, %v560
  %v563 = vadd.f32 %v343, %v561
  %v564 = vadd.f32 %v344, %v562
  %v565 = vmax.f32 %v563, 0.0
  %v566 = vmax.f32 %v564, 0.0
  %v567 = vperm.slane %v58, 0
  %v569 = vsel %vm106, %v565, 0
  %v572 = vsel %vm106, %v566, 0
  %574 = vmatpush.msra.mxu0 0.0
  %575 = vmatpush.msra.mxu0 0.0
  %576 = vmatpush.msra.mxu0 0.0
  %577 = vmatpush.msra.mxu0 0.0
  %578 = vmatpush.msra.mxu0 0.0
  %579 = vmatpush.msra.mxu0 0.0
  %580 = vmatpush.msra.mxu0 0.0
  %581 = vmatpush.msra.mxu0 0.0
  %582 = vmatpush.msra.mxu0 0.0
  %583 = vmatpush.msra.mxu0 0.0
  %584 = vmatpush.msra.mxu0 0.0
  %585 = vmatpush.msra.mxu0 0.0
  %586 = vmatpush.msra.mxu0 %v57
  %587 = vmatpush.msra.mxu0 %v56
  %588 = vmatpush.msra.mxu0 %v55
  %589 = vmatpush.msra.mxu0 %v54
  %590 = vmatmul.f32.gmra.mxu0 %v569
  %v591 = vpop.f32.mrf.mxu0
  %v592 = vadd.f32 %v567, %v591
  %593 = vmatmul.f32.gmra.mxu0 %v572
  %v594 = vpop.f32.mrf.mxu0
  %v595 = vadd.f32 %v567, %v594
  %596 = vdwg.mxu0
  %v597 = vmax.f32 %v592, 0.0
  %v598 = vmax.f32 %v595, 0.0
  %v599 = vperm.slane %v59, 0
  %v600 = vmul.f32 %v597, %v599
  %v601 = vmul.f32 %v598, %v599
  %v602 = vsel %vm106, %v600, 0.0
  %603 = vadd.xlane.f32.xlu0 %v602
  %v604 = vpop.xlane.xlu0 %603
  %v605 = vsel %vm106, %v601, 0.0
  %606 = vadd.xlane.f32.xlu0 %v605
  %v607 = vpop.xlane.xlu0 %606
  %v608 = vperm.slane %v60, 0
  %v609 = vadd.f32 %v604, %v608
  %v610 = vadd.f32 %v607, %v608
  %v611 = vadd.f32 %v609, 0.0
  %v612 = vadd.f32 %v610, 0.0
  %614 = vset.pattern.permute.xlu0 0
  %615 = vperm.xlu0 %614, %v526
  %v616 = vpop.permute.xlu0 %615
  %v618 = vperm.slane %v71, 0
  %v619 = vmul.f32 %v616, %v618
  %v620 = vperm.slane %v72, 0
  %v621 = vadd.f32 %v619, %v620
  %v622 = vmax.f32 %v621, 0.0
  %v623 = vperm.slane %v73, 0
  %v624 = vmul.f32 %v622, %v623
  %v625 = vsel %vm106, %v624, 0.0
  %626 = vadd.xlane.f32.xlu0 %v625
  %v627 = vpop.xlane.xlu0 %626
  %v628 = vperm.slane %v74, 0
  %v629 = vadd.f32 %v627, %v628
  %v630 = vadd.f32 %v629, 0.0
  %v631 = vmul.f32 %v553, %v403
  %v632 = vmul.f32 %v558, %v403
  %v633 = vadd.f32 %v280, %v631
  %v634 = vadd.f32 %v281, %v632
  %v635 = vmax.f32 %v633, 0.0
  %v636 = vmax.f32 %v634, 0.0
  %v638 = vsel %vm106, %v635, 0
  %v641 = vsel %vm106, %v636, 0
  %643 = vmatpush.msra.mxu0 0.0
  %644 = vmatpush.msra.mxu0 0.0
  %645 = vmatpush.msra.mxu0 0.0
  %646 = vmatpush.msra.mxu0 0.0
  %647 = vmatpush.msra.mxu0 0.0
  %648 = vmatpush.msra.mxu0 0.0
  %649 = vmatpush.msra.mxu0 0.0
  %650 = vmatpush.msra.mxu0 0.0
  %651 = vmatpush.msra.mxu0 0.0
  %652 = vmatpush.msra.mxu0 0.0
  %653 = vmatpush.msra.mxu0 0.0
  %654 = vmatpush.msra.mxu0 0.0
  %655 = vmatpush.msra.mxu0 %v48
  %656 = vmatpush.msra.mxu0 %v47
  %657 = vmatpush.msra.mxu0 %v46
  %658 = vmatpush.msra.mxu0 %v45
  %659 = vmatmul.f32.gmra.mxu0 %v638
  %v660 = vpop.f32.mrf.mxu0
  %v661 = vadd.f32 %v410, %v660
  %662 = vmatmul.f32.gmra.mxu0 %v641
  %v663 = vpop.f32.mrf.mxu0
  %v664 = vadd.f32 %v410, %v663
  %665 = vdwg.mxu0
  %v666 = vmax.f32 %v661, 0.0
  %v667 = vmax.f32 %v664, 0.0
  %v668 = vmul.f32 %v666, %v442
  %v669 = vmul.f32 %v667, %v442
  %v670 = vsel %vm106, %v668, 0.0
  %671 = vadd.xlane.f32.xlu0 %v670
  %v672 = vpop.xlane.xlu0 %671
  %v673 = vsel %vm106, %v669, 0.0
  %674 = vadd.xlane.f32.xlu0 %v673
  %v675 = vpop.xlane.xlu0 %674
  %v676 = vadd.f32 %v672, %v451
  %v677 = vadd.f32 %v675, %v451
  %678 = vmatpush.msra.mxu0 0.0
  %679 = vmatpush.msra.mxu0 0.0
  %680 = vmatpush.msra.mxu0 0.0
  %681 = vmatpush.msra.mxu0 0.0
  %682 = vmatpush.msra.mxu0 0.0
  %683 = vmatpush.msra.mxu0 0.0
  %684 = vmatpush.msra.mxu0 0.0
  %685 = vmatpush.msra.mxu0 0.0
  %686 = vmatpush.msra.mxu0 0.0
  %687 = vmatpush.msra.mxu0 0.0
  %688 = vmatpush.msra.mxu0 0.0
  %689 = vmatpush.msra.mxu0 0.0
  %690 = vmatpush.msra.mxu0 0.0
  %691 = vmatpush.msra.mxu0 0.0
  %692 = vmatpush.msra.mxu0 %v677
  %693 = vmatpush.msra.mxu0 %v676
  %694 = vmatmul.f32.gmra.mxu0 %v456
  %v695 = vpop.f32.mrf.mxu0
  %v696 = vadd.f32 0.0, %v695
  %697 = vdwg.mxu0
  %699 = vset.pattern.permute.xlu0 0
  %700 = vperm.xlu0 %699, %v696
  %v701 = vpop.permute.xlu0 %700
  %v703 = vmul.f32 %v701, %v483
  %v704 = vadd.f32 %v368, %v703
  %v705 = vmul.f32 %v616, %v491
  %v706 = vadd.f32 %v704, %v705
  %v707 = vmax.f32 %v706, 0.0
  %v709 = vsel %vm106, %v707, 0
  %711 = vmatpush.msra.mxu0 0.0
  %712 = vmatpush.msra.mxu0 0.0
  %713 = vmatpush.msra.mxu0 0.0
  %714 = vmatpush.msra.mxu0 0.0
  %715 = vmatpush.msra.mxu0 0.0
  %716 = vmatpush.msra.mxu0 0.0
  %717 = vmatpush.msra.mxu0 0.0
  %718 = vmatpush.msra.mxu0 0.0
  %719 = vmatpush.msra.mxu0 0.0
  %720 = vmatpush.msra.mxu0 0.0
  %721 = vmatpush.msra.mxu0 0.0
  %722 = vmatpush.msra.mxu0 0.0
  %723 = vmatpush.msra.mxu0 %v67
  %724 = vmatpush.msra.mxu0 %v66
  %725 = vmatpush.msra.mxu0 %v65
  %726 = vmatpush.msra.mxu0 %v64
  %727 = vmatmul.f32.gmra.mxu0 %v709
  %v728 = vpop.f32.mrf.mxu0
  %v729 = vadd.f32 %v495, %v728
  %730 = vdwg.mxu0
  %v731 = vmax.f32 %v729, 0.0
  %v732 = vmul.f32 %v731, %v520
  %v733 = vsel %vm106, %v732, 0.0
  %734 = vadd.xlane.f32.xlu0 %v733
  %v735 = vpop.xlane.xlu0 %734
  %v736 = vadd.f32 %v735, %v525
  %737 = vmatpush.msra.mxu0 0.0
  %738 = vmatpush.msra.mxu0 0.0
  %739 = vmatpush.msra.mxu0 0.0
  %740 = vmatpush.msra.mxu0 0.0
  %741 = vmatpush.msra.mxu0 0.0
  %742 = vmatpush.msra.mxu0 0.0
  %743 = vmatpush.msra.mxu0 0.0
  %744 = vmatpush.msra.mxu0 0.0
  %745 = vmatpush.msra.mxu0 0.0
  %746 = vmatpush.msra.mxu0 0.0
  %747 = vmatpush.msra.mxu0 0.0
  %748 = vmatpush.msra.mxu0 0.0
  %749 = vmatpush.msra.mxu0 0.0
  %750 = vmatpush.msra.mxu0 0.0
  %751 = vmatpush.msra.mxu0 0.0
  %752 = vmatpush.msra.mxu0 %v736
  %753 = vmatmul.f32.gmra.mxu0 %v140
  %v754 = vpop.f32.mrf.mxu0
  %v755 = vadd.f32 0.0, %v754
  %756 = vmatmul.f32.gmra.mxu0 %v143
  %v757 = vpop.f32.mrf.mxu0
  %v758 = vadd.f32 0.0, %v757
  %759 = vdwg.mxu0
  %761 = vset.pattern.permute.xlu0 0
  %762 = vperm.xlu0 %761, %v755
  %v763 = vpop.permute.xlu0 %762
  %766 = vset.pattern.permute.xlu0 0
  %767 = vperm.xlu0 %766, %v758
  %v768 = vpop.permute.xlu0 %767
  %v770 = vmul.f32 %v763, %v560
  %v771 = vmul.f32 %v768, %v560
  %v772 = vadd.f32 %v343, %v770
  %v773 = vadd.f32 %v344, %v771
  %v774 = vmax.f32 %v772, 0.0
  %v775 = vmax.f32 %v773, 0.0
  %v777 = vsel %vm106, %v774, 0
  %v780 = vsel %vm106, %v775, 0
  %782 = vmatpush.msra.mxu0 0.0
  %783 = vmatpush.msra.mxu0 0.0
  %784 = vmatpush.msra.mxu0 0.0
  %785 = vmatpush.msra.mxu0 0.0
  %786 = vmatpush.msra.mxu0 0.0
  %787 = vmatpush.msra.mxu0 0.0
  %788 = vmatpush.msra.mxu0 0.0
  %789 = vmatpush.msra.mxu0 0.0
  %790 = vmatpush.msra.mxu0 0.0
  %791 = vmatpush.msra.mxu0 0.0
  %792 = vmatpush.msra.mxu0 0.0
  %793 = vmatpush.msra.mxu0 0.0
  %794 = vmatpush.msra.mxu0 %v57
  %795 = vmatpush.msra.mxu0 %v56
  %796 = vmatpush.msra.mxu0 %v55
  %797 = vmatpush.msra.mxu0 %v54
  %798 = vmatmul.f32.gmra.mxu0 %v777
  %v799 = vpop.f32.mrf.mxu0
  %v800 = vadd.f32 %v567, %v799
  %801 = vmatmul.f32.gmra.mxu0 %v780
  %v802 = vpop.f32.mrf.mxu0
  %v803 = vadd.f32 %v567, %v802
  %804 = vdwg.mxu0
  %v805 = vmax.f32 %v800, 0.0
  %v806 = vmax.f32 %v803, 0.0
  %v807 = vmul.f32 %v805, %v599
  %v808 = vmul.f32 %v806, %v599
  %v809 = vsel %vm106, %v807, 0.0
  %810 = vadd.xlane.f32.xlu0 %v809
  %v811 = vpop.xlane.xlu0 %810
  %v812 = vsel %vm106, %v808, 0.0
  %813 = vadd.xlane.f32.xlu0 %v812
  %v814 = vpop.xlane.xlu0 %813
  %v815 = vadd.f32 %v811, %v608
  %v816 = vadd.f32 %v814, %v608
  %v817 = vadd.f32 %v611, %v815
  %v818 = vadd.f32 %v612, %v816
  %820 = vset.pattern.permute.xlu0 0
  %821 = vperm.xlu0 %820, %v736
  %v822 = vpop.permute.xlu0 %821
  %v824 = vmul.f32 %v822, %v618
  %v825 = vadd.f32 %v824, %v620
  %v826 = vmax.f32 %v825, 0.0
  %v827 = vmul.f32 %v826, %v623
  %v828 = vsel %vm106, %v827, 0.0
  %829 = vadd.xlane.f32.xlu0 %v828
  %v830 = vpop.xlane.xlu0 %829
  %v831 = vadd.f32 %v830, %v628
  %v832 = vadd.f32 %v630, %v831
  %v833 = vmul.f32 %v763, %v403
  %v834 = vmul.f32 %v768, %v403
  %v835 = vadd.f32 %v280, %v833
  %v836 = vadd.f32 %v281, %v834
  %v837 = vmax.f32 %v835, 0.0
  %v838 = vmax.f32 %v836, 0.0
  %v840 = vsel %vm106, %v837, 0
  %v843 = vsel %vm106, %v838, 0
  %845 = vmatpush.msra.mxu0 0.0
  %846 = vmatpush.msra.mxu0 0.0
  %847 = vmatpush.msra.mxu0 0.0
  %848 = vmatpush.msra.mxu0 0.0
  %849 = vmatpush.msra.mxu0 0.0
  %850 = vmatpush.msra.mxu0 0.0
  %851 = vmatpush.msra.mxu0 0.0
  %852 = vmatpush.msra.mxu0 0.0
  %853 = vmatpush.msra.mxu0 0.0
  %854 = vmatpush.msra.mxu0 0.0
  %855 = vmatpush.msra.mxu0 0.0
  %856 = vmatpush.msra.mxu0 0.0
  %857 = vmatpush.msra.mxu0 %v48
  %858 = vmatpush.msra.mxu0 %v47
  %859 = vmatpush.msra.mxu0 %v46
  %860 = vmatpush.msra.mxu0 %v45
  %861 = vmatmul.f32.gmra.mxu0 %v840
  %v862 = vpop.f32.mrf.mxu0
  %v863 = vadd.f32 %v410, %v862
  %864 = vmatmul.f32.gmra.mxu0 %v843
  %v865 = vpop.f32.mrf.mxu0
  %v866 = vadd.f32 %v410, %v865
  %867 = vdwg.mxu0
  %v868 = vmax.f32 %v863, 0.0
  %v869 = vmax.f32 %v866, 0.0
  %v870 = vmul.f32 %v868, %v442
  %v871 = vmul.f32 %v869, %v442
  %v872 = vsel %vm106, %v870, 0.0
  %873 = vadd.xlane.f32.xlu0 %v872
  %v874 = vpop.xlane.xlu0 %873
  %v875 = vsel %vm106, %v871, 0.0
  %876 = vadd.xlane.f32.xlu0 %v875
  %v877 = vpop.xlane.xlu0 %876
  %v878 = vadd.f32 %v874, %v451
  %v879 = vadd.f32 %v877, %v451
  %880 = vmatpush.msra.mxu0 0.0
  %881 = vmatpush.msra.mxu0 0.0
  %882 = vmatpush.msra.mxu0 0.0
  %883 = vmatpush.msra.mxu0 0.0
  %884 = vmatpush.msra.mxu0 0.0
  %885 = vmatpush.msra.mxu0 0.0
  %886 = vmatpush.msra.mxu0 0.0
  %887 = vmatpush.msra.mxu0 0.0
  %888 = vmatpush.msra.mxu0 0.0
  %889 = vmatpush.msra.mxu0 0.0
  %890 = vmatpush.msra.mxu0 0.0
  %891 = vmatpush.msra.mxu0 0.0
  %892 = vmatpush.msra.mxu0 0.0
  %893 = vmatpush.msra.mxu0 0.0
  %894 = vmatpush.msra.mxu0 %v879
  %895 = vmatpush.msra.mxu0 %v878
  %896 = vmatmul.f32.gmra.mxu0 %v456
  %v897 = vpop.f32.mrf.mxu0
  %v898 = vadd.f32 0.0, %v897
  %899 = vdwg.mxu0
  %901 = vset.pattern.permute.xlu0 0
  %902 = vperm.xlu0 %901, %v898
  %v903 = vpop.permute.xlu0 %902
  %v905 = vmul.f32 %v903, %v483
  %v906 = vadd.f32 %v368, %v905
  %v907 = vmul.f32 %v822, %v491
  %v908 = vadd.f32 %v906, %v907
  %v909 = vmax.f32 %v908, 0.0
  %v911 = vsel %vm106, %v909, 0
  %913 = vmatpush.msra.mxu0 0.0
  %914 = vmatpush.msra.mxu0 0.0
  %915 = vmatpush.msra.mxu0 0.0
  %916 = vmatpush.msra.mxu0 0.0
  %917 = vmatpush.msra.mxu0 0.0
  %918 = vmatpush.msra.mxu0 0.0
  %919 = vmatpush.msra.mxu0 0.0
  %920 = vmatpush.msra.mxu0 0.0
  %921 = vmatpush.msra.mxu0 0.0
  %922 = vmatpush.msra.mxu0 0.0
  %923 = vmatpush.msra.mxu0 0.0
  %924 = vmatpush.msra.mxu0 0.0
  %925 = vmatpush.msra.mxu0 %v67
  %926 = vmatpush.msra.mxu0 %v66
  %927 = vmatpush.msra.mxu0 %v65
  %928 = vmatpush.msra.mxu0 %v64
  %929 = vmatmul.f32.gmra.mxu0 %v911
  %v930 = vpop.f32.mrf.mxu0
  %v931 = vadd.f32 %v495, %v930
  %932 = vdwg.mxu0
  %v933 = vmax.f32 %v931, 0.0
  %v934 = vmul.f32 %v933, %v520
  %v935 = vsel %vm106, %v934, 0.0
  %936 = vadd.xlane.f32.xlu0 %v935
  %v937 = vpop.xlane.xlu0 %936
  %v938 = vadd.f32 %v937, %v525
  %939 = vmatpush.msra.mxu0 0.0
  %940 = vmatpush.msra.mxu0 0.0
  %941 = vmatpush.msra.mxu0 0.0
  %942 = vmatpush.msra.mxu0 0.0
  %943 = vmatpush.msra.mxu0 0.0
  %944 = vmatpush.msra.mxu0 0.0
  %945 = vmatpush.msra.mxu0 0.0
  %946 = vmatpush.msra.mxu0 0.0
  %947 = vmatpush.msra.mxu0 0.0
  %948 = vmatpush.msra.mxu0 0.0
  %949 = vmatpush.msra.mxu0 0.0
  %950 = vmatpush.msra.mxu0 0.0
  %951 = vmatpush.msra.mxu0 0.0
  %952 = vmatpush.msra.mxu0 0.0
  %953 = vmatpush.msra.mxu0 0.0
  %954 = vmatpush.msra.mxu0 %v938
  %955 = vmatmul.f32.gmra.mxu0 %v140
  %v956 = vpop.f32.mrf.mxu0
  %v957 = vadd.f32 0.0, %v956
  %958 = vmatmul.f32.gmra.mxu0 %v143
  %v959 = vpop.f32.mrf.mxu0
  %v960 = vadd.f32 0.0, %v959
  %961 = vdwg.mxu0
  %963 = vset.pattern.permute.xlu0 0
  %964 = vperm.xlu0 %963, %v957
  %v965 = vpop.permute.xlu0 %964
  %968 = vset.pattern.permute.xlu0 0
  %969 = vperm.xlu0 %968, %v960
  %v970 = vpop.permute.xlu0 %969
  %v972 = vmul.f32 %v965, %v560
  %v973 = vmul.f32 %v970, %v560
  %v974 = vadd.f32 %v343, %v972
  %v975 = vadd.f32 %v344, %v973
  %v976 = vmax.f32 %v974, 0.0
  %v977 = vmax.f32 %v975, 0.0
  %v979 = vsel %vm106, %v976, 0
  %v982 = vsel %vm106, %v977, 0
  %984 = vmatpush.msra.mxu0 0.0
  %985 = vmatpush.msra.mxu0 0.0
  %986 = vmatpush.msra.mxu0 0.0
  %987 = vmatpush.msra.mxu0 0.0
  %988 = vmatpush.msra.mxu0 0.0
  %989 = vmatpush.msra.mxu0 0.0
  %990 = vmatpush.msra.mxu0 0.0
  %991 = vmatpush.msra.mxu0 0.0
  %992 = vmatpush.msra.mxu0 0.0
  %993 = vmatpush.msra.mxu0 0.0
  %994 = vmatpush.msra.mxu0 0.0
  %995 = vmatpush.msra.mxu0 0.0
  %996 = vmatpush.msra.mxu0 %v57
  %997 = vmatpush.msra.mxu0 %v56
  %998 = vmatpush.msra.mxu0 %v55
  %999 = vmatpush.msra.mxu0 %v54
  %1000 = vmatmul.f32.gmra.mxu0 %v979
  %v1001 = vpop.f32.mrf.mxu0
  %v1002 = vadd.f32 %v567, %v1001
  %1003 = vmatmul.f32.gmra.mxu0 %v982
  %v1004 = vpop.f32.mrf.mxu0
  %v1005 = vadd.f32 %v567, %v1004
  %1006 = vdwg.mxu0
  %v1007 = vmax.f32 %v1002, 0.0
  %v1008 = vmax.f32 %v1005, 0.0
  %v1009 = vmul.f32 %v1007, %v599
  %v1010 = vmul.f32 %v1008, %v599
  %v1011 = vsel %vm106, %v1009, 0.0
  %1012 = vadd.xlane.f32.xlu0 %v1011
  %v1013 = vpop.xlane.xlu0 %1012
  %v1014 = vsel %vm106, %v1010, 0.0
  %1015 = vadd.xlane.f32.xlu0 %v1014
  %v1016 = vpop.xlane.xlu0 %1015
  %v1017 = vadd.f32 %v1013, %v608
  %v1018 = vadd.f32 %v1016, %v608
  %v1019 = vadd.f32 %v817, %v1017
  %v1020 = vadd.f32 %v818, %v1018
  %1022 = vset.pattern.permute.xlu0 0
  %1023 = vperm.xlu0 %1022, %v938
  %v1024 = vpop.permute.xlu0 %1023
  %v1026 = vmul.f32 %v1024, %v618
  %v1027 = vadd.f32 %v1026, %v620
  %v1028 = vmax.f32 %v1027, 0.0
  %v1029 = vmul.f32 %v1028, %v623
  %v1030 = vsel %vm106, %v1029, 0.0
  %1031 = vadd.xlane.f32.xlu0 %v1030
  %v1032 = vpop.xlane.xlu0 %1031
  %v1033 = vadd.f32 %v1032, %v628
  %v1034 = vadd.f32 %v832, %v1033
  %v1035 = vmul.f32 %v965, %v403
  %v1036 = vmul.f32 %v970, %v403
  %v1037 = vadd.f32 %v280, %v1035
  %v1038 = vadd.f32 %v281, %v1036
  %v1039 = vmax.f32 %v1037, 0.0
  %v1040 = vmax.f32 %v1038, 0.0
  %v1042 = vsel %vm106, %v1039, 0
  %v1045 = vsel %vm106, %v1040, 0
  %1047 = vmatpush.msra.mxu0 0.0
  %1048 = vmatpush.msra.mxu0 0.0
  %1049 = vmatpush.msra.mxu0 0.0
  %1050 = vmatpush.msra.mxu0 0.0
  %1051 = vmatpush.msra.mxu0 0.0
  %1052 = vmatpush.msra.mxu0 0.0
  %1053 = vmatpush.msra.mxu0 0.0
  %1054 = vmatpush.msra.mxu0 0.0
  %1055 = vmatpush.msra.mxu0 0.0
  %1056 = vmatpush.msra.mxu0 0.0
  %1057 = vmatpush.msra.mxu0 0.0
  %1058 = vmatpush.msra.mxu0 0.0
  %1059 = vmatpush.msra.mxu0 %v48
  %1060 = vmatpush.msra.mxu0 %v47
  %1061 = vmatpush.msra.mxu0 %v46
  %1062 = vmatpush.msra.mxu0 %v45
  %1063 = vmatmul.f32.gmra.mxu0 %v1042
  %v1064 = vpop.f32.mrf.mxu0
  %v1065 = vadd.f32 %v410, %v1064
  %1066 = vmatmul.f32.gmra.mxu0 %v1045
  %v1067 = vpop.f32.mrf.mxu0
  %v1068 = vadd.f32 %v410, %v1067
  %1069 = vdwg.mxu0
  %v1070 = vmax.f32 %v1065, 0.0
  %v1071 = vmax.f32 %v1068, 0.0
  %v1072 = vmul.f32 %v1070, %v442
  %v1073 = vmul.f32 %v1071, %v442
  %v1074 = vsel %vm106, %v1072, 0.0
  %1075 = vadd.xlane.f32.xlu0 %v1074
  %v1076 = vpop.xlane.xlu0 %1075
  %v1077 = vsel %vm106, %v1073, 0.0
  %1078 = vadd.xlane.f32.xlu0 %v1077
  %v1079 = vpop.xlane.xlu0 %1078
  %v1080 = vadd.f32 %v1076, %v451
  %v1081 = vadd.f32 %v1079, %v451
  %1082 = vmatpush.msra.mxu0 0.0
  %1083 = vmatpush.msra.mxu0 0.0
  %1084 = vmatpush.msra.mxu0 0.0
  %1085 = vmatpush.msra.mxu0 0.0
  %1086 = vmatpush.msra.mxu0 0.0
  %1087 = vmatpush.msra.mxu0 0.0
  %1088 = vmatpush.msra.mxu0 0.0
  %1089 = vmatpush.msra.mxu0 0.0
  %1090 = vmatpush.msra.mxu0 0.0
  %1091 = vmatpush.msra.mxu0 0.0
  %1092 = vmatpush.msra.mxu0 0.0
  %1093 = vmatpush.msra.mxu0 0.0
  %1094 = vmatpush.msra.mxu0 0.0
  %1095 = vmatpush.msra.mxu0 0.0
  %1096 = vmatpush.msra.mxu0 %v1081
  %1097 = vmatpush.msra.mxu0 %v1080
  %1098 = vmatmul.f32.gmra.mxu0 %v456
  %v1099 = vpop.f32.mrf.mxu0
  %v1100 = vadd.f32 0.0, %v1099
  %1101 = vdwg.mxu0
  %1103 = vset.pattern.permute.xlu0 0
  %1104 = vperm.xlu0 %1103, %v1100
  %v1105 = vpop.permute.xlu0 %1104
  %v1107 = vmul.f32 %v1105, %v483
  %v1108 = vadd.f32 %v368, %v1107
  %v1109 = vmul.f32 %v1024, %v491
  %v1110 = vadd.f32 %v1108, %v1109
  %v1111 = vmax.f32 %v1110, 0.0
  %v1113 = vsel %vm106, %v1111, 0
  %1115 = vmatpush.msra.mxu0 0.0
  %1116 = vmatpush.msra.mxu0 0.0
  %1117 = vmatpush.msra.mxu0 0.0
  %1118 = vmatpush.msra.mxu0 0.0
  %1119 = vmatpush.msra.mxu0 0.0
  %1120 = vmatpush.msra.mxu0 0.0
  %1121 = vmatpush.msra.mxu0 0.0
  %1122 = vmatpush.msra.mxu0 0.0
  %1123 = vmatpush.msra.mxu0 0.0
  %1124 = vmatpush.msra.mxu0 0.0
  %1125 = vmatpush.msra.mxu0 0.0
  %1126 = vmatpush.msra.mxu0 0.0
  %1127 = vmatpush.msra.mxu0 %v67
  %1128 = vmatpush.msra.mxu0 %v66
  %1129 = vmatpush.msra.mxu0 %v65
  %1130 = vmatpush.msra.mxu0 %v64
  %1131 = vmatmul.f32.gmra.mxu0 %v1113
  %v1132 = vpop.f32.mrf.mxu0
  %v1133 = vadd.f32 %v495, %v1132
  %1134 = vdwg.mxu0
  %v1135 = vmax.f32 %v1133, 0.0
  %v1136 = vmul.f32 %v1135, %v520
  %v1137 = vsel %vm106, %v1136, 0.0
  %1138 = vadd.xlane.f32.xlu0 %v1137
  %v1139 = vpop.xlane.xlu0 %1138
  %v1140 = vadd.f32 %v1139, %v525
  %1141 = vmatpush.msra.mxu0 0.0
  %1142 = vmatpush.msra.mxu0 0.0
  %1143 = vmatpush.msra.mxu0 0.0
  %1144 = vmatpush.msra.mxu0 0.0
  %1145 = vmatpush.msra.mxu0 0.0
  %1146 = vmatpush.msra.mxu0 0.0
  %1147 = vmatpush.msra.mxu0 0.0
  %1148 = vmatpush.msra.mxu0 0.0
  %1149 = vmatpush.msra.mxu0 0.0
  %1150 = vmatpush.msra.mxu0 0.0
  %1151 = vmatpush.msra.mxu0 0.0
  %1152 = vmatpush.msra.mxu0 0.0
  %1153 = vmatpush.msra.mxu0 0.0
  %1154 = vmatpush.msra.mxu0 0.0
  %1155 = vmatpush.msra.mxu0 0.0
  %1156 = vmatpush.msra.mxu0 %v1140
  %1157 = vmatmul.f32.gmra.mxu0 %v140
  %v1158 = vpop.f32.mrf.mxu0
  %v1159 = vadd.f32 0.0, %v1158
  %1160 = vmatmul.f32.gmra.mxu0 %v143
  %v1161 = vpop.f32.mrf.mxu0
  %v1162 = vadd.f32 0.0, %v1161
  %1163 = vdwg.mxu0
  %1165 = vset.pattern.permute.xlu0 0
  %1166 = vperm.xlu0 %1165, %v1159
  %v1167 = vpop.permute.xlu0 %1166
  %1170 = vset.pattern.permute.xlu0 0
  %1171 = vperm.xlu0 %1170, %v1162
  %v1172 = vpop.permute.xlu0 %1171
  %v1174 = vmul.f32 %v1167, %v560
  %v1175 = vmul.f32 %v1172, %v560
  %v1176 = vadd.f32 %v343, %v1174
  %v1177 = vadd.f32 %v344, %v1175
  %v1178 = vmax.f32 %v1176, 0.0
  %v1179 = vmax.f32 %v1177, 0.0
  %v1181 = vsel %vm106, %v1178, 0
  %v1184 = vsel %vm106, %v1179, 0
  %1186 = vmatpush.msra.mxu0 0.0
  %1187 = vmatpush.msra.mxu0 0.0
  %1188 = vmatpush.msra.mxu0 0.0
  %1189 = vmatpush.msra.mxu0 0.0
  %1190 = vmatpush.msra.mxu0 0.0
  %1191 = vmatpush.msra.mxu0 0.0
  %1192 = vmatpush.msra.mxu0 0.0
  %1193 = vmatpush.msra.mxu0 0.0
  %1194 = vmatpush.msra.mxu0 0.0
  %1195 = vmatpush.msra.mxu0 0.0
  %1196 = vmatpush.msra.mxu0 0.0
  %1197 = vmatpush.msra.mxu0 0.0
  %1198 = vmatpush.msra.mxu0 %v57
  %1199 = vmatpush.msra.mxu0 %v56
  %1200 = vmatpush.msra.mxu0 %v55
  %1201 = vmatpush.msra.mxu0 %v54
  %1202 = vmatmul.f32.gmra.mxu0 %v1181
  %v1203 = vpop.f32.mrf.mxu0
  %v1204 = vadd.f32 %v567, %v1203
  %1205 = vmatmul.f32.gmra.mxu0 %v1184
  %v1206 = vpop.f32.mrf.mxu0
  %v1207 = vadd.f32 %v567, %v1206
  %1208 = vdwg.mxu0
  %v1209 = vmax.f32 %v1204, 0.0
  %v1210 = vmax.f32 %v1207, 0.0
  %v1211 = vmul.f32 %v1209, %v599
  %v1212 = vmul.f32 %v1210, %v599
  %v1213 = vsel %vm106, %v1211, 0.0
  %1214 = vadd.xlane.f32.xlu0 %v1213
  %v1215 = vpop.xlane.xlu0 %1214
  %v1216 = vsel %vm106, %v1212, 0.0
  %1217 = vadd.xlane.f32.xlu0 %v1216
  %v1218 = vpop.xlane.xlu0 %1217
  %v1219 = vadd.f32 %v1215, %v608
  %v1220 = vadd.f32 %v1218, %v608
  %v1221 = vadd.f32 %v1019, %v1219
  %v1222 = vadd.f32 %v1020, %v1220
  %1224 = vset.pattern.permute.xlu0 0
  %1225 = vperm.xlu0 %1224, %v1140
  %v1226 = vpop.permute.xlu0 %1225
  %v1228 = vmul.f32 %v1226, %v618
  %v1229 = vadd.f32 %v1228, %v620
  %v1230 = vmax.f32 %v1229, 0.0
  %v1231 = vmul.f32 %v1230, %v623
  %v1232 = vsel %vm106, %v1231, 0.0
  %1233 = vadd.xlane.f32.xlu0 %v1232
  %v1234 = vpop.xlane.xlu0 %1233
  %v1235 = vadd.f32 %v1234, %v628
  %v1236 = vadd.f32 %v1034, %v1235
  %v1237 = vmul.f32 %v1167, %v403
  %v1238 = vmul.f32 %v1172, %v403
  %v1239 = vadd.f32 %v280, %v1237
  %v1240 = vadd.f32 %v281, %v1238
  %v1241 = vmax.f32 %v1239, 0.0
  %v1242 = vmax.f32 %v1240, 0.0
  %v1244 = vsel %vm106, %v1241, 0
  %v1247 = vsel %vm106, %v1242, 0
  %1249 = vmatpush.msra.mxu0 0.0
  %1250 = vmatpush.msra.mxu0 0.0
  %1251 = vmatpush.msra.mxu0 0.0
  %1252 = vmatpush.msra.mxu0 0.0
  %1253 = vmatpush.msra.mxu0 0.0
  %1254 = vmatpush.msra.mxu0 0.0
  %1255 = vmatpush.msra.mxu0 0.0
  %1256 = vmatpush.msra.mxu0 0.0
  %1257 = vmatpush.msra.mxu0 0.0
  %1258 = vmatpush.msra.mxu0 0.0
  %1259 = vmatpush.msra.mxu0 0.0
  %1260 = vmatpush.msra.mxu0 0.0
  %1261 = vmatpush.msra.mxu0 %v48
  %1262 = vmatpush.msra.mxu0 %v47
  %1263 = vmatpush.msra.mxu0 %v46
  %1264 = vmatpush.msra.mxu0 %v45
  %1265 = vmatmul.f32.gmra.mxu0 %v1244
  %v1266 = vpop.f32.mrf.mxu0
  %v1267 = vadd.f32 %v410, %v1266
  %1268 = vmatmul.f32.gmra.mxu0 %v1247
  %v1269 = vpop.f32.mrf.mxu0
  %v1270 = vadd.f32 %v410, %v1269
  %1271 = vdwg.mxu0
  %v1272 = vmax.f32 %v1267, 0.0
  %v1273 = vmax.f32 %v1270, 0.0
  %v1274 = vmul.f32 %v1272, %v442
  %v1275 = vmul.f32 %v1273, %v442
  %v1276 = vsel %vm106, %v1274, 0.0
  %1277 = vadd.xlane.f32.xlu0 %v1276
  %v1278 = vpop.xlane.xlu0 %1277
  %v1279 = vsel %vm106, %v1275, 0.0
  %1280 = vadd.xlane.f32.xlu0 %v1279
  %v1281 = vpop.xlane.xlu0 %1280
  %v1282 = vadd.f32 %v1278, %v451
  %v1283 = vadd.f32 %v1281, %v451
  %1284 = vmatpush.msra.mxu0 0.0
  %1285 = vmatpush.msra.mxu0 0.0
  %1286 = vmatpush.msra.mxu0 0.0
  %1287 = vmatpush.msra.mxu0 0.0
  %1288 = vmatpush.msra.mxu0 0.0
  %1289 = vmatpush.msra.mxu0 0.0
  %1290 = vmatpush.msra.mxu0 0.0
  %1291 = vmatpush.msra.mxu0 0.0
  %1292 = vmatpush.msra.mxu0 0.0
  %1293 = vmatpush.msra.mxu0 0.0
  %1294 = vmatpush.msra.mxu0 0.0
  %1295 = vmatpush.msra.mxu0 0.0
  %1296 = vmatpush.msra.mxu0 0.0
  %1297 = vmatpush.msra.mxu0 0.0
  %1298 = vmatpush.msra.mxu0 %v1283
  %1299 = vmatpush.msra.mxu0 %v1282
  %1300 = vmatmul.f32.gmra.mxu0 %v456
  %v1301 = vpop.f32.mrf.mxu0
  %v1302 = vadd.f32 0.0, %v1301
  %1303 = vdwg.mxu0
  %1305 = vset.pattern.permute.xlu0 0
  %1306 = vperm.xlu0 %1305, %v1302
  %v1307 = vpop.permute.xlu0 %1306
  %v1309 = vmul.f32 %v1307, %v483
  %v1310 = vadd.f32 %v368, %v1309
  %v1311 = vmul.f32 %v1226, %v491
  %v1312 = vadd.f32 %v1310, %v1311
  %v1313 = vmax.f32 %v1312, 0.0
  %v1315 = vsel %vm106, %v1313, 0
  %1317 = vmatpush.msra.mxu0 0.0
  %1318 = vmatpush.msra.mxu0 0.0
  %1319 = vmatpush.msra.mxu0 0.0
  %1320 = vmatpush.msra.mxu0 0.0
  %1321 = vmatpush.msra.mxu0 0.0
  %1322 = vmatpush.msra.mxu0 0.0
  %1323 = vmatpush.msra.mxu0 0.0
  %1324 = vmatpush.msra.mxu0 0.0
  %1325 = vmatpush.msra.mxu0 0.0
  %1326 = vmatpush.msra.mxu0 0.0
  %1327 = vmatpush.msra.mxu0 0.0
  %1328 = vmatpush.msra.mxu0 0.0
  %1329 = vmatpush.msra.mxu0 %v67
  %1330 = vmatpush.msra.mxu0 %v66
  %1331 = vmatpush.msra.mxu0 %v65
  %1332 = vmatpush.msra.mxu0 %v64
  %1333 = vmatmul.f32.gmra.mxu0 %v1315
  %v1334 = vpop.f32.mrf.mxu0
  %v1335 = vadd.f32 %v495, %v1334
  %1336 = vdwg.mxu0
  %v1337 = vmax.f32 %v1335, 0.0
  %v1338 = vmul.f32 %v1337, %v520
  %v1339 = vsel %vm106, %v1338, 0.0
  %1340 = vadd.xlane.f32.xlu0 %v1339
  %v1341 = vpop.xlane.xlu0 %1340
  %v1342 = vadd.f32 %v1341, %v525
  %1343 = vmatpush.msra.mxu0 0.0
  %1344 = vmatpush.msra.mxu0 0.0
  %1345 = vmatpush.msra.mxu0 0.0
  %1346 = vmatpush.msra.mxu0 0.0
  %1347 = vmatpush.msra.mxu0 0.0
  %1348 = vmatpush.msra.mxu0 0.0
  %1349 = vmatpush.msra.mxu0 0.0
  %1350 = vmatpush.msra.mxu0 0.0
  %1351 = vmatpush.msra.mxu0 0.0
  %1352 = vmatpush.msra.mxu0 0.0
  %1353 = vmatpush.msra.mxu0 0.0
  %1354 = vmatpush.msra.mxu0 0.0
  %1355 = vmatpush.msra.mxu0 0.0
  %1356 = vmatpush.msra.mxu0 0.0
  %1357 = vmatpush.msra.mxu0 0.0
  %1358 = vmatpush.msra.mxu0 %v1342
  %1359 = vmatmul.f32.gmra.mxu0 %v140
  %v1360 = vpop.f32.mrf.mxu0
  %v1361 = vadd.f32 0.0, %v1360
  %1362 = vmatmul.f32.gmra.mxu0 %v143
  %v1363 = vpop.f32.mrf.mxu0
  %v1364 = vadd.f32 0.0, %v1363
  %1365 = vdwg.mxu0
  %1367 = vset.pattern.permute.xlu0 0
  %1368 = vperm.xlu0 %1367, %v1361
  %v1369 = vpop.permute.xlu0 %1368
  %1372 = vset.pattern.permute.xlu0 0
  %1373 = vperm.xlu0 %1372, %v1364
  %v1374 = vpop.permute.xlu0 %1373
  %v1376 = vmul.f32 %v1369, %v560
  %v1377 = vmul.f32 %v1374, %v560
  %v1378 = vadd.f32 %v343, %v1376
  %v1379 = vadd.f32 %v344, %v1377
  %v1380 = vmax.f32 %v1378, 0.0
  %v1381 = vmax.f32 %v1379, 0.0
  %v1383 = vsel %vm106, %v1380, 0
  %v1386 = vsel %vm106, %v1381, 0
  %1388 = vmatpush.msra.mxu0 0.0
  %1389 = vmatpush.msra.mxu0 0.0
  %1390 = vmatpush.msra.mxu0 0.0
  %1391 = vmatpush.msra.mxu0 0.0
  %1392 = vmatpush.msra.mxu0 0.0
  %1393 = vmatpush.msra.mxu0 0.0
  %1394 = vmatpush.msra.mxu0 0.0
  %1395 = vmatpush.msra.mxu0 0.0
  %1396 = vmatpush.msra.mxu0 0.0
  %1397 = vmatpush.msra.mxu0 0.0
  %1398 = vmatpush.msra.mxu0 0.0
  %1399 = vmatpush.msra.mxu0 0.0
  %1400 = vmatpush.msra.mxu0 %v57
  %1401 = vmatpush.msra.mxu0 %v56
  %1402 = vmatpush.msra.mxu0 %v55
  %1403 = vmatpush.msra.mxu0 %v54
  %1404 = vmatmul.f32.gmra.mxu0 %v1383
  %v1405 = vpop.f32.mrf.mxu0
  %v1406 = vadd.f32 %v567, %v1405
  %1407 = vmatmul.f32.gmra.mxu0 %v1386
  %v1408 = vpop.f32.mrf.mxu0
  %v1409 = vadd.f32 %v567, %v1408
  %1410 = vdwg.mxu0
  %v1411 = vmax.f32 %v1406, 0.0
  %v1412 = vmax.f32 %v1409, 0.0
  %v1413 = vmul.f32 %v1411, %v599
  %v1414 = vmul.f32 %v1412, %v599
  %v1415 = vsel %vm106, %v1413, 0.0
  %1416 = vadd.xlane.f32.xlu0 %v1415
  %v1417 = vpop.xlane.xlu0 %1416
  %v1418 = vsel %vm106, %v1414, 0.0
  %1419 = vadd.xlane.f32.xlu0 %v1418
  %v1420 = vpop.xlane.xlu0 %1419
  %v1421 = vadd.f32 %v1417, %v608
  %v1422 = vadd.f32 %v1420, %v608
  %v1423 = vadd.f32 %v1221, %v1421
  %v1424 = vadd.f32 %v1222, %v1422
  %1426 = vset.pattern.permute.xlu0 0
  %1427 = vperm.xlu0 %1426, %v1342
  %v1428 = vpop.permute.xlu0 %1427
  %v1430 = vmul.f32 %v1428, %v618
  %v1431 = vadd.f32 %v1430, %v620
  %v1432 = vmax.f32 %v1431, 0.0
  %v1433 = vmul.f32 %v1432, %v623
  %v1434 = vsel %vm106, %v1433, 0.0
  %1435 = vadd.xlane.f32.xlu0 %v1434
  %v1436 = vpop.xlane.xlu0 %1435
  %v1437 = vadd.f32 %v1436, %v628
  %v1438 = vadd.f32 %v1236, %v1437
  %v1439 = vmul.f32 %v1369, %v403
  %v1440 = vmul.f32 %v1374, %v403
  %v1441 = vadd.f32 %v280, %v1439
  %v1442 = vadd.f32 %v281, %v1440
  %v1443 = vmax.f32 %v1441, 0.0
  %v1444 = vmax.f32 %v1442, 0.0
  %v1446 = vsel %vm106, %v1443, 0
  %v1449 = vsel %vm106, %v1444, 0
  %1451 = vmatpush.msra.mxu0 0.0
  %1452 = vmatpush.msra.mxu0 0.0
  %1453 = vmatpush.msra.mxu0 0.0
  %1454 = vmatpush.msra.mxu0 0.0
  %1455 = vmatpush.msra.mxu0 0.0
  %1456 = vmatpush.msra.mxu0 0.0
  %1457 = vmatpush.msra.mxu0 0.0
  %1458 = vmatpush.msra.mxu0 0.0
  %1459 = vmatpush.msra.mxu0 0.0
  %1460 = vmatpush.msra.mxu0 0.0
  %1461 = vmatpush.msra.mxu0 0.0
  %1462 = vmatpush.msra.mxu0 0.0
  %1463 = vmatpush.msra.mxu0 %v48
  %1464 = vmatpush.msra.mxu0 %v47
  %1465 = vmatpush.msra.mxu0 %v46
  %1466 = vmatpush.msra.mxu0 %v45
  %1467 = vmatmul.f32.gmra.mxu0 %v1446
  %v1468 = vpop.f32.mrf.mxu0
  %v1469 = vadd.f32 %v410, %v1468
  %1470 = vmatmul.f32.gmra.mxu0 %v1449
  %v1471 = vpop.f32.mrf.mxu0
  %v1472 = vadd.f32 %v410, %v1471
  %1473 = vdwg.mxu0
  %v1474 = vmax.f32 %v1469, 0.0
  %v1475 = vmax.f32 %v1472, 0.0
  %v1476 = vmul.f32 %v1474, %v442
  %v1477 = vmul.f32 %v1475, %v442
  %v1478 = vsel %vm106, %v1476, 0.0
  %1479 = vadd.xlane.f32.xlu0 %v1478
  %v1480 = vpop.xlane.xlu0 %1479
  %v1481 = vsel %vm106, %v1477, 0.0
  %1482 = vadd.xlane.f32.xlu0 %v1481
  %v1483 = vpop.xlane.xlu0 %1482
  %v1484 = vadd.f32 %v1480, %v451
  %v1485 = vadd.f32 %v1483, %v451
  %1486 = vmatpush.msra.mxu0 0.0
  %1487 = vmatpush.msra.mxu0 0.0
  %1488 = vmatpush.msra.mxu0 0.0
  %1489 = vmatpush.msra.mxu0 0.0
  %1490 = vmatpush.msra.mxu0 0.0
  %1491 = vmatpush.msra.mxu0 0.0
  %1492 = vmatpush.msra.mxu0 0.0
  %1493 = vmatpush.msra.mxu0 0.0
  %1494 = vmatpush.msra.mxu0 0.0
  %1495 = vmatpush.msra.mxu0 0.0
  %1496 = vmatpush.msra.mxu0 0.0
  %1497 = vmatpush.msra.mxu0 0.0
  %1498 = vmatpush.msra.mxu0 0.0
  %1499 = vmatpush.msra.mxu0 0.0
  %1500 = vmatpush.msra.mxu0 %v1485
  %1501 = vmatpush.msra.mxu0 %v1484
  %1502 = vmatmul.f32.gmra.mxu0 %v456
  %v1503 = vpop.f32.mrf.mxu0
  %v1504 = vadd.f32 0.0, %v1503
  %1505 = vdwg.mxu0
  %1507 = vset.pattern.permute.xlu0 0
  %1508 = vperm.xlu0 %1507, %v1504
  %v1509 = vpop.permute.xlu0 %1508
  %v1511 = vmul.f32 %v1509, %v483
  %v1512 = vadd.f32 %v368, %v1511
  %v1513 = vmul.f32 %v1428, %v491
  %v1514 = vadd.f32 %v1512, %v1513
  %v1515 = vmax.f32 %v1514, 0.0
  %v1517 = vsel %vm106, %v1515, 0
  %1519 = vmatpush.msra.mxu0 0.0
  %1520 = vmatpush.msra.mxu0 0.0
  %1521 = vmatpush.msra.mxu0 0.0
  %1522 = vmatpush.msra.mxu0 0.0
  %1523 = vmatpush.msra.mxu0 0.0
  %1524 = vmatpush.msra.mxu0 0.0
  %1525 = vmatpush.msra.mxu0 0.0
  %1526 = vmatpush.msra.mxu0 0.0
  %1527 = vmatpush.msra.mxu0 0.0
  %1528 = vmatpush.msra.mxu0 0.0
  %1529 = vmatpush.msra.mxu0 0.0
  %1530 = vmatpush.msra.mxu0 0.0
  %1531 = vmatpush.msra.mxu0 %v67
  %1532 = vmatpush.msra.mxu0 %v66
  %1533 = vmatpush.msra.mxu0 %v65
  %1534 = vmatpush.msra.mxu0 %v64
  %1535 = vmatmul.f32.gmra.mxu0 %v1517
  %v1536 = vpop.f32.mrf.mxu0
  %v1537 = vadd.f32 %v495, %v1536
  %1538 = vdwg.mxu0
  %v1539 = vmax.f32 %v1537, 0.0
  %v1540 = vmul.f32 %v1539, %v520
  %v1541 = vsel %vm106, %v1540, 0.0
  %1542 = vadd.xlane.f32.xlu0 %v1541
  %v1543 = vpop.xlane.xlu0 %1542
  %v1544 = vadd.f32 %v1543, %v525
  %1545 = vmatpush.msra.mxu0 0.0
  %1546 = vmatpush.msra.mxu0 0.0
  %1547 = vmatpush.msra.mxu0 0.0
  %1548 = vmatpush.msra.mxu0 0.0
  %1549 = vmatpush.msra.mxu0 0.0
  %1550 = vmatpush.msra.mxu0 0.0
  %1551 = vmatpush.msra.mxu0 0.0
  %1552 = vmatpush.msra.mxu0 0.0
  %1553 = vmatpush.msra.mxu0 0.0
  %1554 = vmatpush.msra.mxu0 0.0
  %1555 = vmatpush.msra.mxu0 0.0
  %1556 = vmatpush.msra.mxu0 0.0
  %1557 = vmatpush.msra.mxu0 0.0
  %1558 = vmatpush.msra.mxu0 0.0
  %1559 = vmatpush.msra.mxu0 0.0
  %1560 = vmatpush.msra.mxu0 %v1544
  %1561 = vmatmul.f32.gmra.mxu0 %v140
  %v1562 = vpop.f32.mrf.mxu0
  %v1563 = vadd.f32 0.0, %v1562
  %1564 = vmatmul.f32.gmra.mxu0 %v143
  %v1565 = vpop.f32.mrf.mxu0
  %v1566 = vadd.f32 0.0, %v1565
  %1567 = vdwg.mxu0
  %1569 = vset.pattern.permute.xlu0 0
  %1570 = vperm.xlu0 %1569, %v1563
  %v1571 = vpop.permute.xlu0 %1570
  %1574 = vset.pattern.permute.xlu0 0
  %1575 = vperm.xlu0 %1574, %v1566
  %v1576 = vpop.permute.xlu0 %1575
  %v1578 = vmul.f32 %v1571, %v560
  %v1579 = vmul.f32 %v1576, %v560
  %v1580 = vadd.f32 %v343, %v1578
  %v1581 = vadd.f32 %v344, %v1579
  %v1582 = vmax.f32 %v1580, 0.0
  %v1583 = vmax.f32 %v1581, 0.0
  %v1585 = vsel %vm106, %v1582, 0
  %v1588 = vsel %vm106, %v1583, 0
  %1590 = vmatpush.msra.mxu0 0.0
  %1591 = vmatpush.msra.mxu0 0.0
  %1592 = vmatpush.msra.mxu0 0.0
  %1593 = vmatpush.msra.mxu0 0.0
  %1594 = vmatpush.msra.mxu0 0.0
  %1595 = vmatpush.msra.mxu0 0.0
  %1596 = vmatpush.msra.mxu0 0.0
  %1597 = vmatpush.msra.mxu0 0.0
  %1598 = vmatpush.msra.mxu0 0.0
  %1599 = vmatpush.msra.mxu0 0.0
  %1600 = vmatpush.msra.mxu0 0.0
  %1601 = vmatpush.msra.mxu0 0.0
  %1602 = vmatpush.msra.mxu0 %v57
  %1603 = vmatpush.msra.mxu0 %v56
  %1604 = vmatpush.msra.mxu0 %v55
  %1605 = vmatpush.msra.mxu0 %v54
  %1606 = vmatmul.f32.gmra.mxu0 %v1585
  %v1607 = vpop.f32.mrf.mxu0
  %v1608 = vadd.f32 %v567, %v1607
  %1609 = vmatmul.f32.gmra.mxu0 %v1588
  %v1610 = vpop.f32.mrf.mxu0
  %v1611 = vadd.f32 %v567, %v1610
  %1612 = vdwg.mxu0
  %v1613 = vmax.f32 %v1608, 0.0
  %v1614 = vmax.f32 %v1611, 0.0
  %v1615 = vmul.f32 %v1613, %v599
  %v1616 = vmul.f32 %v1614, %v599
  %v1617 = vsel %vm106, %v1615, 0.0
  %1618 = vadd.xlane.f32.xlu0 %v1617
  %v1619 = vpop.xlane.xlu0 %1618
  %v1620 = vsel %vm106, %v1616, 0.0
  %1621 = vadd.xlane.f32.xlu0 %v1620
  %v1622 = vpop.xlane.xlu0 %1621
  %v1623 = vadd.f32 %v1619, %v608
  %v1624 = vadd.f32 %v1622, %v608
  %v1625 = vadd.f32 %v1423, %v1623
  %v1626 = vadd.f32 %v1424, %v1624
  %1628 = vset.pattern.permute.xlu0 0
  %1629 = vperm.xlu0 %1628, %v1544
  %v1630 = vpop.permute.xlu0 %1629
  %v1632 = vmul.f32 %v1630, %v618
  %v1633 = vadd.f32 %v1632, %v620
  %v1634 = vmax.f32 %v1633, 0.0
  %v1635 = vmul.f32 %v1634, %v623
  %v1636 = vsel %vm106, %v1635, 0.0
  %1637 = vadd.xlane.f32.xlu0 %v1636
  %v1638 = vpop.xlane.xlu0 %1637
  %v1639 = vadd.f32 %v1638, %v628
  %v1640 = vadd.f32 %v1438, %v1639
  %v1641 = vmul.f32 %v1571, %v403
  %v1642 = vmul.f32 %v1576, %v403
  %v1643 = vadd.f32 %v280, %v1641
  %v1644 = vadd.f32 %v281, %v1642
  %v1645 = vmax.f32 %v1643, 0.0
  %v1646 = vmax.f32 %v1644, 0.0
  %v1648 = vsel %vm106, %v1645, 0
  %v1651 = vsel %vm106, %v1646, 0
  %1653 = vmatpush.msra.mxu0 0.0
  %1654 = vmatpush.msra.mxu0 0.0
  %1655 = vmatpush.msra.mxu0 0.0
  %1656 = vmatpush.msra.mxu0 0.0
  %1657 = vmatpush.msra.mxu0 0.0
  %1658 = vmatpush.msra.mxu0 0.0
  %1659 = vmatpush.msra.mxu0 0.0
  %1660 = vmatpush.msra.mxu0 0.0
  %1661 = vmatpush.msra.mxu0 0.0
  %1662 = vmatpush.msra.mxu0 0.0
  %1663 = vmatpush.msra.mxu0 0.0
  %1664 = vmatpush.msra.mxu0 0.0
  %1665 = vmatpush.msra.mxu0 %v48
  %1666 = vmatpush.msra.mxu0 %v47
  %1667 = vmatpush.msra.mxu0 %v46
  %1668 = vmatpush.msra.mxu0 %v45
  %1669 = vmatmul.f32.gmra.mxu0 %v1648
  %v1670 = vpop.f32.mrf.mxu0
  %v1671 = vadd.f32 %v410, %v1670
  %1672 = vmatmul.f32.gmra.mxu0 %v1651
  %v1673 = vpop.f32.mrf.mxu0
  %v1674 = vadd.f32 %v410, %v1673
  %1675 = vdwg.mxu0
  %v1676 = vmax.f32 %v1671, 0.0
  %v1677 = vmax.f32 %v1674, 0.0
  %v1678 = vmul.f32 %v1676, %v442
  %v1679 = vmul.f32 %v1677, %v442
  %v1680 = vsel %vm106, %v1678, 0.0
  %1681 = vadd.xlane.f32.xlu0 %v1680
  %v1682 = vpop.xlane.xlu0 %1681
  %v1683 = vsel %vm106, %v1679, 0.0
  %1684 = vadd.xlane.f32.xlu0 %v1683
  %v1685 = vpop.xlane.xlu0 %1684
  %v1686 = vadd.f32 %v1682, %v451
  %v1687 = vadd.f32 %v1685, %v451
  %1688 = vmatpush.msra.mxu0 0.0
  %1689 = vmatpush.msra.mxu0 0.0
  %1690 = vmatpush.msra.mxu0 0.0
  %1691 = vmatpush.msra.mxu0 0.0
  %1692 = vmatpush.msra.mxu0 0.0
  %1693 = vmatpush.msra.mxu0 0.0
  %1694 = vmatpush.msra.mxu0 0.0
  %1695 = vmatpush.msra.mxu0 0.0
  %1696 = vmatpush.msra.mxu0 0.0
  %1697 = vmatpush.msra.mxu0 0.0
  %1698 = vmatpush.msra.mxu0 0.0
  %1699 = vmatpush.msra.mxu0 0.0
  %1700 = vmatpush.msra.mxu0 0.0
  %1701 = vmatpush.msra.mxu0 0.0
  %1702 = vmatpush.msra.mxu0 %v1687
  %1703 = vmatpush.msra.mxu0 %v1686
  %1704 = vmatmul.f32.gmra.mxu0 %v456
  %v1705 = vpop.f32.mrf.mxu0
  %v1706 = vadd.f32 0.0, %v1705
  %1707 = vdwg.mxu0
  %1709 = vset.pattern.permute.xlu0 0
  %1710 = vperm.xlu0 %1709, %v1706
  %v1711 = vpop.permute.xlu0 %1710
  %v1713 = vmul.f32 %v1711, %v483
  %v1714 = vadd.f32 %v368, %v1713
  %v1715 = vmul.f32 %v1630, %v491
  %v1716 = vadd.f32 %v1714, %v1715
  %v1717 = vmax.f32 %v1716, 0.0
  %v1719 = vsel %vm106, %v1717, 0
  %1721 = vmatpush.msra.mxu0 0.0
  %1722 = vmatpush.msra.mxu0 0.0
  %1723 = vmatpush.msra.mxu0 0.0
  %1724 = vmatpush.msra.mxu0 0.0
  %1725 = vmatpush.msra.mxu0 0.0
  %1726 = vmatpush.msra.mxu0 0.0
  %1727 = vmatpush.msra.mxu0 0.0
  %1728 = vmatpush.msra.mxu0 0.0
  %1729 = vmatpush.msra.mxu0 0.0
  %1730 = vmatpush.msra.mxu0 0.0
  %1731 = vmatpush.msra.mxu0 0.0
  %1732 = vmatpush.msra.mxu0 0.0
  %1733 = vmatpush.msra.mxu0 %v67
  %1734 = vmatpush.msra.mxu0 %v66
  %1735 = vmatpush.msra.mxu0 %v65
  %1736 = vmatpush.msra.mxu0 %v64
  %1737 = vmatmul.f32.gmra.mxu0 %v1719
  %v1738 = vpop.f32.mrf.mxu0
  %v1739 = vadd.f32 %v495, %v1738
  %1740 = vdwg.mxu0
  %v1741 = vmax.f32 %v1739, 0.0
  %v1742 = vmul.f32 %v1741, %v520
  %v1743 = vsel %vm106, %v1742, 0.0
  %1744 = vadd.xlane.f32.xlu0 %v1743
  %v1745 = vpop.xlane.xlu0 %1744
  %v1746 = vadd.f32 %v1745, %v525
  %1747 = vmatpush.msra.mxu0 0.0
  %1748 = vmatpush.msra.mxu0 0.0
  %1749 = vmatpush.msra.mxu0 0.0
  %1750 = vmatpush.msra.mxu0 0.0
  %1751 = vmatpush.msra.mxu0 0.0
  %1752 = vmatpush.msra.mxu0 0.0
  %1753 = vmatpush.msra.mxu0 0.0
  %1754 = vmatpush.msra.mxu0 0.0
  %1755 = vmatpush.msra.mxu0 0.0
  %1756 = vmatpush.msra.mxu0 0.0
  %1757 = vmatpush.msra.mxu0 0.0
  %1758 = vmatpush.msra.mxu0 0.0
  %1759 = vmatpush.msra.mxu0 0.0
  %1760 = vmatpush.msra.mxu0 0.0
  %1761 = vmatpush.msra.mxu0 0.0
  %1762 = vmatpush.msra.mxu0 %v1746
  %1763 = vmatmul.f32.gmra.mxu0 %v140
  %v1764 = vpop.f32.mrf.mxu0
  %v1765 = vadd.f32 0.0, %v1764
  %1766 = vmatmul.f32.gmra.mxu0 %v143
  %v1767 = vpop.f32.mrf.mxu0
  %v1768 = vadd.f32 0.0, %v1767
  %1769 = vdwg.mxu0
  %1771 = vset.pattern.permute.xlu0 0
  %1772 = vperm.xlu0 %1771, %v1765
  %v1773 = vpop.permute.xlu0 %1772
  %1776 = vset.pattern.permute.xlu0 0
  %1777 = vperm.xlu0 %1776, %v1768
  %v1778 = vpop.permute.xlu0 %1777
  %v1780 = vmul.f32 %v1773, %v560
  %v1781 = vmul.f32 %v1778, %v560
  %v1782 = vadd.f32 %v343, %v1780
  %v1783 = vadd.f32 %v344, %v1781
  %v1784 = vmax.f32 %v1782, 0.0
  %v1785 = vmax.f32 %v1783, 0.0
  %v1787 = vsel %vm106, %v1784, 0
  %v1790 = vsel %vm106, %v1785, 0
  %1792 = vmatpush.msra.mxu0 0.0
  %1793 = vmatpush.msra.mxu0 0.0
  %1794 = vmatpush.msra.mxu0 0.0
  %1795 = vmatpush.msra.mxu0 0.0
  %1796 = vmatpush.msra.mxu0 0.0
  %1797 = vmatpush.msra.mxu0 0.0
  %1798 = vmatpush.msra.mxu0 0.0
  %1799 = vmatpush.msra.mxu0 0.0
  %1800 = vmatpush.msra.mxu0 0.0
  %1801 = vmatpush.msra.mxu0 0.0
  %1802 = vmatpush.msra.mxu0 0.0
  %1803 = vmatpush.msra.mxu0 0.0
  %1804 = vmatpush.msra.mxu0 %v57
  %1805 = vmatpush.msra.mxu0 %v56
  %1806 = vmatpush.msra.mxu0 %v55
  %1807 = vmatpush.msra.mxu0 %v54
  %1808 = vmatmul.f32.gmra.mxu0 %v1787
  %v1809 = vpop.f32.mrf.mxu0
  %v1810 = vadd.f32 %v567, %v1809
  %1811 = vmatmul.f32.gmra.mxu0 %v1790
  %v1812 = vpop.f32.mrf.mxu0
  %v1813 = vadd.f32 %v567, %v1812
  %1814 = vdwg.mxu0
  %v1815 = vmax.f32 %v1810, 0.0
  %v1816 = vmax.f32 %v1813, 0.0
  %v1817 = vmul.f32 %v1815, %v599
  %v1818 = vmul.f32 %v1816, %v599
  %v1819 = vsel %vm106, %v1817, 0.0
  %1820 = vadd.xlane.f32.xlu0 %v1819
  %v1821 = vpop.xlane.xlu0 %1820
  %v1822 = vsel %vm106, %v1818, 0.0
  %1823 = vadd.xlane.f32.xlu0 %v1822
  %v1824 = vpop.xlane.xlu0 %1823
  %v1825 = vadd.f32 %v1821, %v608
  %v1826 = vadd.f32 %v1824, %v608
  %v1827 = vadd.f32 %v1625, %v1825
  %v1828 = vadd.f32 %v1626, %v1826
  %1830 = vset.pattern.permute.xlu0 0
  %1831 = vperm.xlu0 %1830, %v1746
  %v1832 = vpop.permute.xlu0 %1831
  %v1834 = vmul.f32 %v1832, %v618
  %v1835 = vadd.f32 %v1834, %v620
  %v1836 = vmax.f32 %v1835, 0.0
  %v1837 = vmul.f32 %v1836, %v623
  %v1838 = vsel %vm106, %v1837, 0.0
  %1839 = vadd.xlane.f32.xlu0 %v1838
  %v1840 = vpop.xlane.xlu0 %1839
  %v1841 = vadd.f32 %v1840, %v628
  %v1842 = vadd.f32 %v1640, %v1841
  %v1843 = vmul.f32 %v1773, %v403
  %v1844 = vmul.f32 %v1778, %v403
  %v1845 = vadd.f32 %v280, %v1843
  %v1846 = vadd.f32 %v281, %v1844
  %v1847 = vmax.f32 %v1845, 0.0
  %v1848 = vmax.f32 %v1846, 0.0
  %v1850 = vsel %vm106, %v1847, 0
  %v1853 = vsel %vm106, %v1848, 0
  %1855 = vmatpush.msra.mxu0 0.0
  %1856 = vmatpush.msra.mxu0 0.0
  %1857 = vmatpush.msra.mxu0 0.0
  %1858 = vmatpush.msra.mxu0 0.0
  %1859 = vmatpush.msra.mxu0 0.0
  %1860 = vmatpush.msra.mxu0 0.0
  %1861 = vmatpush.msra.mxu0 0.0
  %1862 = vmatpush.msra.mxu0 0.0
  %1863 = vmatpush.msra.mxu0 0.0
  %1864 = vmatpush.msra.mxu0 0.0
  %1865 = vmatpush.msra.mxu0 0.0
  %1866 = vmatpush.msra.mxu0 0.0
  %1867 = vmatpush.msra.mxu0 %v48
  %1868 = vmatpush.msra.mxu0 %v47
  %1869 = vmatpush.msra.mxu0 %v46
  %1870 = vmatpush.msra.mxu0 %v45
  %1871 = vmatmul.f32.gmra.mxu0 %v1850
  %v1872 = vpop.f32.mrf.mxu0
  %v1873 = vadd.f32 %v410, %v1872
  %1874 = vmatmul.f32.gmra.mxu0 %v1853
  %v1875 = vpop.f32.mrf.mxu0
  %v1876 = vadd.f32 %v410, %v1875
  %1877 = vdwg.mxu0
  %v1878 = vmax.f32 %v1873, 0.0
  %v1879 = vmax.f32 %v1876, 0.0
  %v1880 = vmul.f32 %v1878, %v442
  %v1881 = vmul.f32 %v1879, %v442
  %v1882 = vsel %vm106, %v1880, 0.0
  %1883 = vadd.xlane.f32.xlu0 %v1882
  %v1884 = vpop.xlane.xlu0 %1883
  %v1885 = vsel %vm106, %v1881, 0.0
  %1886 = vadd.xlane.f32.xlu0 %v1885
  %v1887 = vpop.xlane.xlu0 %1886
  %v1888 = vadd.f32 %v1884, %v451
  %v1889 = vadd.f32 %v1887, %v451
  %1890 = vmatpush.msra.mxu0 0.0
  %1891 = vmatpush.msra.mxu0 0.0
  %1892 = vmatpush.msra.mxu0 0.0
  %1893 = vmatpush.msra.mxu0 0.0
  %1894 = vmatpush.msra.mxu0 0.0
  %1895 = vmatpush.msra.mxu0 0.0
  %1896 = vmatpush.msra.mxu0 0.0
  %1897 = vmatpush.msra.mxu0 0.0
  %1898 = vmatpush.msra.mxu0 0.0
  %1899 = vmatpush.msra.mxu0 0.0
  %1900 = vmatpush.msra.mxu0 0.0
  %1901 = vmatpush.msra.mxu0 0.0
  %1902 = vmatpush.msra.mxu0 0.0
  %1903 = vmatpush.msra.mxu0 0.0
  %1904 = vmatpush.msra.mxu0 %v1889
  %1905 = vmatpush.msra.mxu0 %v1888
  %1906 = vmatmul.f32.gmra.mxu0 %v456
  %v1907 = vpop.f32.mrf.mxu0
  %v1908 = vadd.f32 0.0, %v1907
  %1909 = vdwg.mxu0
  %1911 = vset.pattern.permute.xlu0 0
  %1912 = vperm.xlu0 %1911, %v1908
  %v1913 = vpop.permute.xlu0 %1912
  %v1915 = vmul.f32 %v1913, %v483
  %v1916 = vadd.f32 %v368, %v1915
  %v1917 = vmul.f32 %v1832, %v491
  %v1918 = vadd.f32 %v1916, %v1917
  %v1919 = vmax.f32 %v1918, 0.0
  %v1921 = vsel %vm106, %v1919, 0
  %1923 = vmatpush.msra.mxu0 0.0
  %1924 = vmatpush.msra.mxu0 0.0
  %1925 = vmatpush.msra.mxu0 0.0
  %1926 = vmatpush.msra.mxu0 0.0
  %1927 = vmatpush.msra.mxu0 0.0
  %1928 = vmatpush.msra.mxu0 0.0
  %1929 = vmatpush.msra.mxu0 0.0
  %1930 = vmatpush.msra.mxu0 0.0
  %1931 = vmatpush.msra.mxu0 0.0
  %1932 = vmatpush.msra.mxu0 0.0
  %1933 = vmatpush.msra.mxu0 0.0
  %1934 = vmatpush.msra.mxu0 0.0
  %1935 = vmatpush.msra.mxu0 %v67
  %1936 = vmatpush.msra.mxu0 %v66
  %1937 = vmatpush.msra.mxu0 %v65
  %1938 = vmatpush.msra.mxu0 %v64
  %1939 = vmatmul.f32.gmra.mxu0 %v1921
  %v1940 = vpop.f32.mrf.mxu0
  %v1941 = vadd.f32 %v495, %v1940
  %1942 = vdwg.mxu0
  %v1943 = vmax.f32 %v1941, 0.0
  %v1944 = vmul.f32 %v1943, %v520
  %v1945 = vsel %vm106, %v1944, 0.0
  %1946 = vadd.xlane.f32.xlu0 %v1945
  %v1947 = vpop.xlane.xlu0 %1946
  %v1948 = vadd.f32 %v1947, %v525
  %1949 = vmatpush.msra.mxu0 0.0
  %1950 = vmatpush.msra.mxu0 0.0
  %1951 = vmatpush.msra.mxu0 0.0
  %1952 = vmatpush.msra.mxu0 0.0
  %1953 = vmatpush.msra.mxu0 0.0
  %1954 = vmatpush.msra.mxu0 0.0
  %1955 = vmatpush.msra.mxu0 0.0
  %1956 = vmatpush.msra.mxu0 0.0
  %1957 = vmatpush.msra.mxu0 0.0
  %1958 = vmatpush.msra.mxu0 0.0
  %1959 = vmatpush.msra.mxu0 0.0
  %1960 = vmatpush.msra.mxu0 0.0
  %1961 = vmatpush.msra.mxu0 0.0
  %1962 = vmatpush.msra.mxu0 0.0
  %1963 = vmatpush.msra.mxu0 0.0
  %1964 = vmatpush.msra.mxu0 %v1948
  %1965 = vmatmul.f32.gmra.mxu0 %v140
  %v1966 = vpop.f32.mrf.mxu0
  %v1967 = vadd.f32 0.0, %v1966
  %1968 = vmatmul.f32.gmra.mxu0 %v143
  %v1969 = vpop.f32.mrf.mxu0
  %v1970 = vadd.f32 0.0, %v1969
  %1971 = vdwg.mxu0
  %1973 = vset.pattern.permute.xlu0 0
  %1974 = vperm.xlu0 %1973, %v1967
  %v1975 = vpop.permute.xlu0 %1974
  %1978 = vset.pattern.permute.xlu0 0
  %1979 = vperm.xlu0 %1978, %v1970
  %v1980 = vpop.permute.xlu0 %1979
  %v1982 = vmul.f32 %v1975, %v560
  %v1983 = vmul.f32 %v1980, %v560
  %v1984 = vadd.f32 %v343, %v1982
  %v1985 = vadd.f32 %v344, %v1983
  %v1986 = vmax.f32 %v1984, 0.0
  %v1987 = vmax.f32 %v1985, 0.0
  %v1989 = vsel %vm106, %v1986, 0
  %v1992 = vsel %vm106, %v1987, 0
  %1994 = vmatpush.msra.mxu0 0.0
  %1995 = vmatpush.msra.mxu0 0.0
  %1996 = vmatpush.msra.mxu0 0.0
  %1997 = vmatpush.msra.mxu0 0.0
  %1998 = vmatpush.msra.mxu0 0.0
  %1999 = vmatpush.msra.mxu0 0.0
  %2000 = vmatpush.msra.mxu0 0.0
  %2001 = vmatpush.msra.mxu0 0.0
  %2002 = vmatpush.msra.mxu0 0.0
  %2003 = vmatpush.msra.mxu0 0.0
  %2004 = vmatpush.msra.mxu0 0.0
  %2005 = vmatpush.msra.mxu0 0.0
  %2006 = vmatpush.msra.mxu0 %v57
  %2007 = vmatpush.msra.mxu0 %v56
  %2008 = vmatpush.msra.mxu0 %v55
  %2009 = vmatpush.msra.mxu0 %v54
  %2010 = vmatmul.f32.gmra.mxu0 %v1989
  %v2011 = vpop.f32.mrf.mxu0
  %v2012 = vadd.f32 %v567, %v2011
  %2013 = vmatmul.f32.gmra.mxu0 %v1992
  %v2014 = vpop.f32.mrf.mxu0
  %v2015 = vadd.f32 %v567, %v2014
  %2016 = vdwg.mxu0
  %v2017 = vmax.f32 %v2012, 0.0
  %v2018 = vmax.f32 %v2015, 0.0
  %v2019 = vmul.f32 %v2017, %v599
  %v2020 = vmul.f32 %v2018, %v599
  %v2021 = vsel %vm106, %v2019, 0.0
  %2022 = vadd.xlane.f32.xlu0 %v2021
  %v2023 = vpop.xlane.xlu0 %2022
  %v2024 = vsel %vm106, %v2020, 0.0
  %2025 = vadd.xlane.f32.xlu0 %v2024
  %v2026 = vpop.xlane.xlu0 %2025
  %v2027 = vadd.f32 %v2023, %v608
  %v2028 = vadd.f32 %v2026, %v608
  %v2029 = vadd.f32 %v1827, %v2027
  %v2030 = vadd.f32 %v1828, %v2028
  %2032 = vset.pattern.permute.xlu0 0
  %2033 = vperm.xlu0 %2032, %v1948
  %v2034 = vpop.permute.xlu0 %2033
  %v2036 = vmul.f32 %v2034, %v618
  %v2037 = vadd.f32 %v2036, %v620
  %v2038 = vmax.f32 %v2037, 0.0
  %v2039 = vmul.f32 %v2038, %v623
  %v2040 = vsel %vm106, %v2039, 0.0
  %2041 = vadd.xlane.f32.xlu0 %v2040
  %v2042 = vpop.xlane.xlu0 %2041
  %v2043 = vadd.f32 %v2042, %v628
  %v2044 = vadd.f32 %v1842, %v2043
  %v2045 = vmul.f32 %v1975, %v403
  %v2046 = vmul.f32 %v1980, %v403
  %v2047 = vadd.f32 %v280, %v2045
  %v2048 = vadd.f32 %v281, %v2046
  %v2049 = vmax.f32 %v2047, 0.0
  %v2050 = vmax.f32 %v2048, 0.0
  %v2052 = vsel %vm106, %v2049, 0
  %v2055 = vsel %vm106, %v2050, 0
  %2057 = vmatpush.msra.mxu0 0.0
  %2058 = vmatpush.msra.mxu0 0.0
  %2059 = vmatpush.msra.mxu0 0.0
  %2060 = vmatpush.msra.mxu0 0.0
  %2061 = vmatpush.msra.mxu0 0.0
  %2062 = vmatpush.msra.mxu0 0.0
  %2063 = vmatpush.msra.mxu0 0.0
  %2064 = vmatpush.msra.mxu0 0.0
  %2065 = vmatpush.msra.mxu0 0.0
  %2066 = vmatpush.msra.mxu0 0.0
  %2067 = vmatpush.msra.mxu0 0.0
  %2068 = vmatpush.msra.mxu0 0.0
  %2069 = vmatpush.msra.mxu0 %v48
  %2070 = vmatpush.msra.mxu0 %v47
  %2071 = vmatpush.msra.mxu0 %v46
  %2072 = vmatpush.msra.mxu0 %v45
  %2073 = vmatmul.f32.gmra.mxu0 %v2052
  %v2074 = vpop.f32.mrf.mxu0
  %v2075 = vadd.f32 %v410, %v2074
  %2076 = vmatmul.f32.gmra.mxu0 %v2055
  %v2077 = vpop.f32.mrf.mxu0
  %v2078 = vadd.f32 %v410, %v2077
  %2079 = vdwg.mxu0
  %v2080 = vmax.f32 %v2075, 0.0
  %v2081 = vmax.f32 %v2078, 0.0
  %v2082 = vmul.f32 %v2080, %v442
  %v2083 = vmul.f32 %v2081, %v442
  %v2084 = vsel %vm106, %v2082, 0.0
  %2085 = vadd.xlane.f32.xlu0 %v2084
  %v2086 = vpop.xlane.xlu0 %2085
  %v2087 = vsel %vm106, %v2083, 0.0
  %2088 = vadd.xlane.f32.xlu0 %v2087
  %v2089 = vpop.xlane.xlu0 %2088
  %v2090 = vadd.f32 %v2086, %v451
  %v2091 = vadd.f32 %v2089, %v451
  %2092 = vmatpush.msra.mxu0 0.0
  %2093 = vmatpush.msra.mxu0 0.0
  %2094 = vmatpush.msra.mxu0 0.0
  %2095 = vmatpush.msra.mxu0 0.0
  %2096 = vmatpush.msra.mxu0 0.0
  %2097 = vmatpush.msra.mxu0 0.0
  %2098 = vmatpush.msra.mxu0 0.0
  %2099 = vmatpush.msra.mxu0 0.0
  %2100 = vmatpush.msra.mxu0 0.0
  %2101 = vmatpush.msra.mxu0 0.0
  %2102 = vmatpush.msra.mxu0 0.0
  %2103 = vmatpush.msra.mxu0 0.0
  %2104 = vmatpush.msra.mxu0 0.0
  %2105 = vmatpush.msra.mxu0 0.0
  %2106 = vmatpush.msra.mxu0 %v2091
  %2107 = vmatpush.msra.mxu0 %v2090
  %2108 = vmatmul.f32.gmra.mxu0 %v456
  %v2109 = vpop.f32.mrf.mxu0
  %v2110 = vadd.f32 0.0, %v2109
  %2111 = vdwg.mxu0
  %2113 = vset.pattern.permute.xlu0 0
  %2114 = vperm.xlu0 %2113, %v2110
  %v2115 = vpop.permute.xlu0 %2114
  %v2117 = vmul.f32 %v2115, %v483
  %v2118 = vadd.f32 %v368, %v2117
  %v2119 = vmul.f32 %v2034, %v491
  %v2120 = vadd.f32 %v2118, %v2119
  %v2121 = vmax.f32 %v2120, 0.0
  %v2123 = vsel %vm106, %v2121, 0
  %2125 = vmatpush.msra.mxu0 0.0
  %2126 = vmatpush.msra.mxu0 0.0
  %2127 = vmatpush.msra.mxu0 0.0
  %2128 = vmatpush.msra.mxu0 0.0
  %2129 = vmatpush.msra.mxu0 0.0
  %2130 = vmatpush.msra.mxu0 0.0
  %2131 = vmatpush.msra.mxu0 0.0
  %2132 = vmatpush.msra.mxu0 0.0
  %2133 = vmatpush.msra.mxu0 0.0
  %2134 = vmatpush.msra.mxu0 0.0
  %2135 = vmatpush.msra.mxu0 0.0
  %2136 = vmatpush.msra.mxu0 0.0
  %2137 = vmatpush.msra.mxu0 %v67
  %2138 = vmatpush.msra.mxu0 %v66
  %2139 = vmatpush.msra.mxu0 %v65
  %2140 = vmatpush.msra.mxu0 %v64
  %2141 = vmatmul.f32.gmra.mxu0 %v2123
  %v2142 = vpop.f32.mrf.mxu0
  %v2143 = vadd.f32 %v495, %v2142
  %2144 = vdwg.mxu0
  %v2145 = vmax.f32 %v2143, 0.0
  %v2146 = vmul.f32 %v2145, %v520
  %v2147 = vsel %vm106, %v2146, 0.0
  %2148 = vadd.xlane.f32.xlu0 %v2147
  %v2149 = vpop.xlane.xlu0 %2148
  %v2150 = vadd.f32 %v2149, %v525
  %2151 = vmatpush.msra.mxu0 0.0
  %2152 = vmatpush.msra.mxu0 0.0
  %2153 = vmatpush.msra.mxu0 0.0
  %2154 = vmatpush.msra.mxu0 0.0
  %2155 = vmatpush.msra.mxu0 0.0
  %2156 = vmatpush.msra.mxu0 0.0
  %2157 = vmatpush.msra.mxu0 0.0
  %2158 = vmatpush.msra.mxu0 0.0
  %2159 = vmatpush.msra.mxu0 0.0
  %2160 = vmatpush.msra.mxu0 0.0
  %2161 = vmatpush.msra.mxu0 0.0
  %2162 = vmatpush.msra.mxu0 0.0
  %2163 = vmatpush.msra.mxu0 0.0
  %2164 = vmatpush.msra.mxu0 0.0
  %2165 = vmatpush.msra.mxu0 0.0
  %2166 = vmatpush.msra.mxu0 %v2150
  %2167 = vmatmul.f32.gmra.mxu0 %v140
  %v2168 = vpop.f32.mrf.mxu0
  %v2169 = vadd.f32 0.0, %v2168
  %2170 = vmatmul.f32.gmra.mxu0 %v143
  %v2171 = vpop.f32.mrf.mxu0
  %v2172 = vadd.f32 0.0, %v2171
  %2173 = vdwg.mxu0
  %2175 = vset.pattern.permute.xlu0 0
  %2176 = vperm.xlu0 %2175, %v2169
  %v2177 = vpop.permute.xlu0 %2176
  %2180 = vset.pattern.permute.xlu0 0
  %2181 = vperm.xlu0 %2180, %v2172
  %v2182 = vpop.permute.xlu0 %2181
  %v2184 = vmul.f32 %v2177, %v560
  %v2185 = vmul.f32 %v2182, %v560
  %v2186 = vadd.f32 %v343, %v2184
  %v2187 = vadd.f32 %v344, %v2185
  %v2188 = vmax.f32 %v2186, 0.0
  %v2189 = vmax.f32 %v2187, 0.0
  %v2191 = vsel %vm106, %v2188, 0
  %v2194 = vsel %vm106, %v2189, 0
  %2196 = vmatpush.msra.mxu0 0.0
  %2197 = vmatpush.msra.mxu0 0.0
  %2198 = vmatpush.msra.mxu0 0.0
  %2199 = vmatpush.msra.mxu0 0.0
  %2200 = vmatpush.msra.mxu0 0.0
  %2201 = vmatpush.msra.mxu0 0.0
  %2202 = vmatpush.msra.mxu0 0.0
  %2203 = vmatpush.msra.mxu0 0.0
  %2204 = vmatpush.msra.mxu0 0.0
  %2205 = vmatpush.msra.mxu0 0.0
  %2206 = vmatpush.msra.mxu0 0.0
  %2207 = vmatpush.msra.mxu0 0.0
  %2208 = vmatpush.msra.mxu0 %v57
  %2209 = vmatpush.msra.mxu0 %v56
  %2210 = vmatpush.msra.mxu0 %v55
  %2211 = vmatpush.msra.mxu0 %v54
  %2212 = vmatmul.f32.gmra.mxu0 %v2191
  %v2213 = vpop.f32.mrf.mxu0
  %v2214 = vadd.f32 %v567, %v2213
  %2215 = vmatmul.f32.gmra.mxu0 %v2194
  %v2216 = vpop.f32.mrf.mxu0
  %v2217 = vadd.f32 %v567, %v2216
  %2218 = vdwg.mxu0
  %v2219 = vmax.f32 %v2214, 0.0
  %v2220 = vmax.f32 %v2217, 0.0
  %v2221 = vmul.f32 %v2219, %v599
  %v2222 = vmul.f32 %v2220, %v599
  %v2223 = vsel %vm106, %v2221, 0.0
  %2224 = vadd.xlane.f32.xlu0 %v2223
  %v2225 = vpop.xlane.xlu0 %2224
  %v2226 = vsel %vm106, %v2222, 0.0
  %2227 = vadd.xlane.f32.xlu0 %v2226
  %v2228 = vpop.xlane.xlu0 %2227
  %v2229 = vadd.f32 %v2225, %v608
  %v2230 = vadd.f32 %v2228, %v608
  %v2231 = vadd.f32 %v2029, %v2229
  %v2232 = vadd.f32 %v2030, %v2230
  %2234 = vset.pattern.permute.xlu0 0
  %2235 = vperm.xlu0 %2234, %v2150
  %v2236 = vpop.permute.xlu0 %2235
  %v2238 = vmul.f32 %v2236, %v618
  %v2239 = vadd.f32 %v2238, %v620
  %v2240 = vmax.f32 %v2239, 0.0
  %v2241 = vmul.f32 %v2240, %v623
  %v2242 = vsel %vm106, %v2241, 0.0
  %2243 = vadd.xlane.f32.xlu0 %v2242
  %v2244 = vpop.xlane.xlu0 %2243
  %v2245 = vadd.f32 %v2244, %v628
  %v2246 = vadd.f32 %v2044, %v2245
  %v2247 = vmul.f32 %v2177, %v403
  %v2248 = vmul.f32 %v2182, %v403
  %v2249 = vadd.f32 %v280, %v2247
  %v2250 = vadd.f32 %v281, %v2248
  %v2251 = vmax.f32 %v2249, 0.0
  %v2252 = vmax.f32 %v2250, 0.0
  %v2254 = vsel %vm106, %v2251, 0
  %v2257 = vsel %vm106, %v2252, 0
  %2259 = vmatpush.msra.mxu0 0.0
  %2260 = vmatpush.msra.mxu0 0.0
  %2261 = vmatpush.msra.mxu0 0.0
  %2262 = vmatpush.msra.mxu0 0.0
  %2263 = vmatpush.msra.mxu0 0.0
  %2264 = vmatpush.msra.mxu0 0.0
  %2265 = vmatpush.msra.mxu0 0.0
  %2266 = vmatpush.msra.mxu0 0.0
  %2267 = vmatpush.msra.mxu0 0.0
  %2268 = vmatpush.msra.mxu0 0.0
  %2269 = vmatpush.msra.mxu0 0.0
  %2270 = vmatpush.msra.mxu0 0.0
  %2271 = vmatpush.msra.mxu0 %v48
  %2272 = vmatpush.msra.mxu0 %v47
  %2273 = vmatpush.msra.mxu0 %v46
  %2274 = vmatpush.msra.mxu0 %v45
  %2275 = vmatmul.f32.gmra.mxu0 %v2254
  %v2276 = vpop.f32.mrf.mxu0
  %v2277 = vadd.f32 %v410, %v2276
  %2278 = vmatmul.f32.gmra.mxu0 %v2257
  %v2279 = vpop.f32.mrf.mxu0
  %v2280 = vadd.f32 %v410, %v2279
  %2281 = vdwg.mxu0
  %v2282 = vmax.f32 %v2277, 0.0
  %v2283 = vmax.f32 %v2280, 0.0
  %v2284 = vmul.f32 %v2282, %v442
  %v2285 = vmul.f32 %v2283, %v442
  %v2286 = vsel %vm106, %v2284, 0.0
  %2287 = vadd.xlane.f32.xlu0 %v2286
  %v2288 = vpop.xlane.xlu0 %2287
  %v2289 = vsel %vm106, %v2285, 0.0
  %2290 = vadd.xlane.f32.xlu0 %v2289
  %v2291 = vpop.xlane.xlu0 %2290
  %v2292 = vadd.f32 %v2288, %v451
  %v2293 = vadd.f32 %v2291, %v451
  %2294 = vmatpush.msra.mxu0 0.0
  %2295 = vmatpush.msra.mxu0 0.0
  %2296 = vmatpush.msra.mxu0 0.0
  %2297 = vmatpush.msra.mxu0 0.0
  %2298 = vmatpush.msra.mxu0 0.0
  %2299 = vmatpush.msra.mxu0 0.0
  %2300 = vmatpush.msra.mxu0 0.0
  %2301 = vmatpush.msra.mxu0 0.0
  %2302 = vmatpush.msra.mxu0 0.0
  %2303 = vmatpush.msra.mxu0 0.0
  %2304 = vmatpush.msra.mxu0 0.0
  %2305 = vmatpush.msra.mxu0 0.0
  %2306 = vmatpush.msra.mxu0 0.0
  %2307 = vmatpush.msra.mxu0 0.0
  %2308 = vmatpush.msra.mxu0 %v2293
  %2309 = vmatpush.msra.mxu0 %v2292
  %2310 = vmatmul.f32.gmra.mxu0 %v456
  %v2311 = vpop.f32.mrf.mxu0
  %v2312 = vadd.f32 0.0, %v2311
  %2313 = vdwg.mxu0
  %2315 = vset.pattern.permute.xlu0 0
  %2316 = vperm.xlu0 %2315, %v2312
  %v2317 = vpop.permute.xlu0 %2316
  %v2319 = vmul.f32 %v2317, %v483
  %v2320 = vadd.f32 %v368, %v2319
  %v2321 = vmul.f32 %v2236, %v491
  %v2322 = vadd.f32 %v2320, %v2321
  %v2323 = vmax.f32 %v2322, 0.0
  %v2325 = vsel %vm106, %v2323, 0
  %2327 = vmatpush.msra.mxu0 0.0
  %2328 = vmatpush.msra.mxu0 0.0
  %2329 = vmatpush.msra.mxu0 0.0
  %2330 = vmatpush.msra.mxu0 0.0
  %2331 = vmatpush.msra.mxu0 0.0
  %2332 = vmatpush.msra.mxu0 0.0
  %2333 = vmatpush.msra.mxu0 0.0
  %2334 = vmatpush.msra.mxu0 0.0
  %2335 = vmatpush.msra.mxu0 0.0
  %2336 = vmatpush.msra.mxu0 0.0
  %2337 = vmatpush.msra.mxu0 0.0
  %2338 = vmatpush.msra.mxu0 0.0
  %2339 = vmatpush.msra.mxu0 %v67
  %2340 = vmatpush.msra.mxu0 %v66
  %2341 = vmatpush.msra.mxu0 %v65
  %2342 = vmatpush.msra.mxu0 %v64
  %2343 = vmatmul.f32.gmra.mxu0 %v2325
  %v2344 = vpop.f32.mrf.mxu0
  %v2345 = vadd.f32 %v495, %v2344
  %2346 = vdwg.mxu0
  %v2347 = vmax.f32 %v2345, 0.0
  %v2348 = vmul.f32 %v2347, %v520
  %v2349 = vsel %vm106, %v2348, 0.0
  %2350 = vadd.xlane.f32.xlu0 %v2349
  %v2351 = vpop.xlane.xlu0 %2350
  %v2352 = vadd.f32 %v2351, %v525
  %2353 = vmatpush.msra.mxu0 0.0
  %2354 = vmatpush.msra.mxu0 0.0
  %2355 = vmatpush.msra.mxu0 0.0
  %2356 = vmatpush.msra.mxu0 0.0
  %2357 = vmatpush.msra.mxu0 0.0
  %2358 = vmatpush.msra.mxu0 0.0
  %2359 = vmatpush.msra.mxu0 0.0
  %2360 = vmatpush.msra.mxu0 0.0
  %2361 = vmatpush.msra.mxu0 0.0
  %2362 = vmatpush.msra.mxu0 0.0
  %2363 = vmatpush.msra.mxu0 0.0
  %2364 = vmatpush.msra.mxu0 0.0
  %2365 = vmatpush.msra.mxu0 0.0
  %2366 = vmatpush.msra.mxu0 0.0
  %2367 = vmatpush.msra.mxu0 0.0
  %2368 = vmatpush.msra.mxu0 %v2352
  %2369 = vmatmul.f32.gmra.mxu0 %v140
  %v2370 = vpop.f32.mrf.mxu0
  %v2371 = vadd.f32 0.0, %v2370
  %2372 = vmatmul.f32.gmra.mxu0 %v143
  %v2373 = vpop.f32.mrf.mxu0
  %v2374 = vadd.f32 0.0, %v2373
  %2375 = vdwg.mxu0
  %2377 = vset.pattern.permute.xlu0 0
  %2378 = vperm.xlu0 %2377, %v2371
  %v2379 = vpop.permute.xlu0 %2378
  %2382 = vset.pattern.permute.xlu0 0
  %2383 = vperm.xlu0 %2382, %v2374
  %v2384 = vpop.permute.xlu0 %2383
  %v2386 = vmul.f32 %v2379, %v560
  %v2387 = vmul.f32 %v2384, %v560
  %v2388 = vadd.f32 %v343, %v2386
  %v2389 = vadd.f32 %v344, %v2387
  %v2390 = vmax.f32 %v2388, 0.0
  %v2391 = vmax.f32 %v2389, 0.0
  %v2393 = vsel %vm106, %v2390, 0
  %v2396 = vsel %vm106, %v2391, 0
  %2398 = vmatpush.msra.mxu0 0.0
  %2399 = vmatpush.msra.mxu0 0.0
  %2400 = vmatpush.msra.mxu0 0.0
  %2401 = vmatpush.msra.mxu0 0.0
  %2402 = vmatpush.msra.mxu0 0.0
  %2403 = vmatpush.msra.mxu0 0.0
  %2404 = vmatpush.msra.mxu0 0.0
  %2405 = vmatpush.msra.mxu0 0.0
  %2406 = vmatpush.msra.mxu0 0.0
  %2407 = vmatpush.msra.mxu0 0.0
  %2408 = vmatpush.msra.mxu0 0.0
  %2409 = vmatpush.msra.mxu0 0.0
  %2410 = vmatpush.msra.mxu0 %v57
  %2411 = vmatpush.msra.mxu0 %v56
  %2412 = vmatpush.msra.mxu0 %v55
  %2413 = vmatpush.msra.mxu0 %v54
  %2414 = vmatmul.f32.gmra.mxu0 %v2393
  %v2415 = vpop.f32.mrf.mxu0
  %v2416 = vadd.f32 %v567, %v2415
  %2417 = vmatmul.f32.gmra.mxu0 %v2396
  %v2418 = vpop.f32.mrf.mxu0
  %v2419 = vadd.f32 %v567, %v2418
  %2420 = vdwg.mxu0
  %v2421 = vmax.f32 %v2416, 0.0
  %v2422 = vmax.f32 %v2419, 0.0
  %v2423 = vmul.f32 %v2421, %v599
  %v2424 = vmul.f32 %v2422, %v599
  %v2425 = vsel %vm106, %v2423, 0.0
  %2426 = vadd.xlane.f32.xlu0 %v2425
  %v2427 = vpop.xlane.xlu0 %2426
  %v2428 = vsel %vm106, %v2424, 0.0
  %2429 = vadd.xlane.f32.xlu0 %v2428
  %v2430 = vpop.xlane.xlu0 %2429
  %v2431 = vadd.f32 %v2427, %v608
  %v2432 = vadd.f32 %v2430, %v608
  %v2433 = vadd.f32 %v2231, %v2431
  %v2434 = vadd.f32 %v2232, %v2432
  %2436 = vset.pattern.permute.xlu0 0
  %2437 = vperm.xlu0 %2436, %v2352
  %v2438 = vpop.permute.xlu0 %2437
  %v2440 = vmul.f32 %v2438, %v618
  %v2441 = vadd.f32 %v2440, %v620
  %v2442 = vmax.f32 %v2441, 0.0
  %v2443 = vmul.f32 %v2442, %v623
  %v2444 = vsel %vm106, %v2443, 0.0
  %2445 = vadd.xlane.f32.xlu0 %v2444
  %v2446 = vpop.xlane.xlu0 %2445
  %v2447 = vadd.f32 %v2446, %v628
  %v2448 = vadd.f32 %v2246, %v2447
  %vm2449 = vcmask 7168
  %2450 = vst.msk [vmem:[%s6] sm:$0xff] %vm2449, %v2352
  %2451 = vst.msk [vmem:[%s7] sm:$0xff] %vm2449, %v2433
  %2452 = vst.msk [vmem:[%s7 + $0x8] sm:$0xff] %vm2449, %v2434
  %2453 = vst.msk [vmem:[%s8] sm:$0xff] %vm2449, %v2448
  // Predicated region
  $region26: #{tpu_custom_call.1} parent=0 // pred_check
    _
  $region27: #{tpu_custom_call.1} parent=0 // pred_check_branch
    %2455 = sbr.rel (0) target = $region29
  $region28: #{tpu_custom_call.1} parent=0 // pred_region
    _
  $region29: #{tpu_custom_call.1} parent=0 // pred_fallthru
    _
  // Predicated region
  $region30: #{tpu_custom_call.1} parent=0 // pred_check
    _
  $region31: #{tpu_custom_call.1} parent=0 // pred_check_branch
    %2457 = sbr.rel (0) target = $region33
  $region32: #{tpu_custom_call.1} parent=0 // pred_region
    _
  $region33: #{tpu_custom_call.1} parent=0 // pred_fallthru
    _
  // Predicated region
  $region34: #{tpu_custom_call.1} parent=0 // pred_check
    _
  $region35: #{tpu_custom_call.1} parent=0 // pred_check_branch
    %2459 = sbr.rel (0) target = $region37
  $region36: #{tpu_custom_call.1} parent=0 // pred_region
    _
  $region37: #{tpu_custom_call.1} parent=0 // pred_fallthru
    _
  // Predicated region
  $region38: #{tpu_custom_call.1} parent=0 // pred_check
    _
  $region39: #{tpu_custom_call.1} parent=0 // pred_check_branch
    %2461 = sbr.rel (0) target = $region41
  $region40: #{tpu_custom_call.1} parent=0 // pred_region
    _
  $region41: #{tpu_custom_call.1} parent=0 // pred_fallthru
    _
  // Predicated region
  $region42: #{tpu_custom_call.1} parent=0 // pred_check
    _
  $region43: #{tpu_custom_call.1} parent=0 // pred_check_branch
    %2463 = sbr.rel (0) target = $region45
  $region44: #{tpu_custom_call.1} parent=0 // pred_region
    _
  $region45: #{tpu_custom_call.1} parent=0 // pred_fallthru
    _
  // Predicated region
  $region46: #{tpu_custom_call.1} parent=0 // pred_check
    _
  $region47: #{tpu_custom_call.1} parent=0 // pred_check_branch
    %2465 = sbr.rel (0) target = $region49
  $region48: #{tpu_custom_call.1} parent=0 // pred_region
    _
  $region49: #{tpu_custom_call.1} parent=0 // pred_fallthru
    _

</llo_original>
